<compile_context>
chip_gen: v5e
topology: v5e:2x2
jax: 0.10.0
libtpu: 0.0.40
codegen_flags: <defaults>
</compile_context>

<pallas_src>
import functools

import jax
import jax.numpy as jnp
from jax import lax
from jax.experimental import pallas as pl
from jax.experimental.pallas import tpu as pltpu


def _round_up(x, m):
    return ((x + m - 1) // m) * m


# ----------------------------------------------------------------------------
# Fused Pallas kernel:
#   concat(x2, x1) -> Conv3x3(pad=1) -> (+BN shift) -> ReLU
#                  -> Conv3x3(pad=1) -> (+BN shift) -> ReLU
# BN scale is pre-folded into the (zero-padded, bf16) weights.
# ----------------------------------------------------------------------------
def _double_conv_kernel(x2_ref, x1_ref, w1_ref, b1_ref, w2_ref, b2_ref,
                        o_ref, xpad_ref, mpad_ref, *,
                        H, W, C2, C1, Cin_p, Cm_p, Co_p):
    # x2_ref : (1, H, W, C2)      skip-connection tile (f32)
    # x1_ref : (1, H, W, C1)      upsampled tile (f32)
    # w1_ref : (9*Cin_p, Cm_p)    bf16, BN1 scale folded in, zero-padded
    # b1_ref : (1, Cm_p)          f32 BN1 shift (zero-padded)
    # w2_ref : (9*Cm_p,  Co_p)    bf16, BN2 scale folded in, zero-padded
    # b2_ref : (1, Co_p)          f32 BN2 shift (zero-padded)
    # o_ref  : (1, H, W, Co_p)    f32, lane-dense (Co_p % 128 == 0)
    # xpad_ref: (H+2, W+2, Cin_p) f32 VMEM scratch (zero 'same' padding holder)
    # mpad_ref: (H+2, W+2, Cm_p)  f32 VMEM scratch for the intermediate

    # ---- stage 1: zero-pad + channel-concat directly in VMEM ----------------
    xpad_ref[...] = jnp.zeros_like(xpad_ref)
    x_cat = jnp.concatenate([x2_ref[0], x1_ref[0]], axis=-1)      # (H, W, C2+C1)
    xpad_ref[1:H + 1, 1:W + 1, :C2 + C1] = x_cat

    xp = xpad_ref[...]
    taps = [xp[dy:dy + H, dx:dx + W, :].reshape(H * W, Cin_p)
            for dy in range(3) for dx in range(3)]
    patches = jnp.concatenate(taps, axis=-1).astype(jnp.bfloat16)  # (H*W, 9*Cin_p)
    y1 = jnp.dot(patches, w1_ref[...], preferred_element_type=jnp.float32)
    y1 = jnp.maximum(y1 + b1_ref[...], 0.0)                        # BN shift + ReLU

    # ---- stage 2: second conv consumes the VMEM-resident intermediate -------
    mpad_ref[...] = jnp.zeros_like(mpad_ref)
    mpad_ref[1:H + 1, 1:W + 1, :] = y1.reshape(H, W, Cm_p)

    mp = mpad_ref[...]
    taps2 = [mp[dy:dy + H, dx:dx + W, :].reshape(H * W, Cm_p)
             for dy in range(3) for dx in range(3)]
    patches2 = jnp.concatenate(taps2, axis=-1).astype(jnp.bfloat16)  # (H*W, 9*Cm_p)
    y2 = jnp.dot(patches2, w2_ref[...], preferred_element_type=jnp.float32)
    y2 = jnp.maximum(y2 + b2_ref[...], 0.0)

    o_ref[...] = y2.reshape(1, H, W, Co_p)                         # lane-dense store


def double_conv_fused(x2_nhwc, x1_nhwc, w1p, b1p, w2p, b2p, cout):
    """x2/x1: [N,H,W,C] f32 (same spatial size). Returns [N,H,W,cout] f32."""
    N, H, W, C2 = x2_nhwc.shape
    C1 = x1_nhwc.shape[-1]
    Cin_p = w1p.shape[0] // 9
    Cm_p = w1p.shape[1]
    Co_p = w2p.shape[1]

    kernel = functools.partial(
        _double_conv_kernel,
        H=H, W=W, C2=C2, C1=C1, Cin_p=Cin_p, Cm_p=Cm_p, Co_p=Co_p)

    out = pl.pallas_call(
        kernel,
        out_shape=jax.ShapeDtypeStruct((N, H, W, Co_p), jnp.float32),
        grid=(N,),
        in_specs=[
            pl.BlockSpec((1, H, W, C2), lambda n: (n, 0, 0, 0)),
            pl.BlockSpec((1, H, W, C1), lambda n: (n, 0, 0, 0)),
            pl.BlockSpec((9 * Cin_p, Cm_p), lambda n: (0, 0)),
            pl.BlockSpec((1, Cm_p), lambda n: (0, 0)),
            pl.BlockSpec((9 * Cm_p, Co_p), lambda n: (0, 0)),
            pl.BlockSpec((1, Co_p), lambda n: (0, 0)),
        ],
        out_specs=pl.BlockSpec((1, H, W, Co_p), lambda n: (n, 0, 0, 0)),
        scratch_shapes=[
            pltpu.VMEM((H + 2, W + 2, Cin_p), jnp.float32),
            pltpu.VMEM((H + 2, W + 2, Cm_p), jnp.float32),
        ],
        compiler_params=pltpu.CompilerParams(
            dimension_semantics=("parallel",),
            vmem_limit_bytes=32 * 1024 * 1024),
    )(x2_nhwc, x1_nhwc, w1p, b1p, w2p, b2p)

    return out[..., :cout]


# ----------------------------------------------------------------------------
# JAX glue: bilinear 2x upsample, align_corners=True (matches nn.Upsample)
# ----------------------------------------------------------------------------
def upsample2x_bilinear_align_corners(x_nhwc):
    N, H, W, C = x_nhwc.shape
    Ho, Wo = 2 * H, 2 * W
    ty = jnp.arange(Ho, dtype=jnp.float32) * ((H - 1) / (Ho - 1))
    tx = jnp.arange(Wo, dtype=jnp.float32) * ((W - 1) / (Wo - 1))
    y0 = jnp.floor(ty).astype(jnp.int32)
    x0 = jnp.floor(tx).astype(jnp.int32)
    y1 = jnp.minimum(y0 + 1, H - 1)
    x1 = jnp.minimum(x0 + 1, W - 1)
    fy = (ty - y0.astype(jnp.float32))[None, :, None, None]
    fx = (tx - x0.astype(jnp.float32))[None, None, :, None]

    def g(yi, xi):
        return jnp.take(jnp.take(x_nhwc, yi, axis=1), xi, axis=2)

    top = g(y0, x0) * (1.0 - fx) + g(y0, x1) * fx
    bot = g(y1, x0) * (1.0 - fx) + g(y1, x1) * fx
    return top * (1.0 - fy) + bot * fy


# ----------------------------------------------------------------------------
# Parameters: synthetic conv/BN (eval mode), BN scale folded into weights,
# channels zero-padded to multiples of 128, weights cast to bf16.
# ----------------------------------------------------------------------------
def make_conv_bn_params(key, cin, cout, eps=1e-5):
    kw, kg, kb = jax.random.split(key, 3)
    w = jax.random.normal(kw, (3, 3, cin, cout), jnp.float32) * 0.1
    gamma = 1.0 + 0.1 * jax.random.normal(kg, (cout,), jnp.float32)
    beta = 0.1 * jax.random.normal(kb, (cout,), jnp.float32)
    running_mean = jnp.zeros((cout,), jnp.float32)
    running_var = jnp.ones((cout,), jnp.float32)
    scale = gamma / jnp.sqrt(running_var + eps)
    shift = beta - running_mean * scale
    return w, scale, shift


def fold_and_pad(w, scale, shift, cin_p, cout_p):
    cin, cout = w.shape[2], w.shape[3]
    w_folded = w * scale[None, None, None, :]                 # BN scale folded in
    w_p = jnp.zeros((3, 3, cin_p, cout_p), jnp.float32)
    w_p = w_p.at[:, :, :cin, :cout].set(w_folded)
    w_p = w_p.reshape(9 * cin_p, cout_p).astype(jnp.bfloat16)  # im2col layout
    b_p = jnp.zeros((1, cout_p), jnp.float32).at[:, :cout].set(shift[None, :])
    return w_p, b_p


def make_up_params(key, in_channels, out_channels):
    k1, k2 = jax.random.split(key)
    w1, s1, sh1 = make_conv_bn_params(k1, in_channels, out_channels)
    w2, s2, sh2 = make_conv_bn_params(k2, out_channels, out_channels)
    cin_p = _round_up(in_channels, 128)
    cm_p = _round_up(out_channels, 128)
    co_p = cm_p
    w1p, b1p = fold_and_pad(w1, s1, sh1, cin_p, cm_p)
    w2p, b2p = fold_and_pad(w2, s2, sh2, cm_p, co_p)
    return dict(w1p=w1p, b1p=b1p, w2p=w2p, b2p=b2p,
                w1=w1, s1=s1, sh1=sh1, w2=w2, s2=s2, sh2=sh2)


# ----------------------------------------------------------------------------
# Up.forward (bilinear=True path)
# ----------------------------------------------------------------------------
@jax.jit
def up_forward(params, x1_nchw, x2_nchw):
    # NCHW -> NHWC
    x1 = jnp.transpose(x1_nchw, (0, 2, 3, 1)).astype(jnp.float32)
    x2 = jnp.transpose(x2_nchw, (0, 2, 3, 1)).astype(jnp.float32)

    x1 = upsample2x_bilinear_align_corners(x1)

    diffY = x2.shape[1] - x1.shape[1]
    diffX = x2.shape[2] - x1.shape[2]
    x1 = jnp.pad(x1, ((0, 0),
                      (diffY // 2, diffY - diffY // 2),
                      (diffX // 2, diffX - diffX // 2),
                      (0, 0)))

    # concat([x2, x1]) + DoubleConv fully fused inside one Pallas kernel.
    cout = params["w2"].shape[3]
    y = double_conv_fused(x2, x1, params["w1p"], params["b1p"],
                          params["w2p"], params["b2p"], cout)

    # NHWC -> NCHW
    return jnp.transpose(y, (0, 3, 1, 2))


# Pure-JAX reference (unfolded BN) for a numerical sanity check.
@jax.jit
def up_forward_ref(params, x1_nchw, x2_nchw):
    x1 = jnp.transpose(x1_nchw, (0, 2, 3, 1)).astype(jnp.float32)
    x2 = jnp.transpose(x2_nchw, (0, 2, 3, 1)).astype(jnp.float32)
    x1 = upsample2x_bilinear_align_corners(x1)
    diffY = x2.shape[1] - x1.shape[1]
    diffX = x2.shape[2] - x1.shape[2]
    x1 = jnp.pad(x1, ((0, 0),
                      (diffY // 2, diffY - diffY // 2),
                      (diffX // 2, diffX - diffX // 2),
                      (0, 0)))
    x = jnp.concatenate([x2, x1], axis=-1)

    def cbr(x, w, s, sh):
        y = lax.conv_general_dilated(
            x, w, (1, 1), 'SAME',
            dimension_numbers=('NHWC', 'HWIO', 'NHWC'),
            precision=lax.Precision.HIGHEST)
        return jnp.maximum(y * s + sh, 0.0)

    y = cbr(x, params["w1"], params["s1"], params["sh1"])
    y = cbr(y, params["w2"], params["s2"], params["sh2"])
    return jnp.transpose(y, (0, 3, 1, 2))


if __name__ == "__main__":
    key = jax.random.PRNGKey(0)
    k_p, k1, k2 = jax.random.split(key, 3)

    in_channels, out_channels = 8, 4
    # x1: deeper feature map (half spatial, in_channels//2 channels)
    # x2: skip connection   (full spatial, in_channels//2 channels)
    x1 = jax.random.normal(k1, (2, in_channels // 2, 8, 8), jnp.float32)
    x2 = jax.random.normal(k2, (2, in_channels // 2, 16, 16), jnp.float32)

    params = make_up_params(k_p, in_channels, out_channels)

    out = up_forward(params, x1, x2)
    out = jax.block_until_ready(out)
    assert out.shape == (2, out_channels, 16, 16), out.shape

    ref = jax.block_until_ready(up_forward_ref(params, x1, x2))
    max_err = float(jnp.max(jnp.abs(out - ref)))
    assert max_err < 5e-2, f"max abs error vs reference: {max_err}"

    print("KERNEL_OK")
</pallas_src>

<mosaic_0001>
module attributes {stable_mosaic.version = 11 : i64} {
  func.func @_double_conv_kernel(%arg0: i32, %arg1: memref<1x16x16x4xf32, #tpu.memory_space<vmem>>, %arg2: memref<1x16x16x4xf32, #tpu.memory_space<vmem>>, %arg3: memref<1152x128xbf16, #tpu.memory_space<vmem>>, %arg4: memref<1x128xf32, #tpu.memory_space<vmem>>, %arg5: memref<1152x128xbf16, #tpu.memory_space<vmem>>, %arg6: memref<1x128xf32, #tpu.memory_space<vmem>>, %arg7: memref<1x16x16x128xf32, #tpu.memory_space<vmem>>, %arg8: memref<18x18x128xf32, #tpu.memory_space<vmem>>, %arg9: memref<18x18x128xf32, #tpu.memory_space<vmem>>) attributes {dimension_semantics = [#tpu.dimension_semantics<parallel>], iteration_bounds = array<i64: 2>, scalar_prefetch = 0 : i64, scratch_operands = 2 : i64, tpu.core_type = #tpu.core_type<tc>, window_params = [{transform_indices = @transform_0, window_bounds = array<i64: 1, 16, 16, 4>}, {transform_indices = @transform_1, window_bounds = array<i64: 1, 16, 16, 4>}, {pipeline_mode = #tpu.pipeline_mode<synchronous>, transform_indices = @transform_2, window_bounds = array<i64: 1152, 128>}, {pipeline_mode = #tpu.pipeline_mode<synchronous>, transform_indices = @transform_3, window_bounds = array<i64: 1, 128>}, {pipeline_mode = #tpu.pipeline_mode<synchronous>, transform_indices = @transform_4, window_bounds = array<i64: 1152, 128>}, {pipeline_mode = #tpu.pipeline_mode<synchronous>, transform_indices = @transform_5, window_bounds = array<i64: 1, 128>}, {transform_indices = @transform_6, window_bounds = array<i64: 1, 16, 16, 128>}]} {
    %cst = arith.constant 0.000000e+00 : f32
    %0 = vector.broadcast %cst : f32 to vector<18x18x128xf32>
    %c0 = arith.constant 0 : index
    %c0_0 = arith.constant 0 : index
    %c0_1 = arith.constant 0 : index
    %1 = vector.load %arg8[%c0, %c0_0, %c0_1] : memref<18x18x128xf32, #tpu.memory_space<vmem>>, vector<18x18x128xf32>
    tpu.vector_store %arg8[%c0, %c0_0, %c0_1], %0 {strides = array<i32>} : memref<18x18x128xf32, #tpu.memory_space<vmem>>, vector<18x18x128xf32>,
    %c0_2 = arith.constant 0 : index
    %c0_3 = arith.constant 0 : index
    %c0_4 = arith.constant 0 : index
    %c0_5 = arith.constant 0 : index
    %2 = vector.load %arg1[%c0_2, %c0_3, %c0_4, %c0_5] : memref<1x16x16x4xf32, #tpu.memory_space<vmem>>, vector<1x16x16x4xf32>
    %3 = vector.shape_cast %2 : vector<1x16x16x4xf32> to vector<16x16x4xf32>
    %c0_6 = arith.constant 0 : index
    %c0_7 = arith.constant 0 : index
    %c0_8 = arith.constant 0 : index
    %c0_9 = arith.constant 0 : index
    %4 = vector.load %arg2[%c0_6, %c0_7, %c0_8, %c0_9] : memref<1x16x16x4xf32, #tpu.memory_space<vmem>>, vector<1x16x16x4xf32>
    %5 = vector.shape_cast %4 : vector<1x16x16x4xf32> to vector<16x16x4xf32>
    %6 = tpu.concatenate %3, %5 in 2 : vector<16x16x4xf32>, vector<16x16x4xf32> -> vector<16x16x8xf32>
    %c1 = arith.constant 1 : index
    %c1_10 = arith.constant 1 : index
    %c0_11 = arith.constant 0 : index
    %7 = vector.load %arg8[%c1, %c1_10, %c0_11] : memref<18x18x128xf32, #tpu.memory_space<vmem>>, vector<16x16x8xf32>
    tpu.vector_store %arg8[%c1, %c1_10, %c0_11], %6 {strides = array<i32>} : memref<18x18x128xf32, #tpu.memory_space<vmem>>, vector<16x16x8xf32>,
    %c0_12 = arith.constant 0 : index
    %c0_13 = arith.constant 0 : index
    %c0_14 = arith.constant 0 : index
    %8 = vector.load %arg8[%c0_12, %c0_13, %c0_14] : memref<18x18x128xf32, #tpu.memory_space<vmem>>, vector<18x18x128xf32>
    %9 = vector.extract_strided_slice %8 {offsets = [0, 0, 0], sizes = [16, 16, 128], strides = [1, 1, 1]} : vector<18x18x128xf32> to vector<16x16x128xf32>
    %10 = vector.shape_cast %9 : vector<16x16x128xf32> to vector<256x128xf32>
    %11 = vector.extract_strided_slice %8 {offsets = [0, 1, 0], sizes = [16, 16, 128], strides = [1, 1, 1]} : vector<18x18x128xf32> to vector<16x16x128xf32>
    %12 = vector.shape_cast %11 : vector<16x16x128xf32> to vector<256x128xf32>
    %13 = vector.extract_strided_slice %8 {offsets = [0, 2, 0], sizes = [16, 16, 128], strides = [1, 1, 1]} : vector<18x18x128xf32> to vector<16x16x128xf32>
    %14 = vector.shape_cast %13 : vector<16x16x128xf32> to vector<256x128xf32>
    %15 = vector.extract_strided_slice %8 {offsets = [1, 0, 0], sizes = [16, 16, 128], strides = [1, 1, 1]} : vector<18x18x128xf32> to vector<16x16x128xf32>
    %16 = vector.shape_cast %15 : vector<16x16x128xf32> to vector<256x128xf32>
    %17 = vector.extract_strided_slice %8 {offsets = [1, 1, 0], sizes = [16, 16, 128], strides = [1, 1, 1]} : vector<18x18x128xf32> to vector<16x16x128xf32>
    %18 = vector.shape_cast %17 : vector<16x16x128xf32> to vector<256x128xf32>
    %19 = vector.extract_strided_slice %8 {offsets = [1, 2, 0], sizes = [16, 16, 128], strides = [1, 1, 1]} : vector<18x18x128xf32> to vector<16x16x128xf32>
    %20 = vector.shape_cast %19 : vector<16x16x128xf32> to vector<256x128xf32>
    %21 = vector.extract_strided_slice %8 {offsets = [2, 0, 0], sizes = [16, 16, 128], strides = [1, 1, 1]} : vector<18x18x128xf32> to vector<16x16x128xf32>
    %22 = vector.shape_cast %21 : vector<16x16x128xf32> to vector<256x128xf32>
    %23 = vector.extract_strided_slice %8 {offsets = [2, 1, 0], sizes = [16, 16, 128], strides = [1, 1, 1]} : vector<18x18x128xf32> to vector<16x16x128xf32>
    %24 = vector.shape_cast %23 : vector<16x16x128xf32> to vector<256x128xf32>
    %25 = vector.extract_strided_slice %8 {offsets = [2, 2, 0], sizes = [16, 16, 128], strides = [1, 1, 1]} : vector<18x18x128xf32> to vector<16x16x128xf32>
    %26 = vector.shape_cast %25 : vector<16x16x128xf32> to vector<256x128xf32>
    %27 = tpu.concatenate %10, %12, %14, %16, %18, %20, %22, %24, %26 in 1 : vector<256x128xf32>, vector<256x128xf32>, vector<256x128xf32>, vector<256x128xf32>, vector<256x128xf32>, vector<256x128xf32>, vector<256x128xf32>, vector<256x128xf32>, vector<256x128xf32> -> vector<256x1152xf32>
    %28 = arith.truncf %27 : vector<256x1152xf32> to vector<256x1152xbf16>
    %c0_15 = arith.constant 0 : index
    %c0_16 = arith.constant 0 : index
    %29 = vector.load %arg3[%c0_15, %c0_16] : memref<1152x128xbf16, #tpu.memory_space<vmem>>, vector<1152x128xbf16>
    %cst_17 = arith.constant dense<0.000000e+00> : vector<256x128xf32>
    %30 = tpu.matmul %28, %29, %cst_17 {dimension_numbers = #tpu.dot_dimension_numbers<[1], [0], [0], [1], [0, 0, 1, 1], [], []>} : vector<256x1152xbf16>, vector<1152x128xbf16>, vector<256x128xf32> -> vector<256x128xf32>
    %c0_18 = arith.constant 0 : index
    %c0_19 = arith.constant 0 : index
    %31 = vector.load %arg4[%c0_18, %c0_19] : memref<1x128xf32, #tpu.memory_space<vmem>>, vector<1x128xf32>
    %32 = vector.broadcast %31 : vector<1x128xf32> to vector<256x128xf32>
    %33 = arith.addf %30, %32 : vector<256x128xf32>
    %cst_20 = arith.constant 0.000000e+00 : f32
    %34 = vector.broadcast %cst_20 : f32 to vector<256x128xf32>
    %35 = arith.maximumf %33, %34 : vector<256x128xf32>
    %cst_21 = arith.constant 0.000000e+00 : f32
    %36 = vector.broadcast %cst_21 : f32 to vector<18x18x128xf32>
    %c0_22 = arith.constant 0 : index
    %c0_23 = arith.constant 0 : index
    %c0_24 = arith.constant 0 : index
    %37 = vector.load %arg9[%c0_22, %c0_23, %c0_24] : memref<18x18x128xf32, #tpu.memory_space<vmem>>, vector<18x18x128xf32>
    tpu.vector_store %arg9[%c0_22, %c0_23, %c0_24], %36 {strides = array<i32>} : memref<18x18x128xf32, #tpu.memory_space<vmem>>, vector<18x18x128xf32>,
    %38 = vector.shape_cast %35 : vector<256x128xf32> to vector<16x16x128xf32>
    %c1_25 = arith.constant 1 : index
    %c1_26 = arith.constant 1 : index
    %c0_27 = arith.constant 0 : index
    %39 = vector.load %arg9[%c1_25, %c1_26, %c0_27] : memref<18x18x128xf32, #tpu.memory_space<vmem>>, vector<16x16x128xf32>
    tpu.vector_store %arg9[%c1_25, %c1_26, %c0_27], %38 {strides = array<i32>} : memref<18x18x128xf32, #tpu.memory_space<vmem>>, vector<16x16x128xf32>,
    %c0_28 = arith.constant 0 : index
    %c0_29 = arith.constant 0 : index
    %c0_30 = arith.constant 0 : index
    %40 = vector.load %arg9[%c0_28, %c0_29, %c0_30] : memref<18x18x128xf32, #tpu.memory_space<vmem>>, vector<18x18x128xf32>
    %41 = vector.extract_strided_slice %40 {offsets = [0, 0, 0], sizes = [16, 16, 128], strides = [1, 1, 1]} : vector<18x18x128xf32> to vector<16x16x128xf32>
    %42 = vector.shape_cast %41 : vector<16x16x128xf32> to vector<256x128xf32>
    %43 = vector.extract_strided_slice %40 {offsets = [0, 1, 0], sizes = [16, 16, 128], strides = [1, 1, 1]} : vector<18x18x128xf32> to vector<16x16x128xf32>
    %44 = vector.shape_cast %43 : vector<16x16x128xf32> to vector<256x128xf32>
    %45 = vector.extract_strided_slice %40 {offsets = [0, 2, 0], sizes = [16, 16, 128], strides = [1, 1, 1]} : vector<18x18x128xf32> to vector<16x16x128xf32>
    %46 = vector.shape_cast %45 : vector<16x16x128xf32> to vector<256x128xf32>
    %47 = vector.extract_strided_slice %40 {offsets = [1, 0, 0], sizes = [16, 16, 128], strides = [1, 1, 1]} : vector<18x18x128xf32> to vector<16x16x128xf32>
    %48 = vector.shape_cast %47 : vector<16x16x128xf32> to vector<256x128xf32>
    %49 = vector.extract_strided_slice %40 {offsets = [1, 1, 0], sizes = [16, 16, 128], strides = [1, 1, 1]} : vector<18x18x128xf32> to vector<16x16x128xf32>
    %50 = vector.shape_cast %49 : vector<16x16x128xf32> to vector<256x128xf32>
    %51 = vector.extract_strided_slice %40 {offsets = [1, 2, 0], sizes = [16, 16, 128], strides = [1, 1, 1]} : vector<18x18x128xf32> to vector<16x16x128xf32>
    %52 = vector.shape_cast %51 : vector<16x16x128xf32> to vector<256x128xf32>
    %53 = vector.extract_strided_slice %40 {offsets = [2, 0, 0], sizes = [16, 16, 128], strides = [1, 1, 1]} : vector<18x18x128xf32> to vector<16x16x128xf32>
    %54 = vector.shape_cast %53 : vector<16x16x128xf32> to vector<256x128xf32>
    %55 = vector.extract_strided_slice %40 {offsets = [2, 1, 0], sizes = [16, 16, 128], strides = [1, 1, 1]} : vector<18x18x128xf32> to vector<16x16x128xf32>
    %56 = vector.shape_cast %55 : vector<16x16x128xf32> to vector<256x128xf32>
    %57 = vector.extract_strided_slice %40 {offsets = [2, 2, 0], sizes = [16, 16, 128], strides = [1, 1, 1]} : vector<18x18x128xf32> to vector<16x16x128xf32>
    %58 = vector.shape_cast %57 : vector<16x16x128xf32> to vector<256x128xf32>
    %59 = tpu.concatenate %42, %44, %46, %48, %50, %52, %54, %56, %58 in 1 : vector<256x128xf32>, vector<256x128xf32>, vector<256x128xf32>, vector<256x128xf32>, vector<256x128xf32>, vector<256x128xf32>, vector<256x128xf32>, vector<256x128xf32>, vector<256x128xf32> -> vector<256x1152xf32>
    %60 = arith.truncf %59 : vector<256x1152xf32> to vector<256x1152xbf16>
    %c0_31 = arith.constant 0 : index
    %c0_32 = arith.constant 0 : index
    %61 = vector.load %arg5[%c0_31, %c0_32] : memref<1152x128xbf16, #tpu.memory_space<vmem>>, vector<1152x128xbf16>
    %cst_33 = arith.constant dense<0.000000e+00> : vector<256x128xf32>
    %62 = tpu.matmul %60, %61, %cst_33 {dimension_numbers = #tpu.dot_dimension_numbers<[1], [0], [0], [1], [0, 0, 1, 1], [], []>} : vector<256x1152xbf16>, vector<1152x128xbf16>, vector<256x128xf32> -> vector<256x128xf32>
    %c0_34 = arith.constant 0 : index
    %c0_35 = arith.constant 0 : index
    %63 = vector.load %arg6[%c0_34, %c0_35] : memref<1x128xf32, #tpu.memory_space<vmem>>, vector<1x128xf32>
    %64 = vector.broadcast %63 : vector<1x128xf32> to vector<256x128xf32>
    %65 = arith.addf %62, %64 : vector<256x128xf32>
    %cst_36 = arith.constant 0.000000e+00 : f32
    %66 = vector.broadcast %cst_36 : f32 to vector<256x128xf32>
    %67 = arith.maximumf %65, %66 : vector<256x128xf32>
    %68 = vector.shape_cast %67 : vector<256x128xf32> to vector<1x16x16x128xf32>
    %c0_37 = arith.constant 0 : index
    %c0_38 = arith.constant 0 : index
    %c0_39 = arith.constant 0 : index
    %c0_40 = arith.constant 0 : index
    %69 = vector.load %arg7[%c0_37, %c0_38, %c0_39, %c0_40] : memref<1x16x16x128xf32, #tpu.memory_space<vmem>>, vector<1x16x16x128xf32>
    tpu.vector_store %arg7[%c0_37, %c0_38, %c0_39, %c0_40], %68 {strides = array<i32>} : memref<1x16x16x128xf32, #tpu.memory_space<vmem>>, vector<1x16x16x128xf32>,
    return
  }
  func.func @transform_0(%arg0: i32) -> (i32, i32, i32, i32) {
    %c0_i32 = arith.constant 0 : i32
    %c0_i32_0 = arith.constant 0 : i32
    %c0_i32_1 = arith.constant 0 : i32
    %c0_i32_2 = arith.constant 0 : i32
    return %arg0, %c0_i32, %c0_i32_0, %c0_i32_1 : i32, i32, i32, i32
  }
  func.func @transform_1(%arg0: i32) -> (i32, i32, i32, i32) {
    %c0_i32 = arith.constant 0 : i32
    %c0_i32_0 = arith.constant 0 : i32
    %c0_i32_1 = arith.constant 0 : i32
    %c0_i32_2 = arith.constant 0 : i32
    return %arg0, %c0_i32, %c0_i32_0, %c0_i32_1 : i32, i32, i32, i32
  }
  func.func @transform_2(%arg0: i32) -> (i32, i32) {
    %c0_i32 = arith.constant 0 : i32
    %c0_i32_0 = arith.constant 0 : i32
    %c0_i32_1 = arith.constant 0 : i32
    return %c0_i32, %c0_i32_0 : i32, i32
  }
  func.func @transform_3(%arg0: i32) -> (i32, i32) {
    %c0_i32 = arith.constant 0 : i32
    %c0_i32_0 = arith.constant 0 : i32
    %c0_i32_1 = arith.constant 0 : i32
    return %c0_i32, %c0_i32_0 : i32, i32
  }
  func.func @transform_4(%arg0: i32) -> (i32, i32) {
    %c0_i32 = arith.constant 0 : i32
    %c0_i32_0 = arith.constant 0 : i32
    %c0_i32_1 = arith.constant 0 : i32
    return %c0_i32, %c0_i32_0 : i32, i32
  }
  func.func @transform_5(%arg0: i32) -> (i32, i32) {
    %c0_i32 = arith.constant 0 : i32
    %c0_i32_0 = arith.constant 0 : i32
    %c0_i32_1 = arith.constant 0 : i32
    return %c0_i32, %c0_i32_0 : i32, i32
  }
  func.func @transform_6(%arg0: i32) -> (i32, i32, i32, i32) {
    %c0_i32 = arith.constant 0 : i32
    %c0_i32_0 = arith.constant 0 : i32
    %c0_i32_1 = arith.constant 0 : i32
    %c0_i32_2 = arith.constant 0 : i32
    return %arg0, %c0_i32, %c0_i32_0, %c0_i32_1 : i32, i32, i32, i32
  }
}

</mosaic_0001>

<llo_original>
// kernel: up_forward.1
$region0: #{up_forward.1}
  #allocation0 [shape = 'u32[]', space=smem, size = 0x4, offset = 0x4, fixed_abs, tag = 'smem constant byte address 0x4 - core index']
  #allocation1 [shape = 'u32[72,128]{1,0:T(1,128)}', space=vmem, size = 0x9000, scoped, tag = 'internal scratch']
  #allocation2 [shape = 'f32[18,18,128]{2,1,0:T(8,128)}', space=vmem, size = 0x36000, scoped, tag = 'scratch operand']
  #allocation3 [shape = 'f32[18,18,128]{2,1,0:T(8,128)}', space=vmem, size = 0x36000, scoped, tag = 'scratch operand']
  %s0 = inlined_call_operand.vmem [shape: f32[2,16,16,4], index: 0, kind: input, shape index: {}]
  %s1 = inlined_call_operand.vmem [shape: f32[2,16,16,4], index: 1, kind: input, shape index: {}]
  %s2 = inlined_call_operand.vmem [shape: bf16[1152,128], index: 2, kind: input, shape index: {}]
  %s3 = inlined_call_operand.vmem [shape: f32[1,128], index: 3, kind: input, shape index: {}]
  %s4 = inlined_call_operand.vmem [shape: bf16[1152,128], index: 4, kind: input, shape index: {}]
  %s5 = inlined_call_operand.vmem [shape: f32[1,128], index: 5, kind: input, shape index: {}]
  %s6 = inlined_call_operand.vmem [shape: f32[2,16,16,128], index: 6, kind: output, shape index: {}]
  %s7 = sld [smem:[#allocation0]]
  $region57: #{up_forward.1} parent=0
    _
  %s9 = ssub.s32 1, %s7
  %s10 = scalar_select 0, %s9, %s7
  loop: start=0, step=1, limit=4
  $region2: #{up_forward.1} parent=0 // loop_pre_header
    _
  $region3: #{up_forward.1} parent=0 // loop_header
    %s12 = sphi 0, %s16
    %p13 = scmp.ge.s32.totalorder %s12, 4
    %s22 = sphi 0, %s24
    %s25 = sphi 0, %s22
    %s26 = sphi 0, %s25
    %s42 = sphi 0, %s26
    %s48 = sphi 0, %s50
    %s51 = sphi 0, %s48
    %s52 = sphi 0, %s51
    %s68 = sphi 0, %s52
    %s72 = sphi 0, %s72
    %s74 = sphi 0, %s72
    %s75 = sphi 0, %s74
    %s89 = sphi 0, %s75
    %s93 = sphi 0, %s93
    %s95 = sphi 0, %s93
    %s96 = sphi 0, %s95
    %s110 = sphi 0, %s96
    %s114 = sphi 0, %s114
    %s116 = sphi 0, %s114
    %s117 = sphi 0, %s116
    %s131 = sphi 0, %s117
    %s135 = sphi 0, %s135
    %s137 = sphi 0, %s135
    %s138 = sphi 0, %s137
    %s152 = sphi 0, %s138
    %s158 = sphi 0, %s160
    %s161 = sphi 0, %s158
    %s162 = sphi 0, %s161
    %s178 = sphi 0, %s162
  $region4: #{up_forward.1} parent=0 // loop_header_branch
    %15 = sbr.rel (%p13) target = $region8
  $region5: #{up_forward.1} parent=0 // loop_body
    %s17 = ssub.s32 %s12, 1
    %s18 = ssub.s32 %s12, 2
    %s19 = sadd.s32 %s12, 1
    %s20 = ssub.s32 %s12, %s19
    %p21 = scmp.eq.s32.totalorder %s20, 0
    %s23 = sadd.s32 %s22, 1
    %s24 = scalar_select %p21, %s22, %s23
    %p27 = pneg %p21
    %p28 = scmp.eq.s32.totalorder %s12, 1
    %p29 = por %p27, %p28
    %p30 = scmp.ne.s32.totalorder %s22, %s25
    %p31 = scmp.eq.s32.totalorder %s12, 0
    %p32 = por %p30, %p31
    %p33 = scmp.ne.s32.totalorder %s22, %s25
    %p34 = scmp.eq.s32.totalorder %s17, 1
    %p35 = por %p33, %p34
    %p36 = scmp.ne.s32.totalorder %s25, %s26
    %p37 = scmp.eq.s32.totalorder %s17, 0
    %p38 = por %p36, %p37
    %p39 = scmp.ne.s32.totalorder %s25, %s26
    %p40 = scmp.eq.s32.totalorder %s18, 1
    %p41 = por %p39, %p40
    %p43 = scmp.ne.s32.totalorder %s26, %s42
    %p44 = scmp.eq.s32.totalorder %s18, 0
    %p45 = por %p43, %p44
    %s46 = ssub.s32 %s12, %s19
    %p47 = scmp.eq.s32.totalorder %s46, 0
    %s49 = sadd.s32 %s48, 1
    %s50 = scalar_select %p47, %s48, %s49
    %p53 = pneg %p47
    %p54 = scmp.eq.s32.totalorder %s12, 1
    %p55 = por %p53, %p54
    %p56 = scmp.ne.s32.totalorder %s48, %s51
    %p57 = scmp.eq.s32.totalorder %s12, 0
    %p58 = por %p56, %p57
    %p59 = scmp.ne.s32.totalorder %s48, %s51
    %p60 = scmp.eq.s32.totalorder %s17, 1
    %p61 = por %p59, %p60
    %p62 = scmp.ne.s32.totalorder %s51, %s52
    %p63 = scmp.eq.s32.totalorder %s17, 0
    %p64 = por %p62, %p63
    %p65 = scmp.ne.s32.totalorder %s51, %s52
    %p66 = scmp.eq.s32.totalorder %s18, 1
    %p67 = por %p65, %p66
    %p69 = scmp.ne.s32.totalorder %s52, %s68
    %p70 = scmp.eq.s32.totalorder %s18, 0
    %p71 = por %p69, %p70
    %s73 = sadd.s32 %s72, 1
    %p76 = scmp.eq.s32.totalorder %s12, 1
    %p77 = scmp.ne.s32.totalorder %s72, %s74
    %p78 = scmp.eq.s32.totalorder %s12, 0
    %p79 = por %p77, %p78
    %p80 = scmp.ne.s32.totalorder %s72, %s74
    %p81 = scmp.eq.s32.totalorder %s17, 1
    %p82 = por %p80, %p81
    %p83 = scmp.ne.s32.totalorder %s74, %s75
    %p84 = scmp.eq.s32.totalorder %s17, 0
    %p85 = por %p83, %p84
    %p86 = scmp.ne.s32.totalorder %s74, %s75
    %p87 = scmp.eq.s32.totalorder %s18, 1
    %p88 = por %p86, %p87
    %p90 = scmp.ne.s32.totalorder %s75, %s89
    %p91 = scmp.eq.s32.totalorder %s18, 0
    %p92 = por %p90, %p91
    %s94 = sadd.s32 %s93, 1
    %p97 = scmp.eq.s32.totalorder %s12, 1
    %p98 = scmp.ne.s32.totalorder %s93, %s95
    %p99 = scmp.eq.s32.totalorder %s12, 0
    %p100 = por %p98, %p99
    %p101 = scmp.ne.s32.totalorder %s93, %s95
    %p102 = scmp.eq.s32.totalorder %s17, 1
    %p103 = por %p101, %p102
    %p104 = scmp.ne.s32.totalorder %s95, %s96
    %p105 = scmp.eq.s32.totalorder %s17, 0
    %p106 = por %p104, %p105
    %p107 = scmp.ne.s32.totalorder %s95, %s96
    %p108 = scmp.eq.s32.totalorder %s18, 1
    %p109 = por %p107, %p108
    %p111 = scmp.ne.s32.totalorder %s96, %s110
    %p112 = scmp.eq.s32.totalorder %s18, 0
    %p113 = por %p111, %p112
    %s115 = sadd.s32 %s114, 1
    %p118 = scmp.eq.s32.totalorder %s12, 1
    %p119 = scmp.ne.s32.totalorder %s114, %s116
    %p120 = scmp.eq.s32.totalorder %s12, 0
    %p121 = por %p119, %p120
    %p122 = scmp.ne.s32.totalorder %s114, %s116
    %p123 = scmp.eq.s32.totalorder %s17, 1
    %p124 = por %p122, %p123
    %p125 = scmp.ne.s32.totalorder %s116, %s117
    %p126 = scmp.eq.s32.totalorder %s17, 0
    %p127 = por %p125, %p126
    %p128 = scmp.ne.s32.totalorder %s116, %s117
    %p129 = scmp.eq.s32.totalorder %s18, 1
    %p130 = por %p128, %p129
    %p132 = scmp.ne.s32.totalorder %s117, %s131
    %p133 = scmp.eq.s32.totalorder %s18, 0
    %p134 = por %p132, %p133
    %s136 = sadd.s32 %s135, 1
    %p139 = scmp.eq.s32.totalorder %s12, 1
    %p140 = scmp.ne.s32.totalorder %s135, %s137
    %p141 = scmp.eq.s32.totalorder %s12, 0
    %p142 = por %p140, %p141
    %p143 = scmp.ne.s32.totalorder %s135, %s137
    %p144 = scmp.eq.s32.totalorder %s17, 1
    %p145 = por %p143, %p144
    %p146 = scmp.ne.s32.totalorder %s137, %s138
    %p147 = scmp.eq.s32.totalorder %s17, 0
    %p148 = por %p146, %p147
    %p149 = scmp.ne.s32.totalorder %s137, %s138
    %p150 = scmp.eq.s32.totalorder %s18, 1
    %p151 = por %p149, %p150
    %p153 = scmp.ne.s32.totalorder %s138, %s152
    %p154 = scmp.eq.s32.totalorder %s18, 0
    %p155 = por %p153, %p154
    %s156 = ssub.s32 %s12, %s19
    %p157 = scmp.eq.s32.totalorder %s156, 0
    %s159 = sadd.s32 %s158, 1
    %s160 = scalar_select %p157, %s158, %s159
    %p163 = pneg %p157
    %p164 = scmp.eq.s32.totalorder %s12, 1
    %p165 = por %p163, %p164
    %p166 = scmp.ne.s32.totalorder %s158, %s161
    %p167 = scmp.eq.s32.totalorder %s12, 0
    %p168 = por %p166, %p167
    %p169 = scmp.ne.s32.totalorder %s158, %s161
    %p170 = scmp.eq.s32.totalorder %s17, 1
    %p171 = por %p169, %p170
    %p172 = scmp.ne.s32.totalorder %s161, %s162
    %p173 = scmp.eq.s32.totalorder %s17, 0
    %p174 = por %p172, %p173
    %p175 = scmp.ne.s32.totalorder %s161, %s162
    %p176 = scmp.eq.s32.totalorder %s18, 1
    %p177 = por %p175, %p176
    %p179 = scmp.ne.s32.totalorder %s162, %s178
    %p180 = scmp.eq.s32.totalorder %s18, 0
    %p181 = por %p179, %p180
    %p182 = scmp.le.s32.totalorder 1, %s12
    %p183 = scmp.lt.s32.totalorder %s12, 3
    %p184 = pnand %p182, %p183
    %p185 = pneg %p184
    // Predicated region
    $region9: #{up_forward.1} parent=5 // pred_check
      _
    $region10: #{up_forward.1} parent=5 // pred_check_branch
      %187 = sbr.rel (%p184) target = $region12
    $region11: #{up_forward.1} parent=5 // pred_region
      %s188 = ssub.s32 %s12, 1
      // Predicated region
      $region13: #{up_forward.1} parent=11 // pred_check
        %p189 = pneg %p85
      $region14: #{up_forward.1} parent=11 // pred_check_branch
        %191 = sbr.rel (%p189) target = $region16
      $region15: #{up_forward.1} parent=11 // pred_region
        _
      $region16: #{up_forward.1} parent=11 // pred_fallthru
        _
      // Predicated region
      $region17: #{up_forward.1} parent=11 // pred_check
        %p192 = pneg %p106
      $region18: #{up_forward.1} parent=11 // pred_check_branch
        %194 = sbr.rel (%p192) target = $region20
      $region19: #{up_forward.1} parent=11 // pred_region
        _
      $region20: #{up_forward.1} parent=11 // pred_fallthru
        _
      // Predicated region
      $region21: #{up_forward.1} parent=11 // pred_check
        %p195 = pneg %p127
      $region22: #{up_forward.1} parent=11 // pred_check_branch
        %197 = sbr.rel (%p195) target = $region24
      $region23: #{up_forward.1} parent=11 // pred_region
        _
      $region24: #{up_forward.1} parent=11 // pred_fallthru
        _
      // Predicated region
      $region25: #{up_forward.1} parent=11 // pred_check
        %p198 = pneg %p148
      $region26: #{up_forward.1} parent=11 // pred_check_branch
        %200 = sbr.rel (%p198) target = $region28
      $region27: #{up_forward.1} parent=11 // pred_region
        _
      $region28: #{up_forward.1} parent=11 // pred_fallthru
        _
    $region12: #{up_forward.1} parent=5 // pred_fallthru
      _
    %p201 = scmp.lt.s32.totalorder %s12, 2
    // Predicated region
    $region29: #{up_forward.1} parent=5 // pred_check
      %p202 = pneg %p201
    $region30: #{up_forward.1} parent=5 // pred_check_branch
      %204 = sbr.rel (%p202) target = $region32
    $region31: #{up_forward.1} parent=5 // pred_region
      // Predicated region
      $region33: #{up_forward.1} parent=31 // pred_check
        %p205 = pneg %p32
      $region34: #{up_forward.1} parent=31 // pred_check_branch
        %207 = sbr.rel (%p205) target = $region36
      $region35: #{up_forward.1} parent=31 // pred_region
        %p208 = scmp.lt.s32.totalorder %s12, 1
        %s209 = scalar_select %p208, %s12, 1
        %s210 = smul.addr %s209, 32
        %s211 = smul.addr %s210, 8
        %s212 = scalar_lea.vmem %s0, %s211
      $region36: #{up_forward.1} parent=31 // pred_fallthru
        _
      // Predicated region
      $region37: #{up_forward.1} parent=31 // pred_check
        %p213 = pneg %p58
      $region38: #{up_forward.1} parent=31 // pred_check_branch
        %215 = sbr.rel (%p213) target = $region40
      $region39: #{up_forward.1} parent=31 // pred_region
        %p216 = scmp.lt.s32.totalorder %s12, 1
        %s217 = scalar_select %p216, %s12, 1
        %s218 = smul.addr %s217, 32
        %s219 = smul.addr %s218, 8
        %s220 = scalar_lea.vmem %s1, %s219
      $region40: #{up_forward.1} parent=31 // pred_fallthru
        _
    $region32: #{up_forward.1} parent=5 // pred_fallthru
      _
    %p221 = scmp.le.s32.totalorder 1, %s12
    %p222 = scmp.lt.s32.totalorder %s12, 3
    %p223 = pnand %p221, %p222
    %p224 = pneg %p223
    // Predicated region
    $region41: #{up_forward.1} parent=5 // pred_check
      _
    $region42: #{up_forward.1} parent=5 // pred_check_branch
      %226 = sbr.rel (%p223) target = $region44
    $region43: #{up_forward.1} parent=5 // pred_region
      %s227 = ssub.s32 %s12, 1
      %p228 = scmp.lt.s32.totalorder %s17, 1
      %s229 = scalar_select %p228, %s17, 1
      %s230 = smul.addr %s229, 32
      %s231 = smul.addr %s230, 8
      %s232 = scalar_lea.vmem %s0, %s231
      %p233 = pneg %p38
      %p234 = pneg %p35
      %p235 = scmp.lt.s32.totalorder %s17, 1
      %s236 = scalar_select %p235, %s17, 1
      %s237 = smul.addr %s236, 32
      %s238 = smul.addr %s237, 8
      %s239 = scalar_lea.vmem %s1, %s238
      %p240 = pneg %p64
      %p241 = pneg %p61
      %p242 = pneg %p85
      %p243 = pneg %p82
      %p244 = pneg %p106
      %p245 = pneg %p103
      %p246 = pneg %p127
      %p247 = pneg %p124
      %p248 = pneg %p148
      %p249 = pneg %p145
      %p250 = pneg %p174
      %p251 = pneg %p171
      %p252 = scmp.lt.s32.totalorder %s17, 1
      %s253 = scalar_select %p252, %s17, 1
      %s254 = smul.addr %s253, 32
      %s255 = smul.addr %s254, 8
      %s256 = scalar_lea.vmem %s6, %s255
      %p257 = scmp.lt.s32.totalorder %s17, 1
      %s258 = scalar_select %p257, %s17, 1
      %s259 = smul.addr %s258, 32
      %s260 = smul.addr %s259, 8
      %s261 = scalar_lea.vmem %s0, %s260
      %p262 = scmp.lt.s32.totalorder %s17, 1
      %s263 = scalar_select %p262, %s17, 1
      %s264 = smul.addr %s263, 32
      %s265 = smul.addr %s264, 8
      %s266 = scalar_lea.vmem %s1, %s265
      %p267 = scmp.lt.s32.totalorder %s17, 1
      %s268 = scalar_select %p267, %s17, 1
      %s269 = smul.addr %s268, 32
      %s270 = smul.addr %s269, 8
      %s271 = scalar_lea.vmem %s6, %s270
      %272 = vst [vmem:[#allocation2] sm:$0xff] 0.0
      %273 = vst [vmem:[#allocation2 + $0x8] sm:$0xff] 0.0
      %274 = vst [vmem:[#allocation2 + $0x10] sm:$0x3] 0.0
      %275 = vst [vmem:[#allocation2 + $0x18] sm:$0xff] 0.0
      %276 = vst [vmem:[#allocation2 + $0x20] sm:$0xff] 0.0
      %277 = vst [vmem:[#allocation2 + $0x28] sm:$0x3] 0.0
      %278 = vst [vmem:[#allocation2 + $0x30] sm:$0xff] 0.0
      %279 = vst [vmem:[#allocation2 + $0x38] sm:$0xff] 0.0
      %280 = vst [vmem:[#allocation2 + $0x40] sm:$0x3] 0.0
      %281 = vst [vmem:[#allocation2 + $0x48] sm:$0xff] 0.0
      %282 = vst [vmem:[#allocation2 + $0x50] sm:$0xff] 0.0
      %283 = vst [vmem:[#allocation2 + $0x58] sm:$0x3] 0.0
      %284 = vst [vmem:[#allocation2 + $0x60] sm:$0xff] 0.0
      %285 = vst [vmem:[#allocation2 + $0x68] sm:$0xff] 0.0
      %286 = vst [vmem:[#allocation2 + $0x70] sm:$0x3] 0.0
      %287 = vst [vmem:[#allocation2 + $0x78] sm:$0xff] 0.0
      %288 = vst [vmem:[#allocation2 + $0x80] sm:$0xff] 0.0
      %289 = vst [vmem:[#allocation2 + $0x88] sm:$0x3] 0.0
      %290 = vst [vmem:[#allocation2 + $0x90] sm:$0xff] 0.0
      %291 = vst [vmem:[#allocation2 + $0x98] sm:$0xff] 0.0
      %292 = vst [vmem:[#allocation2 + $0xa0] sm:$0x3] 0.0
      %293 = vst [vmem:[#allocation2 + $0xa8] sm:$0xff] 0.0
      %294 = vst [vmem:[#allocation2 + $0xb0] sm:$0xff] 0.0
      %295 = vst [vmem:[#allocation2 + $0xb8] sm:$0x3] 0.0
      %296 = vst [vmem:[#allocation2 + $0xc0] sm:$0xff] 0.0
      %297 = vst [vmem:[#allocation2 + $0xc8] sm:$0xff] 0.0
      %298 = vst [vmem:[#allocation2 + $0xd0] sm:$0x3] 0.0
      %299 = vst [vmem:[#allocation2 + $0xd8] sm:$0xff] 0.0
      %300 = vst [vmem:[#allocation2 + $0xe0] sm:$0xff] 0.0
      %301 = vst [vmem:[#allocation2 + $0xe8] sm:$0x3] 0.0
      %302 = vst [vmem:[#allocation2 + $0xf0] sm:$0xff] 0.0
      %303 = vst [vmem:[#allocation2 + $0xf8] sm:$0xff] 0.0
      %304 = vst [vmem:[#allocation2 + $0x100] sm:$0x3] 0.0
      %305 = vst [vmem:[#allocation2 + $0x108] sm:$0xff] 0.0
      %306 = vst [vmem:[#allocation2 + $0x110] sm:$0xff] 0.0
      %307 = vst [vmem:[#allocation2 + $0x118] sm:$0x3] 0.0
      %308 = vst [vmem:[#allocation2 + $0x120] sm:$0xff] 0.0
      %309 = vst [vmem:[#allocation2 + $0x128] sm:$0xff] 0.0
      %310 = vst [vmem:[#allocation2 + $0x130] sm:$0x3] 0.0
      %311 = vst [vmem:[#allocation2 + $0x138] sm:$0xff] 0.0
      %312 = vst [vmem:[#allocation2 + $0x140] sm:$0xff] 0.0
      %313 = vst [vmem:[#allocation2 + $0x148] sm:$0x3] 0.0
      %314 = vst [vmem:[#allocation2 + $0x150] sm:$0xff] 0.0
      %315 = vst [vmem:[#allocation2 + $0x158] sm:$0xff] 0.0
      %316 = vst [vmem:[#allocation2 + $0x160] sm:$0x3] 0.0
      %317 = vst [vmem:[#allocation2 + $0x168] sm:$0xff] 0.0
      %318 = vst [vmem:[#allocation2 + $0x170] sm:$0xff] 0.0
      %319 = vst [vmem:[#allocation2 + $0x178] sm:$0x3] 0.0
      %320 = vst [vmem:[#allocation2 + $0x180] sm:$0xff] 0.0
      %321 = vst [vmem:[#allocation2 + $0x188] sm:$0xff] 0.0
      %322 = vst [vmem:[#allocation2 + $0x190] sm:$0x3] 0.0
      %323 = vst [vmem:[#allocation2 + $0x198] sm:$0xff] 0.0
      %324 = vst [vmem:[#allocation2 + $0x1a0] sm:$0xff] 0.0
      %325 = vst [vmem:[#allocation2 + $0x1a8] sm:$0x3] 0.0
      %v326 = vld [vmem:[%s261] sm:$0xff]
      %v327 = vld [vmem:[%s261 + $0x8] sm:$0xff]
      %v328 = vld [vmem:[%s261 + $0x10] sm:$0xff]
      %v329 = vld [vmem:[%s261 + $0x18] sm:$0xff]
      %v330 = vld [vmem:[%s261 + $0x20] sm:$0xff]
      %v331 = vld [vmem:[%s261 + $0x28] sm:$0xff]
      %v332 = vld [vmem:[%s261 + $0x30] sm:$0xff]
      %v333 = vld [vmem:[%s261 + $0x38] sm:$0xff]
      %v334 = vld [vmem:[%s261 + $0x40] sm:$0xff]
      %v335 = vld [vmem:[%s261 + $0x48] sm:$0xff]
      %v336 = vld [vmem:[%s261 + $0x50] sm:$0xff]
      %v337 = vld [vmem:[%s261 + $0x58] sm:$0xff]
      %v338 = vld [vmem:[%s261 + $0x60] sm:$0xff]
      %v339 = vld [vmem:[%s261 + $0x68] sm:$0xff]
      %v340 = vld [vmem:[%s261 + $0x70] sm:$0xff]
      %v341 = vld [vmem:[%s261 + $0x78] sm:$0xff]
      %v342 = vld [vmem:[%s261 + $0x80] sm:$0xff]
      %v343 = vld [vmem:[%s261 + $0x88] sm:$0xff]
      %v344 = vld [vmem:[%s261 + $0x90] sm:$0xff]
      %v345 = vld [vmem:[%s261 + $0x98] sm:$0xff]
      %v346 = vld [vmem:[%s261 + $0xa0] sm:$0xff]
      %v347 = vld [vmem:[%s261 + $0xa8] sm:$0xff]
      %v348 = vld [vmem:[%s261 + $0xb0] sm:$0xff]
      %v349 = vld [vmem:[%s261 + $0xb8] sm:$0xff]
      %v350 = vld [vmem:[%s261 + $0xc0] sm:$0xff]
      %v351 = vld [vmem:[%s261 + $0xc8] sm:$0xff]
      %v352 = vld [vmem:[%s261 + $0xd0] sm:$0xff]
      %v353 = vld [vmem:[%s261 + $0xd8] sm:$0xff]
      %v354 = vld [vmem:[%s261 + $0xe0] sm:$0xff]
      %v355 = vld [vmem:[%s261 + $0xe8] sm:$0xff]
      %v356 = vld [vmem:[%s261 + $0xf0] sm:$0xff]
      %v357 = vld [vmem:[%s261 + $0xf8] sm:$0xff]
      %v358 = vld [vmem:[%s266] sm:$0xff]
      %v359 = vld [vmem:[%s266 + $0x8] sm:$0xff]
      %v360 = vld [vmem:[%s266 + $0x10] sm:$0xff]
      %v361 = vld [vmem:[%s266 + $0x18] sm:$0xff]
      %v362 = vld [vmem:[%s266 + $0x20] sm:$0xff]
      %v363 = vld [vmem:[%s266 + $0x28] sm:$0xff]
      %v364 = vld [vmem:[%s266 + $0x30] sm:$0xff]
      %v365 = vld [vmem:[%s266 + $0x38] sm:$0xff]
      %v366 = vld [vmem:[%s266 + $0x40] sm:$0xff]
      %v367 = vld [vmem:[%s266 + $0x48] sm:$0xff]
      %v368 = vld [vmem:[%s266 + $0x50] sm:$0xff]
      %v369 = vld [vmem:[%s266 + $0x58] sm:$0xff]
      %v370 = vld [vmem:[%s266 + $0x60] sm:$0xff]
      %v371 = vld [vmem:[%s266 + $0x68] sm:$0xff]
      %v372 = vld [vmem:[%s266 + $0x70] sm:$0xff]
      %v373 = vld [vmem:[%s266 + $0x78] sm:$0xff]
      %v374 = vld [vmem:[%s266 + $0x80] sm:$0xff]
      %v375 = vld [vmem:[%s266 + $0x88] sm:$0xff]
      %v376 = vld [vmem:[%s266 + $0x90] sm:$0xff]
      %v377 = vld [vmem:[%s266 + $0x98] sm:$0xff]
      %v378 = vld [vmem:[%s266 + $0xa0] sm:$0xff]
      %v379 = vld [vmem:[%s266 + $0xa8] sm:$0xff]
      %v380 = vld [vmem:[%s266 + $0xb0] sm:$0xff]
      %v381 = vld [vmem:[%s266 + $0xb8] sm:$0xff]
      %v382 = vld [vmem:[%s266 + $0xc0] sm:$0xff]
      %v383 = vld [vmem:[%s266 + $0xc8] sm:$0xff]
      %v384 = vld [vmem:[%s266 + $0xd0] sm:$0xff]
      %v385 = vld [vmem:[%s266 + $0xd8] sm:$0xff]
      %v386 = vld [vmem:[%s266 + $0xe0] sm:$0xff]
      %v387 = vld [vmem:[%s266 + $0xe8] sm:$0xff]
      %v388 = vld [vmem:[%s266 + $0xf0] sm:$0xff]
      %v389 = vld [vmem:[%s266 + $0xf8] sm:$0xff]
      %422 = vrot.lane.b32.xlu0 %v358, 4
      %v423 = vpop.permute.xlu0 %422
      %424 = vrot.lane.b32.xlu0 %v359, 4
      %v425 = vpop.permute.xlu0 %424
      %426 = vrot.lane.b32.xlu0 %v360, 4
      %v427 = vpop.permute.xlu0 %426
      %428 = vrot.lane.b32.xlu0 %v361, 4
      %v429 = vpop.permute.xlu0 %428
      %430 = vrot.lane.b32.xlu0 %v362, 4
      %v431 = vpop.permute.xlu0 %430
      %432 = vrot.lane.b32.xlu0 %v363, 4
      %v433 = vpop.permute.xlu0 %432
      %434 = vrot.lane.b32.xlu0 %v364, 4
      %v435 = vpop.permute.xlu0 %434
      %436 = vrot.lane.b32.xlu0 %v365, 4
      %v437 = vpop.permute.xlu0 %436
      %438 = vrot.lane.b32.xlu0 %v366, 4
      %v439 = vpop.permute.xlu0 %438
      %440 = vrot.lane.b32.xlu0 %v367, 4
      %v441 = vpop.permute.xlu0 %440
      %442 = vrot.lane.b32.xlu0 %v368, 4
      %v443 = vpop.permute.xlu0 %442
      %444 = vrot.lane.b32.xlu0 %v369, 4
      %v445 = vpop.permute.xlu0 %444
      %446 = vrot.lane.b32.xlu0 %v370, 4
      %v447 = vpop.permute.xlu0 %446
      %448 = vrot.lane.b32.xlu0 %v371, 4
      %v449 = vpop.permute.xlu0 %448
      %450 = vrot.lane.b32.xlu0 %v372, 4
      %v451 = vpop.permute.xlu0 %450
      %452 = vrot.lane.b32.xlu0 %v373, 4
      %v453 = vpop.permute.xlu0 %452
      %454 = vrot.lane.b32.xlu0 %v374, 4
      %v455 = vpop.permute.xlu0 %454
      %456 = vrot.lane.b32.xlu0 %v375, 4
      %v457 = vpop.permute.xlu0 %456
      %458 = vrot.lane.b32.xlu0 %v376, 4
      %v459 = vpop.permute.xlu0 %458
      %460 = vrot.lane.b32.xlu0 %v377, 4
      %v461 = vpop.permute.xlu0 %460
      %462 = vrot.lane.b32.xlu0 %v378, 4
      %v463 = vpop.permute.xlu0 %462
      %464 = vrot.lane.b32.xlu0 %v379, 4
      %v465 = vpop.permute.xlu0 %464
      %466 = vrot.lane.b32.xlu0 %v380, 4
      %v467 = vpop.permute.xlu0 %466
      %468 = vrot.lane.b32.xlu0 %v381, 4
      %v469 = vpop.permute.xlu0 %468
      %470 = vrot.lane.b32.xlu0 %v382, 4
      %v471 = vpop.permute.xlu0 %470
      %472 = vrot.lane.b32.xlu0 %v383, 4
      %v473 = vpop.permute.xlu0 %472
      %474 = vrot.lane.b32.xlu0 %v384, 4
      %v475 = vpop.permute.xlu0 %474
      %476 = vrot.lane.b32.xlu0 %v385, 4
      %v477 = vpop.permute.xlu0 %476
      %478 = vrot.lane.b32.xlu0 %v386, 4
      %v479 = vpop.permute.xlu0 %478
      %480 = vrot.lane.b32.xlu0 %v387, 4
      %v481 = vpop.permute.xlu0 %480
      %482 = vrot.lane.b32.xlu0 %v388, 4
      %v483 = vpop.permute.xlu0 %482
      %484 = vrot.lane.b32.xlu0 %v389, 4
      %v485 = vpop.permute.xlu0 %484
      %vm518 = vcmask 31744
      %v519 = vsel %vm518, %v326, %v423
      %v520 = vsel %vm518, %v327, %v425
      %v521 = vsel %vm518, %v328, %v427
      %v522 = vsel %vm518, %v329, %v429
      %v523 = vsel %vm518, %v330, %v431
      %v524 = vsel %vm518, %v331, %v433
      %v525 = vsel %vm518, %v332, %v435
      %v526 = vsel %vm518, %v333, %v437
      %v527 = vsel %vm518, %v334, %v439
      %v528 = vsel %vm518, %v335, %v441
      %v529 = vsel %vm518, %v336, %v443
      %v530 = vsel %vm518, %v337, %v445
      %v531 = vsel %vm518, %v338, %v447
      %v532 = vsel %vm518, %v339, %v449
      %v533 = vsel %vm518, %v340, %v451
      %v534 = vsel %vm518, %v341, %v453
      %v535 = vsel %vm518, %v342, %v455
      %v536 = vsel %vm518, %v343, %v457
      %v537 = vsel %vm518, %v344, %v459
      %v538 = vsel %vm518, %v345, %v461
      %v539 = vsel %vm518, %v346, %v463
      %v540 = vsel %vm518, %v347, %v465
      %v541 = vsel %vm518, %v348, %v467
      %v542 = vsel %vm518, %v349, %v469
      %v543 = vsel %vm518, %v350, %v471
      %v544 = vsel %vm518, %v351, %v473
      %v545 = vsel %vm518, %v352, %v475
      %v546 = vsel %vm518, %v353, %v477
      %v547 = vsel %vm518, %v354, %v479
      %v548 = vsel %vm518, %v355, %v481
      %v549 = vsel %vm518, %v356, %v483
      %v550 = vsel %vm518, %v357, %v485
      %s551 = scalar_lea.vmem [#allocation2], 24
      %vm552 = vcmask 64512
      %553 = vst.msk [vmem:[%s551 + $0x1] sm:$0xff] %vm552, %v519
      %554 = vst.msk [vmem:[%s551 + $0x9] sm:$0xff] %vm552, %v520
      %555 = vst.msk [vmem:[%s551 + $0x19] sm:$0xff] %vm552, %v521
      %556 = vst.msk [vmem:[%s551 + $0x21] sm:$0xff] %vm552, %v522
      %557 = vst.msk [vmem:[%s551 + $0x31] sm:$0xff] %vm552, %v523
      %558 = vst.msk [vmem:[%s551 + $0x39] sm:$0xff] %vm552, %v524
      %559 = vst.msk [vmem:[%s551 + $0x49] sm:$0xff] %vm552, %v525
      %560 = vst.msk [vmem:[%s551 + $0x51] sm:$0xff] %vm552, %v526
      %561 = vst.msk [vmem:[%s551 + $0x61] sm:$0xff] %vm552, %v527
      %562 = vst.msk [vmem:[%s551 + $0x69] sm:$0xff] %vm552, %v528
      %563 = vst.msk [vmem:[%s551 + $0x79] sm:$0xff] %vm552, %v529
      %564 = vst.msk [vmem:[%s551 + $0x81] sm:$0xff] %vm552, %v530
      %565 = vst.msk [vmem:[%s551 + $0x91] sm:$0xff] %vm552, %v531
      %566 = vst.msk [vmem:[%s551 + $0x99] sm:$0xff] %vm552, %v532
      %567 = vst.msk [vmem:[%s551 + $0xa9] sm:$0xff] %vm552, %v533
      %568 = vst.msk [vmem:[%s551 + $0xb1] sm:$0xff] %vm552, %v534
      %569 = vst.msk [vmem:[%s551 + $0xc1] sm:$0xff] %vm552, %v535
      %570 = vst.msk [vmem:[%s551 + $0xc9] sm:$0xff] %vm552, %v536
      %571 = vst.msk [vmem:[%s551 + $0xd9] sm:$0xff] %vm552, %v537
      %572 = vst.msk [vmem:[%s551 + $0xe1] sm:$0xff] %vm552, %v538
      %573 = vst.msk [vmem:[%s551 + $0xf1] sm:$0xff] %vm552, %v539
      %574 = vst.msk [vmem:[%s551 + $0xf9] sm:$0xff] %vm552, %v540
      %575 = vst.msk [vmem:[%s551 + $0x109] sm:$0xff] %vm552, %v541
      %576 = vst.msk [vmem:[%s551 + $0x111] sm:$0xff] %vm552, %v542
      %577 = vst.msk [vmem:[%s551 + $0x121] sm:$0xff] %vm552, %v543
      %578 = vst.msk [vmem:[%s551 + $0x129] sm:$0xff] %vm552, %v544
      %579 = vst.msk [vmem:[%s551 + $0x139] sm:$0xff] %vm552, %v545
      %580 = vst.msk [vmem:[%s551 + $0x141] sm:$0xff] %vm552, %v546
      %581 = vst.msk [vmem:[%s551 + $0x151] sm:$0xff] %vm552, %v547
      %582 = vst.msk [vmem:[%s551 + $0x159] sm:$0xff] %vm552, %v548
      %583 = vst.msk [vmem:[%s551 + $0x169] sm:$0xff] %vm552, %v549
      %584 = vst.msk [vmem:[%s551 + $0x171] sm:$0xff] %vm552, %v550
      %v585 = vld [vmem:[#allocation2] sm:$0xff]
      %v586 = vld [vmem:[#allocation2 + $0x8] sm:$0xff]
      %v587 = vld [vmem:[#allocation2 + $0x10] sm:$0x3]
      %v588 = vld [vmem:[#allocation2 + $0x18] sm:$0xff]
      %v589 = vld [vmem:[#allocation2 + $0x20] sm:$0xff]
      %v590 = vld [vmem:[#allocation2 + $0x28] sm:$0x3]
      %v591 = vld [vmem:[#allocation2 + $0x30] sm:$0xff]
      %v592 = vld [vmem:[#allocation2 + $0x38] sm:$0xff]
      %v593 = vld [vmem:[#allocation2 + $0x40] sm:$0x3]
      %v594 = vld [vmem:[#allocation2 + $0x48] sm:$0xff]
      %v595 = vld [vmem:[#allocation2 + $0x50] sm:$0xff]
      %v596 = vld [vmem:[#allocation2 + $0x58] sm:$0x3]
      %v597 = vld [vmem:[#allocation2 + $0x60] sm:$0xff]
      %v598 = vld [vmem:[#allocation2 + $0x68] sm:$0xff]
      %v599 = vld [vmem:[#allocation2 + $0x70] sm:$0x3]
      %v600 = vld [vmem:[#allocation2 + $0x78] sm:$0xff]
      %v601 = vld [vmem:[#allocation2 + $0x80] sm:$0xff]
      %v602 = vld [vmem:[#allocation2 + $0x88] sm:$0x3]
      %v603 = vld [vmem:[#allocation2 + $0x90] sm:$0xff]
      %v604 = vld [vmem:[#allocation2 + $0x98] sm:$0xff]
      %v605 = vld [vmem:[#allocation2 + $0xa0] sm:$0x3]
      %v606 = vld [vmem:[#allocation2 + $0xa8] sm:$0xff]
      %v607 = vld [vmem:[#allocation2 + $0xb0] sm:$0xff]
      %v608 = vld [vmem:[#allocation2 + $0xb8] sm:$0x3]
      %v609 = vld [vmem:[#allocation2 + $0xc0] sm:$0xff]
      %v610 = vld [vmem:[#allocation2 + $0xc8] sm:$0xff]
      %v611 = vld [vmem:[#allocation2 + $0xd0] sm:$0x3]
      %v612 = vld [vmem:[#allocation2 + $0xd8] sm:$0xff]
      %v613 = vld [vmem:[#allocation2 + $0xe0] sm:$0xff]
      %v614 = vld [vmem:[#allocation2 + $0xe8] sm:$0x3]
      %v615 = vld [vmem:[#allocation2 + $0xf0] sm:$0xff]
      %v616 = vld [vmem:[#allocation2 + $0xf8] sm:$0xff]
      %v617 = vld [vmem:[#allocation2 + $0x100] sm:$0x3]
      %v618 = vld [vmem:[#allocation2 + $0x108] sm:$0xff]
      %v619 = vld [vmem:[#allocation2 + $0x110] sm:$0xff]
      %v620 = vld [vmem:[#allocation2 + $0x118] sm:$0x3]
      %v621 = vld [vmem:[#allocation2 + $0x120] sm:$0xff]
      %v622 = vld [vmem:[#allocation2 + $0x128] sm:$0xff]
      %v623 = vld [vmem:[#allocation2 + $0x130] sm:$0x3]
      %v624 = vld [vmem:[#allocation2 + $0x138] sm:$0xff]
      %v625 = vld [vmem:[#allocation2 + $0x140] sm:$0xff]
      %v626 = vld [vmem:[#allocation2 + $0x148] sm:$0x3]
      %v627 = vld [vmem:[#allocation2 + $0x150] sm:$0xff]
      %v628 = vld [vmem:[#allocation2 + $0x158] sm:$0xff]
      %v629 = vld [vmem:[#allocation2 + $0x160] sm:$0x3]
      %v630 = vld [vmem:[#allocation2 + $0x168] sm:$0xff]
      %v631 = vld [vmem:[#allocation2 + $0x170] sm:$0xff]
      %v632 = vld [vmem:[#allocation2 + $0x178] sm:$0x3]
      %v633 = vld [vmem:[#allocation2 + $0x180] sm:$0xff]
      %v634 = vld [vmem:[#allocation2 + $0x188] sm:$0xff]
      %v635 = vld [vmem:[#allocation2 + $0x190] sm:$0x3]
      %v636 = vld [vmem:[#allocation2 + $0x198] sm:$0xff]
      %v637 = vld [vmem:[#allocation2 + $0x1a0] sm:$0xff]
      %v638 = vld [vmem:[#allocation2 + $0x1a8] sm:$0x3]
      %vm687 = vcmask 1046528
      %v688 = vrot.slane %v585, 1
      %v689 = vrot.slane %v586, 1
      %v690 = vsel %vm687, %v688, %v689
      %v691 = vrot.slane %v587, 1
      %v692 = vsel %vm687, %v689, %v691
      %v693 = vrot.slane %v588, 1
      %v694 = vrot.slane %v589, 1
      %v695 = vsel %vm687, %v693, %v694
      %v696 = vrot.slane %v590, 1
      %v697 = vsel %vm687, %v694, %v696
      %v698 = vrot.slane %v591, 1
      %v699 = vrot.slane %v592, 1
      %v700 = vsel %vm687, %v698, %v699
      %v701 = vrot.slane %v593, 1
      %v702 = vsel %vm687, %v699, %v701
      %v703 = vrot.slane %v594, 1
      %v704 = vrot.slane %v595, 1
      %v705 = vsel %vm687, %v703, %v704
      %v706 = vrot.slane %v596, 1
      %v707 = vsel %vm687, %v704, %v706
      %v708 = vrot.slane %v597, 1
      %v709 = vrot.slane %v598, 1
      %v710 = vsel %vm687, %v708, %v709
      %v711 = vrot.slane %v599, 1
      %v712 = vsel %vm687, %v709, %v711
      %v713 = vrot.slane %v600, 1
      %v714 = vrot.slane %v601, 1
      %v715 = vsel %vm687, %v713, %v714
      %v716 = vrot.slane %v602, 1
      %v717 = vsel %vm687, %v714, %v716
      %v718 = vrot.slane %v603, 1
      %v719 = vrot.slane %v604, 1
      %v720 = vsel %vm687, %v718, %v719
      %v721 = vrot.slane %v605, 1
      %v722 = vsel %vm687, %v719, %v721
      %v723 = vrot.slane %v606, 1
      %v724 = vrot.slane %v607, 1
      %v725 = vsel %vm687, %v723, %v724
      %v726 = vrot.slane %v608, 1
      %v727 = vsel %vm687, %v724, %v726
      %v728 = vrot.slane %v609, 1
      %v729 = vrot.slane %v610, 1
      %v730 = vsel %vm687, %v728, %v729
      %v731 = vrot.slane %v611, 1
      %v732 = vsel %vm687, %v729, %v731
      %v733 = vrot.slane %v612, 1
      %v734 = vrot.slane %v613, 1
      %v735 = vsel %vm687, %v733, %v734
      %v736 = vrot.slane %v614, 1
      %v737 = vsel %vm687, %v734, %v736
      %v738 = vrot.slane %v615, 1
      %v739 = vrot.slane %v616, 1
      %v740 = vsel %vm687, %v738, %v739
      %v741 = vrot.slane %v617, 1
      %v742 = vsel %vm687, %v739, %v741
      %v743 = vrot.slane %v618, 1
      %v744 = vrot.slane %v619, 1
      %v745 = vsel %vm687, %v743, %v744
      %v746 = vrot.slane %v620, 1
      %v747 = vsel %vm687, %v744, %v746
      %v748 = vrot.slane %v621, 1
      %v749 = vrot.slane %v622, 1
      %v750 = vsel %vm687, %v748, %v749
      %v751 = vrot.slane %v623, 1
      %v752 = vsel %vm687, %v749, %v751
      %v753 = vrot.slane %v624, 1
      %v754 = vrot.slane %v625, 1
      %v755 = vsel %vm687, %v753, %v754
      %v756 = vrot.slane %v626, 1
      %v757 = vsel %vm687, %v754, %v756
      %v758 = vrot.slane %v627, 1
      %v759 = vrot.slane %v628, 1
      %v760 = vsel %vm687, %v758, %v759
      %v761 = vrot.slane %v629, 1
      %v762 = vsel %vm687, %v759, %v761
      %v763 = vrot.slane %v630, 1
      %v764 = vrot.slane %v631, 1
      %v765 = vsel %vm687, %v763, %v764
      %v766 = vrot.slane %v632, 1
      %v767 = vsel %vm687, %v764, %v766
      %vm800 = vcmask 1045504
      %v801 = vrot.slane %v585, 2
      %v802 = vrot.slane %v586, 2
      %v803 = vsel %vm800, %v801, %v802
      %v804 = vrot.slane %v587, 2
      %v805 = vsel %vm800, %v802, %v804
      %v806 = vrot.slane %v588, 2
      %v807 = vrot.slane %v589, 2
      %v808 = vsel %vm800, %v806, %v807
      %v809 = vrot.slane %v590, 2
      %v810 = vsel %vm800, %v807, %v809
      %v811 = vrot.slane %v591, 2
      %v812 = vrot.slane %v592, 2
      %v813 = vsel %vm800, %v811, %v812
      %v814 = vrot.slane %v593, 2
      %v815 = vsel %vm800, %v812, %v814
      %v816 = vrot.slane %v594, 2
      %v817 = vrot.slane %v595, 2
      %v818 = vsel %vm800, %v816, %v817
      %v819 = vrot.slane %v596, 2
      %v820 = vsel %vm800, %v817, %v819
      %v821 = vrot.slane %v597, 2
      %v822 = vrot.slane %v598, 2
      %v823 = vsel %vm800, %v821, %v822
      %v824 = vrot.slane %v599, 2
      %v825 = vsel %vm800, %v822, %v824
      %v826 = vrot.slane %v600, 2
      %v827 = vrot.slane %v601, 2
      %v828 = vsel %vm800, %v826, %v827
      %v829 = vrot.slane %v602, 2
      %v830 = vsel %vm800, %v827, %v829
      %v831 = vrot.slane %v603, 2
      %v832 = vrot.slane %v604, 2
      %v833 = vsel %vm800, %v831, %v832
      %v834 = vrot.slane %v605, 2
      %v835 = vsel %vm800, %v832, %v834
      %v836 = vrot.slane %v606, 2
      %v837 = vrot.slane %v607, 2
      %v838 = vsel %vm800, %v836, %v837
      %v839 = vrot.slane %v608, 2
      %v840 = vsel %vm800, %v837, %v839
      %v841 = vrot.slane %v609, 2
      %v842 = vrot.slane %v610, 2
      %v843 = vsel %vm800, %v841, %v842
      %v844 = vrot.slane %v611, 2
      %v845 = vsel %vm800, %v842, %v844
      %v846 = vrot.slane %v612, 2
      %v847 = vrot.slane %v613, 2
      %v848 = vsel %vm800, %v846, %v847
      %v849 = vrot.slane %v614, 2
      %v850 = vsel %vm800, %v847, %v849
      %v851 = vrot.slane %v615, 2
      %v852 = vrot.slane %v616, 2
      %v853 = vsel %vm800, %v851, %v852
      %v854 = vrot.slane %v617, 2
      %v855 = vsel %vm800, %v852, %v854
      %v856 = vrot.slane %v618, 2
      %v857 = vrot.slane %v619, 2
      %v858 = vsel %vm800, %v856, %v857
      %v859 = vrot.slane %v620, 2
      %v860 = vsel %vm800, %v857, %v859
      %v861 = vrot.slane %v621, 2
      %v862 = vrot.slane %v622, 2
      %v863 = vsel %vm800, %v861, %v862
      %v864 = vrot.slane %v623, 2
      %v865 = vsel %vm800, %v862, %v864
      %v866 = vrot.slane %v624, 2
      %v867 = vrot.slane %v625, 2
      %v868 = vsel %vm800, %v866, %v867
      %v869 = vrot.slane %v626, 2
      %v870 = vsel %vm800, %v867, %v869
      %v871 = vrot.slane %v627, 2
      %v872 = vrot.slane %v628, 2
      %v873 = vsel %vm800, %v871, %v872
      %v874 = vrot.slane %v629, 2
      %v875 = vsel %vm800, %v872, %v874
      %v876 = vrot.slane %v630, 2
      %v877 = vrot.slane %v631, 2
      %v878 = vsel %vm800, %v876, %v877
      %v879 = vrot.slane %v632, 2
      %v880 = vsel %vm800, %v877, %v879
      %v916 = vrot.slane %v633, 1
      %v917 = vrot.slane %v634, 1
      %v918 = vsel %vm687, %v916, %v917
      %v919 = vrot.slane %v635, 1
      %v920 = vsel %vm687, %v917, %v919
      %v923 = vrot.slane %v633, 2
      %v924 = vrot.slane %v634, 2
      %v925 = vsel %vm800, %v923, %v924
      %v926 = vrot.slane %v635, 2
      %v927 = vsel %vm800, %v924, %v926
      %v933 = vrot.slane %v636, 1
      %v934 = vrot.slane %v637, 1
      %v935 = vsel %vm687, %v933, %v934
      %v936 = vrot.slane %v638, 1
      %v937 = vsel %vm687, %v934, %v936
      %v940 = vrot.slane %v636, 2
      %v941 = vrot.slane %v637, 2
      %v942 = vsel %vm800, %v940, %v941
      %v943 = vrot.slane %v638, 2
      %v944 = vsel %vm800, %v941, %v943
      %v947 = vpack.c.bf16 %v586, %v585
      %v948 = vpack.c.bf16 %v692, %v690
      %v949 = vpack.c.bf16 %v805, %v803
      %v950 = vpack.c.bf16 %v589, %v588
      %v951 = vpack.c.bf16 %v697, %v695
      %v952 = vpack.c.bf16 %v810, %v808
      %v953 = vpack.c.bf16 %v592, %v591
      %v954 = vpack.c.bf16 %v702, %v700
      %v955 = vpack.c.bf16 %v815, %v813
      %v956 = vpack.c.bf16 %v595, %v594
      %v957 = vpack.c.bf16 %v707, %v705
      %v958 = vpack.c.bf16 %v820, %v818
      %v959 = vpack.c.bf16 %v598, %v597
      %v960 = vpack.c.bf16 %v712, %v710
      %v961 = vpack.c.bf16 %v825, %v823
      %v962 = vpack.c.bf16 %v601, %v600
      %v963 = vpack.c.bf16 %v717, %v715
      %v964 = vpack.c.bf16 %v830, %v828
      %v965 = vpack.c.bf16 %v604, %v603
      %v966 = vpack.c.bf16 %v722, %v720
      %v967 = vpack.c.bf16 %v835, %v833
      %v968 = vpack.c.bf16 %v607, %v606
      %v969 = vpack.c.bf16 %v727, %v725
      %v970 = vpack.c.bf16 %v840, %v838
      %v971 = vpack.c.bf16 %v610, %v609
      %v972 = vpack.c.bf16 %v732, %v730
      %v973 = vpack.c.bf16 %v845, %v843
      %v974 = vpack.c.bf16 %v613, %v612
      %v975 = vpack.c.bf16 %v737, %v735
      %v976 = vpack.c.bf16 %v850, %v848
      %v977 = vpack.c.bf16 %v616, %v615
      %v978 = vpack.c.bf16 %v742, %v740
      %v979 = vpack.c.bf16 %v855, %v853
      %v980 = vpack.c.bf16 %v619, %v618
      %v981 = vpack.c.bf16 %v747, %v745
      %v982 = vpack.c.bf16 %v860, %v858
      %v983 = vpack.c.bf16 %v622, %v621
      %v984 = vpack.c.bf16 %v752, %v750
      %v985 = vpack.c.bf16 %v865, %v863
      %v986 = vpack.c.bf16 %v625, %v624
      %v987 = vpack.c.bf16 %v757, %v755
      %v988 = vpack.c.bf16 %v870, %v868
      %v989 = vpack.c.bf16 %v628, %v627
      %v990 = vpack.c.bf16 %v762, %v760
      %v991 = vpack.c.bf16 %v875, %v873
      %v992 = vpack.c.bf16 %v631, %v630
      %v993 = vpack.c.bf16 %v767, %v765
      %v994 = vpack.c.bf16 %v880, %v878
      %v995 = vpack.c.bf16 %v634, %v633
      %v996 = vpack.c.bf16 %v920, %v918
      %v997 = vpack.c.bf16 %v927, %v925
      %v998 = vpack.c.bf16 %v637, %v636
      %v999 = vpack.c.bf16 %v937, %v935
      %v1000 = vpack.c.bf16 %v944, %v942
      %v1001 = vld [vmem:[%s2] sm:$0xf]
      %v1002 = vld [vmem:[%s2 + $0x4] sm:$0xf]
      %v1003 = vld [vmem:[%s2 + $0x8] sm:$0xf]
      %v1004 = vld [vmem:[%s2 + $0xc] sm:$0xf]
      %v1005 = vld [vmem:[%s2 + $0x10] sm:$0xf]
      %v1006 = vld [vmem:[%s2 + $0x14] sm:$0xf]
      %v1007 = vld [vmem:[%s2 + $0x18] sm:$0xf]
      %v1008 = vld [vmem:[%s2 + $0x1c] sm:$0xf]
      %v1009 = vld [vmem:[%s2 + $0x20] sm:$0xf]
      %v1010 = vld [vmem:[%s2 + $0x24] sm:$0xf]
      %v1011 = vld [vmem:[%s2 + $0x28] sm:$0xf]
      %v1012 = vld [vmem:[%s2 + $0x2c] sm:$0xf]
      %v1013 = vld [vmem:[%s2 + $0x30] sm:$0xf]
      %v1014 = vld [vmem:[%s2 + $0x34] sm:$0xf]
      %v1015 = vld [vmem:[%s2 + $0x38] sm:$0xf]
      %v1016 = vld [vmem:[%s2 + $0x3c] sm:$0xf]
      %v1017 = vld [vmem:[%s2 + $0x40] sm:$0xf]
      %v1018 = vld [vmem:[%s2 + $0x44] sm:$0xf]
      %v1019 = vld [vmem:[%s2 + $0x48] sm:$0xf]
      %v1020 = vld [vmem:[%s2 + $0x4c] sm:$0xf]
      %v1021 = vld [vmem:[%s2 + $0x50] sm:$0xf]
      %v1022 = vld [vmem:[%s2 + $0x54] sm:$0xf]
      %v1023 = vld [vmem:[%s2 + $0x58] sm:$0xf]
      %v1024 = vld [vmem:[%s2 + $0x5c] sm:$0xf]
      %v1025 = vld [vmem:[%s2 + $0x60] sm:$0xf]
      %v1026 = vld [vmem:[%s2 + $0x64] sm:$0xf]
      %v1027 = vld [vmem:[%s2 + $0x68] sm:$0xf]
      %v1028 = vld [vmem:[%s2 + $0x6c] sm:$0xf]
      %v1029 = vld [vmem:[%s2 + $0x70] sm:$0xf]
      %v1030 = vld [vmem:[%s2 + $0x74] sm:$0xf]
      %v1031 = vld [vmem:[%s2 + $0x78] sm:$0xf]
      %v1032 = vld [vmem:[%s2 + $0x7c] sm:$0xf]
      %v1033 = vld [vmem:[%s2 + $0x80] sm:$0xf]
      %v1034 = vld [vmem:[%s2 + $0x84] sm:$0xf]
      %v1035 = vld [vmem:[%s2 + $0x88] sm:$0xf]
      %v1036 = vld [vmem:[%s2 + $0x8c] sm:$0xf]
      %v1037 = vld [vmem:[%s2 + $0x90] sm:$0xf]
      %v1038 = vld [vmem:[%s2 + $0x94] sm:$0xf]
      %v1039 = vld [vmem:[%s2 + $0x98] sm:$0xf]
      %v1040 = vld [vmem:[%s2 + $0x9c] sm:$0xf]
      %v1041 = vld [vmem:[%s2 + $0xa0] sm:$0xf]
      %v1042 = vld [vmem:[%s2 + $0xa4] sm:$0xf]
      %v1043 = vld [vmem:[%s2 + $0xa8] sm:$0xf]
      %v1044 = vld [vmem:[%s2 + $0xac] sm:$0xf]
      %v1045 = vld [vmem:[%s2 + $0xb0] sm:$0xf]
      %v1046 = vld [vmem:[%s2 + $0xb4] sm:$0xf]
      %v1047 = vld [vmem:[%s2 + $0xb8] sm:$0xf]
      %v1048 = vld [vmem:[%s2 + $0xbc] sm:$0xf]
      %v1049 = vld [vmem:[%s2 + $0xc0] sm:$0xf]
      %v1050 = vld [vmem:[%s2 + $0xc4] sm:$0xf]
      %v1051 = vld [vmem:[%s2 + $0xc8] sm:$0xf]
      %v1052 = vld [vmem:[%s2 + $0xcc] sm:$0xf]
      %v1053 = vld [vmem:[%s2 + $0xd0] sm:$0xf]
      %v1054 = vld [vmem:[%s2 + $0xd4] sm:$0xf]
      %v1055 = vld [vmem:[%s2 + $0xd8] sm:$0xf]
      %v1056 = vld [vmem:[%s2 + $0xdc] sm:$0xf]
      %v1057 = vld [vmem:[%s2 + $0xe0] sm:$0xf]
      %v1058 = vld [vmem:[%s2 + $0xe4] sm:$0xf]
      %v1059 = vld [vmem:[%s2 + $0xe8] sm:$0xf]
      %v1060 = vld [vmem:[%s2 + $0xec] sm:$0xf]
      %v1061 = vld [vmem:[%s2 + $0xf0] sm:$0xf]
      %v1062 = vld [vmem:[%s2 + $0xf4] sm:$0xf]
      %v1063 = vld [vmem:[%s2 + $0xf8] sm:$0xf]
      %v1064 = vld [vmem:[%s2 + $0xfc] sm:$0xf]
      %v1065 = vld [vmem:[%s2 + $0x100] sm:$0xf]
      %v1066 = vld [vmem:[%s2 + $0x104] sm:$0xf]
      %v1067 = vld [vmem:[%s2 + $0x108] sm:$0xf]
      %v1068 = vld [vmem:[%s2 + $0x10c] sm:$0xf]
      %v1069 = vld [vmem:[%s2 + $0x110] sm:$0xf]
      %v1070 = vld [vmem:[%s2 + $0x114] sm:$0xf]
      %v1071 = vld [vmem:[%s2 + $0x118] sm:$0xf]
      %v1072 = vld [vmem:[%s2 + $0x11c] sm:$0xf]
      %v1073 = vld [vmem:[%s2 + $0x120] sm:$0xf]
      %v1074 = vld [vmem:[%s2 + $0x124] sm:$0xf]
      %v1075 = vld [vmem:[%s2 + $0x128] sm:$0xf]
      %v1076 = vld [vmem:[%s2 + $0x12c] sm:$0xf]
      %v1077 = vld [vmem:[%s2 + $0x130] sm:$0xf]
      %v1078 = vld [vmem:[%s2 + $0x134] sm:$0xf]
      %v1079 = vld [vmem:[%s2 + $0x138] sm:$0xf]
      %v1080 = vld [vmem:[%s2 + $0x13c] sm:$0xf]
      %v1081 = vld [vmem:[%s2 + $0x140] sm:$0xf]
      %v1082 = vld [vmem:[%s2 + $0x144] sm:$0xf]
      %v1083 = vld [vmem:[%s2 + $0x148] sm:$0xf]
      %v1084 = vld [vmem:[%s2 + $0x14c] sm:$0xf]
      %v1085 = vld [vmem:[%s2 + $0x150] sm:$0xf]
      %v1086 = vld [vmem:[%s2 + $0x154] sm:$0xf]
      %v1087 = vld [vmem:[%s2 + $0x158] sm:$0xf]
      %v1088 = vld [vmem:[%s2 + $0x15c] sm:$0xf]
      %v1089 = vld [vmem:[%s2 + $0x160] sm:$0xf]
      %v1090 = vld [vmem:[%s2 + $0x164] sm:$0xf]
      %v1091 = vld [vmem:[%s2 + $0x168] sm:$0xf]
      %v1092 = vld [vmem:[%s2 + $0x16c] sm:$0xf]
      %v1093 = vld [vmem:[%s2 + $0x170] sm:$0xf]
      %v1094 = vld [vmem:[%s2 + $0x174] sm:$0xf]
      %v1095 = vld [vmem:[%s2 + $0x178] sm:$0xf]
      %v1096 = vld [vmem:[%s2 + $0x17c] sm:$0xf]
      %v1097 = vld [vmem:[%s2 + $0x180] sm:$0xf]
      %v1098 = vld [vmem:[%s2 + $0x184] sm:$0xf]
      %v1099 = vld [vmem:[%s2 + $0x188] sm:$0xf]
      %v1100 = vld [vmem:[%s2 + $0x18c] sm:$0xf]
      %v1101 = vld [vmem:[%s2 + $0x190] sm:$0xf]
      %v1102 = vld [vmem:[%s2 + $0x194] sm:$0xf]
      %v1103 = vld [vmem:[%s2 + $0x198] sm:$0xf]
      %v1104 = vld [vmem:[%s2 + $0x19c] sm:$0xf]
      %v1105 = vld [vmem:[%s2 + $0x1a0] sm:$0xf]
      %v1106 = vld [vmem:[%s2 + $0x1a4] sm:$0xf]
      %v1107 = vld [vmem:[%s2 + $0x1a8] sm:$0xf]
      %v1108 = vld [vmem:[%s2 + $0x1ac] sm:$0xf]
      %v1109 = vld [vmem:[%s2 + $0x1b0] sm:$0xf]
      %v1110 = vld [vmem:[%s2 + $0x1b4] sm:$0xf]
      %v1111 = vld [vmem:[%s2 + $0x1b8] sm:$0xf]
      %v1112 = vld [vmem:[%s2 + $0x1bc] sm:$0xf]
      %v1113 = vld [vmem:[%s2 + $0x1c0] sm:$0xf]
      %v1114 = vld [vmem:[%s2 + $0x1c4] sm:$0xf]
      %v1115 = vld [vmem:[%s2 + $0x1c8] sm:$0xf]
      %v1116 = vld [vmem:[%s2 + $0x1cc] sm:$0xf]
      %v1117 = vld [vmem:[%s2 + $0x1d0] sm:$0xf]
      %v1118 = vld [vmem:[%s2 + $0x1d4] sm:$0xf]
      %v1119 = vld [vmem:[%s2 + $0x1d8] sm:$0xf]
      %v1120 = vld [vmem:[%s2 + $0x1dc] sm:$0xf]
      %v1121 = vld [vmem:[%s2 + $0x1e0] sm:$0xf]
      %v1122 = vld [vmem:[%s2 + $0x1e4] sm:$0xf]
      %v1123 = vld [vmem:[%s2 + $0x1e8] sm:$0xf]
      %v1124 = vld [vmem:[%s2 + $0x1ec] sm:$0xf]
      %v1125 = vld [vmem:[%s2 + $0x1f0] sm:$0xf]
      %v1126 = vld [vmem:[%s2 + $0x1f4] sm:$0xf]
      %v1127 = vld [vmem:[%s2 + $0x1f8] sm:$0xf]
      %v1128 = vld [vmem:[%s2 + $0x1fc] sm:$0xf]
      %v1129 = vld [vmem:[%s2 + $0x200] sm:$0xf]
      %v1130 = vld [vmem:[%s2 + $0x204] sm:$0xf]
      %v1131 = vld [vmem:[%s2 + $0x208] sm:$0xf]
      %v1132 = vld [vmem:[%s2 + $0x20c] sm:$0xf]
      %v1133 = vld [vmem:[%s2 + $0x210] sm:$0xf]
      %v1134 = vld [vmem:[%s2 + $0x214] sm:$0xf]
      %v1135 = vld [vmem:[%s2 + $0x218] sm:$0xf]
      %v1136 = vld [vmem:[%s2 + $0x21c] sm:$0xf]
      %v1137 = vld [vmem:[%s2 + $0x220] sm:$0xf]
      %v1138 = vld [vmem:[%s2 + $0x224] sm:$0xf]
      %v1139 = vld [vmem:[%s2 + $0x228] sm:$0xf]
      %v1140 = vld [vmem:[%s2 + $0x22c] sm:$0xf]
      %v1141 = vld [vmem:[%s2 + $0x230] sm:$0xf]
      %v1142 = vld [vmem:[%s2 + $0x234] sm:$0xf]
      %v1143 = vld [vmem:[%s2 + $0x238] sm:$0xf]
      %v1144 = vld [vmem:[%s2 + $0x23c] sm:$0xf]
      %v1145 = vld [vmem:[%s3] sm:$0x1]
      %v1147 = vperm.slane %v1145, 0
      %v1293 = vunpack.c.l.b16 %v1001
      %v1294 = vunpack.c.l.b16 %v1002
      %v1295 = vunpack.c.l.b16 %v1003
      %v1296 = vunpack.c.l.b16 %v1004
      %v1297 = vunpack.c.l.b16 %v1005
      %v1298 = vunpack.c.l.b16 %v1006
      %v1299 = vunpack.c.l.b16 %v1007
      %v1300 = vunpack.c.l.b16 %v1008
      %v1301 = vunpack.c.l.b16 %v1009
      %v1302 = vunpack.c.l.b16 %v1010
      %v1303 = vunpack.c.l.b16 %v1011
      %v1304 = vunpack.c.l.b16 %v1012
      %v1305 = vunpack.c.l.b16 %v1013
      %v1306 = vunpack.c.l.b16 %v1014
      %v1307 = vunpack.c.l.b16 %v1015
      %v1308 = vunpack.c.l.b16 %v1016
      %v1309 = vunpack.c.l.b16 %v1017
      %v1310 = vunpack.c.l.b16 %v1018
      %v1311 = vunpack.c.l.b16 %v1019
      %v1312 = vunpack.c.l.b16 %v1020
      %v1313 = vunpack.c.l.b16 %v1021
      %v1314 = vunpack.c.l.b16 %v1022
      %v1315 = vunpack.c.l.b16 %v1023
      %v1316 = vunpack.c.l.b16 %v1024
      %v1317 = vunpack.c.l.b16 %v1025
      %v1318 = vunpack.c.l.b16 %v1026
      %v1319 = vunpack.c.l.b16 %v1027
      %v1320 = vunpack.c.l.b16 %v1028
      %v1321 = vunpack.c.l.b16 %v1029
      %v1322 = vunpack.c.l.b16 %v1030
      %v1323 = vunpack.c.l.b16 %v1031
      %v1324 = vunpack.c.l.b16 %v1032
      %v1325 = vunpack.c.l.b16 %v1033
      %v1326 = vunpack.c.l.b16 %v1034
      %v1327 = vunpack.c.l.b16 %v1035
      %v1328 = vunpack.c.l.b16 %v1036
      %v1329 = vunpack.c.l.b16 %v1037
      %v1330 = vunpack.c.l.b16 %v1038
      %v1331 = vunpack.c.l.b16 %v1039
      %v1332 = vunpack.c.l.b16 %v1040
      %v1333 = vunpack.c.l.b16 %v1041
      %v1334 = vunpack.c.l.b16 %v1042
      %v1335 = vunpack.c.l.b16 %v1043
      %v1336 = vunpack.c.l.b16 %v1044
      %v1337 = vunpack.c.l.b16 %v1045
      %v1338 = vunpack.c.l.b16 %v1046
      %v1339 = vunpack.c.l.b16 %v1047
      %v1340 = vunpack.c.l.b16 %v1048
      %v1341 = vunpack.c.l.b16 %v1049
      %v1342 = vunpack.c.l.b16 %v1050
      %v1343 = vunpack.c.l.b16 %v1051
      %v1344 = vunpack.c.l.b16 %v1052
      %v1345 = vunpack.c.l.b16 %v1053
      %v1346 = vunpack.c.l.b16 %v1054
      %v1347 = vunpack.c.l.b16 %v1055
      %v1348 = vunpack.c.l.b16 %v1056
      %v1349 = vunpack.c.l.b16 %v1057
      %v1350 = vunpack.c.l.b16 %v1058
      %v1351 = vunpack.c.l.b16 %v1059
      %v1352 = vunpack.c.l.b16 %v1060
      %v1353 = vunpack.c.l.b16 %v1061
      %v1354 = vunpack.c.l.b16 %v1062
      %v1355 = vunpack.c.l.b16 %v1063
      %v1356 = vunpack.c.l.b16 %v1064
      %v1357 = vunpack.c.l.b16 %v1065
      %v1358 = vunpack.c.l.b16 %v1066
      %v1359 = vunpack.c.l.b16 %v1067
      %v1360 = vunpack.c.l.b16 %v1068
      %v1361 = vunpack.c.l.b16 %v1069
      %v1362 = vunpack.c.l.b16 %v1070
      %v1363 = vunpack.c.l.b16 %v1071
      %v1364 = vunpack.c.l.b16 %v1072
      %v1365 = vunpack.c.l.b16 %v1073
      %v1366 = vunpack.c.l.b16 %v1074
      %v1367 = vunpack.c.l.b16 %v1075
      %v1368 = vunpack.c.l.b16 %v1076
      %v1369 = vunpack.c.l.b16 %v1077
      %v1370 = vunpack.c.l.b16 %v1078
      %v1371 = vunpack.c.l.b16 %v1079
      %v1372 = vunpack.c.l.b16 %v1080
      %v1373 = vunpack.c.l.b16 %v1081
      %v1374 = vunpack.c.l.b16 %v1082
      %v1375 = vunpack.c.l.b16 %v1083
      %v1376 = vunpack.c.l.b16 %v1084
      %v1377 = vunpack.c.l.b16 %v1085
      %v1378 = vunpack.c.l.b16 %v1086
      %v1379 = vunpack.c.l.b16 %v1087
      %v1380 = vunpack.c.l.b16 %v1088
      %v1381 = vunpack.c.l.b16 %v1089
      %v1382 = vunpack.c.l.b16 %v1090
      %v1383 = vunpack.c.l.b16 %v1091
      %v1384 = vunpack.c.l.b16 %v1092
      %v1385 = vunpack.c.l.b16 %v1093
      %v1386 = vunpack.c.l.b16 %v1094
      %v1387 = vunpack.c.l.b16 %v1095
      %v1388 = vunpack.c.l.b16 %v1096
      %v1389 = vunpack.c.l.b16 %v1097
      %v1390 = vunpack.c.l.b16 %v1098
      %v1391 = vunpack.c.l.b16 %v1099
      %v1392 = vunpack.c.l.b16 %v1100
      %v1393 = vunpack.c.l.b16 %v1101
      %v1394 = vunpack.c.l.b16 %v1102
      %v1395 = vunpack.c.l.b16 %v1103
      %v1396 = vunpack.c.l.b16 %v1104
      %v1397 = vunpack.c.l.b16 %v1105
      %v1398 = vunpack.c.l.b16 %v1106
      %v1399 = vunpack.c.l.b16 %v1107
      %v1400 = vunpack.c.l.b16 %v1108
      %v1401 = vunpack.c.l.b16 %v1109
      %v1402 = vunpack.c.l.b16 %v1110
      %v1403 = vunpack.c.l.b16 %v1111
      %v1404 = vunpack.c.l.b16 %v1112
      %v1405 = vunpack.c.l.b16 %v1113
      %v1406 = vunpack.c.l.b16 %v1114
      %v1407 = vunpack.c.l.b16 %v1115
      %v1408 = vunpack.c.l.b16 %v1116
      %v1409 = vunpack.c.l.b16 %v1117
      %v1410 = vunpack.c.l.b16 %v1118
      %v1411 = vunpack.c.l.b16 %v1119
      %v1412 = vunpack.c.l.b16 %v1120
      %v1413 = vunpack.c.l.b16 %v1121
      %v1414 = vunpack.c.l.b16 %v1122
      %v1415 = vunpack.c.l.b16 %v1123
      %v1416 = vunpack.c.l.b16 %v1124
      %v1417 = vunpack.c.l.b16 %v1125
      %v1418 = vunpack.c.l.b16 %v1126
      %v1419 = vunpack.c.l.b16 %v1127
      %v1420 = vunpack.c.l.b16 %v1128
      %v1421 = vunpack.c.l.b16 %v1129
      %v1422 = vunpack.c.l.b16 %v1130
      %v1423 = vunpack.c.l.b16 %v1131
      %v1424 = vunpack.c.l.b16 %v1132
      %v1425 = vunpack.c.l.b16 %v1133
      %v1426 = vunpack.c.l.b16 %v1134
      %v1427 = vunpack.c.l.b16 %v1135
      %v1428 = vunpack.c.l.b16 %v1136
      %v1429 = vunpack.c.l.b16 %v1137
      %v1430 = vunpack.c.l.b16 %v1138
      %v1431 = vunpack.c.l.b16 %v1139
      %v1432 = vunpack.c.l.b16 %v1140
      %v1433 = vunpack.c.l.b16 %v1141
      %v1434 = vunpack.c.l.b16 %v1142
      %v1435 = vunpack.c.l.b16 %v1143
      %v1436 = vunpack.c.l.b16 %v1144
      %v1437 = vpack.c.b16 %v1294, %v1293
      %v1438 = vpack.c.b16 %v1296, %v1295
      %v1439 = vpack.c.b16 %v1298, %v1297
      %v1440 = vpack.c.b16 %v1300, %v1299
      %v1441 = vpack.c.b16 %v1302, %v1301
      %v1442 = vpack.c.b16 %v1304, %v1303
      %v1443 = vpack.c.b16 %v1306, %v1305
      %v1444 = vpack.c.b16 %v1308, %v1307
      %v1445 = vpack.c.b16 %v1310, %v1309
      %v1446 = vpack.c.b16 %v1312, %v1311
      %v1447 = vpack.c.b16 %v1314, %v1313
      %v1448 = vpack.c.b16 %v1316, %v1315
      %v1449 = vpack.c.b16 %v1318, %v1317
      %v1450 = vpack.c.b16 %v1320, %v1319
      %v1451 = vpack.c.b16 %v1322, %v1321
      %v1452 = vpack.c.b16 %v1324, %v1323
      %v1453 = vpack.c.b16 %v1326, %v1325
      %v1454 = vpack.c.b16 %v1328, %v1327
      %v1455 = vpack.c.b16 %v1330, %v1329
      %v1456 = vpack.c.b16 %v1332, %v1331
      %v1457 = vpack.c.b16 %v1334, %v1333
      %v1458 = vpack.c.b16 %v1336, %v1335
      %v1459 = vpack.c.b16 %v1338, %v1337
      %v1460 = vpack.c.b16 %v1340, %v1339
      %v1461 = vpack.c.b16 %v1342, %v1341
      %v1462 = vpack.c.b16 %v1344, %v1343
      %v1463 = vpack.c.b16 %v1346, %v1345
      %v1464 = vpack.c.b16 %v1348, %v1347
      %v1465 = vpack.c.b16 %v1350, %v1349
      %v1466 = vpack.c.b16 %v1352, %v1351
      %v1467 = vpack.c.b16 %v1354, %v1353
      %v1468 = vpack.c.b16 %v1356, %v1355
      %v1469 = vpack.c.b16 %v1358, %v1357
      %v1470 = vpack.c.b16 %v1360, %v1359
      %v1471 = vpack.c.b16 %v1362, %v1361
      %v1472 = vpack.c.b16 %v1364, %v1363
      %v1473 = vpack.c.b16 %v1366, %v1365
      %v1474 = vpack.c.b16 %v1368, %v1367
      %v1475 = vpack.c.b16 %v1370, %v1369
      %v1476 = vpack.c.b16 %v1372, %v1371
      %v1477 = vpack.c.b16 %v1374, %v1373
      %v1478 = vpack.c.b16 %v1376, %v1375
      %v1479 = vpack.c.b16 %v1378, %v1377
      %v1480 = vpack.c.b16 %v1380, %v1379
      %v1481 = vpack.c.b16 %v1382, %v1381
      %v1482 = vpack.c.b16 %v1384, %v1383
      %v1483 = vpack.c.b16 %v1386, %v1385
      %v1484 = vpack.c.b16 %v1388, %v1387
      %v1485 = vpack.c.b16 %v1390, %v1389
      %v1486 = vpack.c.b16 %v1392, %v1391
      %v1487 = vpack.c.b16 %v1394, %v1393
      %v1488 = vpack.c.b16 %v1396, %v1395
      %v1489 = vpack.c.b16 %v1398, %v1397
      %v1490 = vpack.c.b16 %v1400, %v1399
      %v1491 = vpack.c.b16 %v1402, %v1401
      %v1492 = vpack.c.b16 %v1404, %v1403
      %v1493 = vpack.c.b16 %v1406, %v1405
      %v1494 = vpack.c.b16 %v1408, %v1407
      %v1495 = vpack.c.b16 %v1410, %v1409
      %v1496 = vpack.c.b16 %v1412, %v1411
      %v1497 = vpack.c.b16 %v1414, %v1413
      %v1498 = vpack.c.b16 %v1416, %v1415
      %v1499 = vpack.c.b16 %v1418, %v1417
      %v1500 = vpack.c.b16 %v1420, %v1419
      %v1501 = vpack.c.b16 %v1422, %v1421
      %v1502 = vpack.c.b16 %v1424, %v1423
      %v1503 = vpack.c.b16 %v1426, %v1425
      %v1504 = vpack.c.b16 %v1428, %v1427
      %v1505 = vpack.c.b16 %v1430, %v1429
      %v1506 = vpack.c.b16 %v1432, %v1431
      %v1507 = vpack.c.b16 %v1434, %v1433
      %v1508 = vpack.c.b16 %v1436, %v1435
      %1581 = vmatpush.bf16.msra.mxu0 %v1444
      %1582 = vmatpush.bf16.msra.mxu0 %v1443
      %1583 = vmatpush.bf16.msra.mxu0 %v1442
      %1584 = vmatpush.bf16.msra.mxu0 %v1441
      %1585 = vmatpush.bf16.msra.mxu0 %v1440
      %1586 = vmatpush.bf16.msra.mxu0 %v1439
      %1587 = vmatpush.bf16.msra.mxu0 %v1438
      %1588 = vmatpush.bf16.msra.mxu0 %v1437
      %1589 = vmatmul.bf16.gmra.mxu0 %v947
      %v1590 = vpop.f32.mrf.mxu0
      %v1591 = vadd.f32 %v1147, %v1590
      %v1592 = vpop.f32.mrf.mxu0
      %v1593 = vadd.f32 %v1147, %v1592
      %1594 = vmatmul.bf16.gmra.mxu0 %v950
      %v1595 = vpop.f32.mrf.mxu0
      %v1596 = vadd.f32 %v1147, %v1595
      %v1597 = vpop.f32.mrf.mxu0
      %v1598 = vadd.f32 %v1147, %v1597
      %1599 = vmatmul.bf16.gmra.mxu0 %v953
      %v1600 = vpop.f32.mrf.mxu0
      %v1601 = vadd.f32 %v1147, %v1600
      %v1602 = vpop.f32.mrf.mxu0
      %v1603 = vadd.f32 %v1147, %v1602
      %1604 = vmatmul.bf16.gmra.mxu0 %v956
      %v1605 = vpop.f32.mrf.mxu0
      %v1606 = vadd.f32 %v1147, %v1605
      %v1607 = vpop.f32.mrf.mxu0
      %v1608 = vadd.f32 %v1147, %v1607
      %1609 = vmatmul.bf16.gmra.mxu0 %v959
      %v1610 = vpop.f32.mrf.mxu0
      %v1611 = vadd.f32 %v1147, %v1610
      %v1612 = vpop.f32.mrf.mxu0
      %v1613 = vadd.f32 %v1147, %v1612
      %1614 = vmatmul.bf16.gmra.mxu0 %v962
      %v1615 = vpop.f32.mrf.mxu0
      %v1616 = vadd.f32 %v1147, %v1615
      %v1617 = vpop.f32.mrf.mxu0
      %v1618 = vadd.f32 %v1147, %v1617
      %1619 = vmatmul.bf16.gmra.mxu0 %v965
      %v1620 = vpop.f32.mrf.mxu0
      %v1621 = vadd.f32 %v1147, %v1620
      %v1622 = vpop.f32.mrf.mxu0
      %v1623 = vadd.f32 %v1147, %v1622
      %1624 = vmatmul.bf16.gmra.mxu0 %v968
      %v1625 = vpop.f32.mrf.mxu0
      %v1626 = vadd.f32 %v1147, %v1625
      %v1627 = vpop.f32.mrf.mxu0
      %v1628 = vadd.f32 %v1147, %v1627
      %1629 = vmatmul.bf16.gmra.mxu0 %v971
      %v1630 = vpop.f32.mrf.mxu0
      %v1631 = vadd.f32 %v1147, %v1630
      %v1632 = vpop.f32.mrf.mxu0
      %v1633 = vadd.f32 %v1147, %v1632
      %1634 = vmatmul.bf16.gmra.mxu0 %v974
      %v1635 = vpop.f32.mrf.mxu0
      %v1636 = vadd.f32 %v1147, %v1635
      %v1637 = vpop.f32.mrf.mxu0
      %v1638 = vadd.f32 %v1147, %v1637
      %1639 = vmatmul.bf16.gmra.mxu0 %v977
      %v1640 = vpop.f32.mrf.mxu0
      %v1641 = vadd.f32 %v1147, %v1640
      %v1642 = vpop.f32.mrf.mxu0
      %v1643 = vadd.f32 %v1147, %v1642
      %1644 = vmatmul.bf16.gmra.mxu0 %v980
      %v1645 = vpop.f32.mrf.mxu0
      %v1646 = vadd.f32 %v1147, %v1645
      %v1647 = vpop.f32.mrf.mxu0
      %v1648 = vadd.f32 %v1147, %v1647
      %1649 = vmatmul.bf16.gmra.mxu0 %v983
      %v1650 = vpop.f32.mrf.mxu0
      %v1651 = vadd.f32 %v1147, %v1650
      %v1652 = vpop.f32.mrf.mxu0
      %v1653 = vadd.f32 %v1147, %v1652
      %1654 = vmatmul.bf16.gmra.mxu0 %v986
      %v1655 = vpop.f32.mrf.mxu0
      %v1656 = vadd.f32 %v1147, %v1655
      %v1657 = vpop.f32.mrf.mxu0
      %v1658 = vadd.f32 %v1147, %v1657
      %1659 = vmatmul.bf16.gmra.mxu0 %v989
      %v1660 = vpop.f32.mrf.mxu0
      %v1661 = vadd.f32 %v1147, %v1660
      %v1662 = vpop.f32.mrf.mxu0
      %v1663 = vadd.f32 %v1147, %v1662
      %1664 = vmatmul.bf16.gmra.mxu0 %v992
      %v1665 = vpop.f32.mrf.mxu0
      %v1666 = vadd.f32 %v1147, %v1665
      %v1667 = vpop.f32.mrf.mxu0
      %v1668 = vadd.f32 %v1147, %v1667
      %1669 = vdwg.mxu0
      %1670 = vmatpush.bf16.msra.mxu0 %v1452
      %1671 = vmatpush.bf16.msra.mxu0 %v1451
      %1672 = vmatpush.bf16.msra.mxu0 %v1450
      %1673 = vmatpush.bf16.msra.mxu0 %v1449
      %1674 = vmatpush.bf16.msra.mxu0 %v1448
      %1675 = vmatpush.bf16.msra.mxu0 %v1447
      %1676 = vmatpush.bf16.msra.mxu0 %v1446
      %1677 = vmatpush.bf16.msra.mxu0 %v1445
      %1678 = vmatmul.bf16.gmra.mxu0 %v948
      %v1679 = vpop.f32.mrf.mxu0
      %v1680 = vadd.f32 %v1591, %v1679
      %v1681 = vpop.f32.mrf.mxu0
      %v1682 = vadd.f32 %v1593, %v1681
      %1683 = vmatmul.bf16.gmra.mxu0 %v951
      %v1684 = vpop.f32.mrf.mxu0
      %v1685 = vadd.f32 %v1596, %v1684
      %v1686 = vpop.f32.mrf.mxu0
      %v1687 = vadd.f32 %v1598, %v1686
      %1688 = vmatmul.bf16.gmra.mxu0 %v954
      %v1689 = vpop.f32.mrf.mxu0
      %v1690 = vadd.f32 %v1601, %v1689
      %v1691 = vpop.f32.mrf.mxu0
      %v1692 = vadd.f32 %v1603, %v1691
      %1693 = vmatmul.bf16.gmra.mxu0 %v957
      %v1694 = vpop.f32.mrf.mxu0
      %v1695 = vadd.f32 %v1606, %v1694
      %v1696 = vpop.f32.mrf.mxu0
      %v1697 = vadd.f32 %v1608, %v1696
      %1698 = vmatmul.bf16.gmra.mxu0 %v960
      %v1699 = vpop.f32.mrf.mxu0
      %v1700 = vadd.f32 %v1611, %v1699
      %v1701 = vpop.f32.mrf.mxu0
      %v1702 = vadd.f32 %v1613, %v1701
      %1703 = vmatmul.bf16.gmra.mxu0 %v963
      %v1704 = vpop.f32.mrf.mxu0
      %v1705 = vadd.f32 %v1616, %v1704
      %v1706 = vpop.f32.mrf.mxu0
      %v1707 = vadd.f32 %v1618, %v1706
      %1708 = vmatmul.bf16.gmra.mxu0 %v966
      %v1709 = vpop.f32.mrf.mxu0
      %v1710 = vadd.f32 %v1621, %v1709
      %v1711 = vpop.f32.mrf.mxu0
      %v1712 = vadd.f32 %v1623, %v1711
      %1713 = vmatmul.bf16.gmra.mxu0 %v969
      %v1714 = vpop.f32.mrf.mxu0
      %v1715 = vadd.f32 %v1626, %v1714
      %v1716 = vpop.f32.mrf.mxu0
      %v1717 = vadd.f32 %v1628, %v1716
      %1718 = vmatmul.bf16.gmra.mxu0 %v972
      %v1719 = vpop.f32.mrf.mxu0
      %v1720 = vadd.f32 %v1631, %v1719
      %v1721 = vpop.f32.mrf.mxu0
      %v1722 = vadd.f32 %v1633, %v1721
      %1723 = vmatmul.bf16.gmra.mxu0 %v975
      %v1724 = vpop.f32.mrf.mxu0
      %v1725 = vadd.f32 %v1636, %v1724
      %v1726 = vpop.f32.mrf.mxu0
      %v1727 = vadd.f32 %v1638, %v1726
      %1728 = vmatmul.bf16.gmra.mxu0 %v978
      %v1729 = vpop.f32.mrf.mxu0
      %v1730 = vadd.f32 %v1641, %v1729
      %v1731 = vpop.f32.mrf.mxu0
      %v1732 = vadd.f32 %v1643, %v1731
      %1733 = vmatmul.bf16.gmra.mxu0 %v981
      %v1734 = vpop.f32.mrf.mxu0
      %v1735 = vadd.f32 %v1646, %v1734
      %v1736 = vpop.f32.mrf.mxu0
      %v1737 = vadd.f32 %v1648, %v1736
      %1738 = vmatmul.bf16.gmra.mxu0 %v984
      %v1739 = vpop.f32.mrf.mxu0
      %v1740 = vadd.f32 %v1651, %v1739
      %v1741 = vpop.f32.mrf.mxu0
      %v1742 = vadd.f32 %v1653, %v1741
      %1743 = vmatmul.bf16.gmra.mxu0 %v987
      %v1744 = vpop.f32.mrf.mxu0
      %v1745 = vadd.f32 %v1656, %v1744
      %v1746 = vpop.f32.mrf.mxu0
      %v1747 = vadd.f32 %v1658, %v1746
      %1748 = vmatmul.bf16.gmra.mxu0 %v990
      %v1749 = vpop.f32.mrf.mxu0
      %v1750 = vadd.f32 %v1661, %v1749
      %v1751 = vpop.f32.mrf.mxu0
      %v1752 = vadd.f32 %v1663, %v1751
      %1753 = vmatmul.bf16.gmra.mxu0 %v993
      %v1754 = vpop.f32.mrf.mxu0
      %v1755 = vadd.f32 %v1666, %v1754
      %v1756 = vpop.f32.mrf.mxu0
      %v1757 = vadd.f32 %v1668, %v1756
      %1758 = vdwg.mxu0
      %1759 = vmatpush.bf16.msra.mxu0 %v1460
      %1760 = vmatpush.bf16.msra.mxu0 %v1459
      %1761 = vmatpush.bf16.msra.mxu0 %v1458
      %1762 = vmatpush.bf16.msra.mxu0 %v1457
      %1763 = vmatpush.bf16.msra.mxu0 %v1456
      %1764 = vmatpush.bf16.msra.mxu0 %v1455
      %1765 = vmatpush.bf16.msra.mxu0 %v1454
      %1766 = vmatpush.bf16.msra.mxu0 %v1453
      %1767 = vmatmul.bf16.gmra.mxu0 %v949
      %v1768 = vpop.f32.mrf.mxu0
      %v1769 = vadd.f32 %v1680, %v1768
      %v1770 = vpop.f32.mrf.mxu0
      %v1771 = vadd.f32 %v1682, %v1770
      %1772 = vmatmul.bf16.gmra.mxu0 %v952
      %v1773 = vpop.f32.mrf.mxu0
      %v1774 = vadd.f32 %v1685, %v1773
      %v1775 = vpop.f32.mrf.mxu0
      %v1776 = vadd.f32 %v1687, %v1775
      %1777 = vmatmul.bf16.gmra.mxu0 %v955
      %v1778 = vpop.f32.mrf.mxu0
      %v1779 = vadd.f32 %v1690, %v1778
      %v1780 = vpop.f32.mrf.mxu0
      %v1781 = vadd.f32 %v1692, %v1780
      %1782 = vmatmul.bf16.gmra.mxu0 %v958
      %v1783 = vpop.f32.mrf.mxu0
      %v1784 = vadd.f32 %v1695, %v1783
      %v1785 = vpop.f32.mrf.mxu0
      %v1786 = vadd.f32 %v1697, %v1785
      %1787 = vmatmul.bf16.gmra.mxu0 %v961
      %v1788 = vpop.f32.mrf.mxu0
      %v1789 = vadd.f32 %v1700, %v1788
      %v1790 = vpop.f32.mrf.mxu0
      %v1791 = vadd.f32 %v1702, %v1790
      %1792 = vmatmul.bf16.gmra.mxu0 %v964
      %v1793 = vpop.f32.mrf.mxu0
      %v1794 = vadd.f32 %v1705, %v1793
      %v1795 = vpop.f32.mrf.mxu0
      %v1796 = vadd.f32 %v1707, %v1795
      %1797 = vmatmul.bf16.gmra.mxu0 %v967
      %v1798 = vpop.f32.mrf.mxu0
      %v1799 = vadd.f32 %v1710, %v1798
      %v1800 = vpop.f32.mrf.mxu0
      %v1801 = vadd.f32 %v1712, %v1800
      %1802 = vmatmul.bf16.gmra.mxu0 %v970
      %v1803 = vpop.f32.mrf.mxu0
      %v1804 = vadd.f32 %v1715, %v1803
      %v1805 = vpop.f32.mrf.mxu0
      %v1806 = vadd.f32 %v1717, %v1805
      %1807 = vmatmul.bf16.gmra.mxu0 %v973
      %v1808 = vpop.f32.mrf.mxu0
      %v1809 = vadd.f32 %v1720, %v1808
      %v1810 = vpop.f32.mrf.mxu0
      %v1811 = vadd.f32 %v1722, %v1810
      %1812 = vmatmul.bf16.gmra.mxu0 %v976
      %v1813 = vpop.f32.mrf.mxu0
      %v1814 = vadd.f32 %v1725, %v1813
      %v1815 = vpop.f32.mrf.mxu0
      %v1816 = vadd.f32 %v1727, %v1815
      %1817 = vmatmul.bf16.gmra.mxu0 %v979
      %v1818 = vpop.f32.mrf.mxu0
      %v1819 = vadd.f32 %v1730, %v1818
      %v1820 = vpop.f32.mrf.mxu0
      %v1821 = vadd.f32 %v1732, %v1820
      %1822 = vmatmul.bf16.gmra.mxu0 %v982
      %v1823 = vpop.f32.mrf.mxu0
      %v1824 = vadd.f32 %v1735, %v1823
      %v1825 = vpop.f32.mrf.mxu0
      %v1826 = vadd.f32 %v1737, %v1825
      %1827 = vmatmul.bf16.gmra.mxu0 %v985
      %v1828 = vpop.f32.mrf.mxu0
      %v1829 = vadd.f32 %v1740, %v1828
      %v1830 = vpop.f32.mrf.mxu0
      %v1831 = vadd.f32 %v1742, %v1830
      %1832 = vmatmul.bf16.gmra.mxu0 %v988
      %v1833 = vpop.f32.mrf.mxu0
      %v1834 = vadd.f32 %v1745, %v1833
      %v1835 = vpop.f32.mrf.mxu0
      %v1836 = vadd.f32 %v1747, %v1835
      %1837 = vmatmul.bf16.gmra.mxu0 %v991
      %v1838 = vpop.f32.mrf.mxu0
      %v1839 = vadd.f32 %v1750, %v1838
      %v1840 = vpop.f32.mrf.mxu0
      %v1841 = vadd.f32 %v1752, %v1840
      %1842 = vmatmul.bf16.gmra.mxu0 %v994
      %v1843 = vpop.f32.mrf.mxu0
      %v1844 = vadd.f32 %v1755, %v1843
      %v1845 = vpop.f32.mrf.mxu0
      %v1846 = vadd.f32 %v1757, %v1845
      %1847 = vdwg.mxu0
      %1848 = vmatpush.bf16.msra.mxu0 %v1468
      %1849 = vmatpush.bf16.msra.mxu0 %v1467
      %1850 = vmatpush.bf16.msra.mxu0 %v1466
      %1851 = vmatpush.bf16.msra.mxu0 %v1465
      %1852 = vmatpush.bf16.msra.mxu0 %v1464
      %1853 = vmatpush.bf16.msra.mxu0 %v1463
      %1854 = vmatpush.bf16.msra.mxu0 %v1462
      %1855 = vmatpush.bf16.msra.mxu0 %v1461
      %1856 = vmatmul.bf16.gmra.mxu0 %v950
      %v1857 = vpop.f32.mrf.mxu0
      %v1858 = vadd.f32 %v1769, %v1857
      %v1859 = vpop.f32.mrf.mxu0
      %v1860 = vadd.f32 %v1771, %v1859
      %1861 = vmatmul.bf16.gmra.mxu0 %v953
      %v1862 = vpop.f32.mrf.mxu0
      %v1863 = vadd.f32 %v1774, %v1862
      %v1864 = vpop.f32.mrf.mxu0
      %v1865 = vadd.f32 %v1776, %v1864
      %1866 = vmatmul.bf16.gmra.mxu0 %v956
      %v1867 = vpop.f32.mrf.mxu0
      %v1868 = vadd.f32 %v1779, %v1867
      %v1869 = vpop.f32.mrf.mxu0
      %v1870 = vadd.f32 %v1781, %v1869
      %1871 = vmatmul.bf16.gmra.mxu0 %v959
      %v1872 = vpop.f32.mrf.mxu0
      %v1873 = vadd.f32 %v1784, %v1872
      %v1874 = vpop.f32.mrf.mxu0
      %v1875 = vadd.f32 %v1786, %v1874
      %1876 = vmatmul.bf16.gmra.mxu0 %v962
      %v1877 = vpop.f32.mrf.mxu0
      %v1878 = vadd.f32 %v1789, %v1877
      %v1879 = vpop.f32.mrf.mxu0
      %v1880 = vadd.f32 %v1791, %v1879
      %1881 = vmatmul.bf16.gmra.mxu0 %v965
      %v1882 = vpop.f32.mrf.mxu0
      %v1883 = vadd.f32 %v1794, %v1882
      %v1884 = vpop.f32.mrf.mxu0
      %v1885 = vadd.f32 %v1796, %v1884
      %1886 = vmatmul.bf16.gmra.mxu0 %v968
      %v1887 = vpop.f32.mrf.mxu0
      %v1888 = vadd.f32 %v1799, %v1887
      %v1889 = vpop.f32.mrf.mxu0
      %v1890 = vadd.f32 %v1801, %v1889
      %1891 = vmatmul.bf16.gmra.mxu0 %v971
      %v1892 = vpop.f32.mrf.mxu0
      %v1893 = vadd.f32 %v1804, %v1892
      %v1894 = vpop.f32.mrf.mxu0
      %v1895 = vadd.f32 %v1806, %v1894
      %1896 = vmatmul.bf16.gmra.mxu0 %v974
      %v1897 = vpop.f32.mrf.mxu0
      %v1898 = vadd.f32 %v1809, %v1897
      %v1899 = vpop.f32.mrf.mxu0
      %v1900 = vadd.f32 %v1811, %v1899
      %1901 = vmatmul.bf16.gmra.mxu0 %v977
      %v1902 = vpop.f32.mrf.mxu0
      %v1903 = vadd.f32 %v1814, %v1902
      %v1904 = vpop.f32.mrf.mxu0
      %v1905 = vadd.f32 %v1816, %v1904
      %1906 = vmatmul.bf16.gmra.mxu0 %v980
      %v1907 = vpop.f32.mrf.mxu0
      %v1908 = vadd.f32 %v1819, %v1907
      %v1909 = vpop.f32.mrf.mxu0
      %v1910 = vadd.f32 %v1821, %v1909
      %1911 = vmatmul.bf16.gmra.mxu0 %v983
      %v1912 = vpop.f32.mrf.mxu0
      %v1913 = vadd.f32 %v1824, %v1912
      %v1914 = vpop.f32.mrf.mxu0
      %v1915 = vadd.f32 %v1826, %v1914
      %1916 = vmatmul.bf16.gmra.mxu0 %v986
      %v1917 = vpop.f32.mrf.mxu0
      %v1918 = vadd.f32 %v1829, %v1917
      %v1919 = vpop.f32.mrf.mxu0
      %v1920 = vadd.f32 %v1831, %v1919
      %1921 = vmatmul.bf16.gmra.mxu0 %v989
      %v1922 = vpop.f32.mrf.mxu0
      %v1923 = vadd.f32 %v1834, %v1922
      %v1924 = vpop.f32.mrf.mxu0
      %v1925 = vadd.f32 %v1836, %v1924
      %1926 = vmatmul.bf16.gmra.mxu0 %v992
      %v1927 = vpop.f32.mrf.mxu0
      %v1928 = vadd.f32 %v1839, %v1927
      %v1929 = vpop.f32.mrf.mxu0
      %v1930 = vadd.f32 %v1841, %v1929
      %1931 = vmatmul.bf16.gmra.mxu0 %v995
      %v1932 = vpop.f32.mrf.mxu0
      %v1933 = vadd.f32 %v1844, %v1932
      %v1934 = vpop.f32.mrf.mxu0
      %v1935 = vadd.f32 %v1846, %v1934
      %1936 = vdwg.mxu0
      %1937 = vmatpush.bf16.msra.mxu0 %v1476
      %1938 = vmatpush.bf16.msra.mxu0 %v1475
      %1939 = vmatpush.bf16.msra.mxu0 %v1474
      %1940 = vmatpush.bf16.msra.mxu0 %v1473
      %1941 = vmatpush.bf16.msra.mxu0 %v1472
      %1942 = vmatpush.bf16.msra.mxu0 %v1471
      %1943 = vmatpush.bf16.msra.mxu0 %v1470
      %1944 = vmatpush.bf16.msra.mxu0 %v1469
      %1945 = vmatmul.bf16.gmra.mxu0 %v951
      %v1946 = vpop.f32.mrf.mxu0
      %v1947 = vadd.f32 %v1858, %v1946
      %v1948 = vpop.f32.mrf.mxu0
      %v1949 = vadd.f32 %v1860, %v1948
      %1950 = vmatmul.bf16.gmra.mxu0 %v954
      %v1951 = vpop.f32.mrf.mxu0
      %v1952 = vadd.f32 %v1863, %v1951
      %v1953 = vpop.f32.mrf.mxu0
      %v1954 = vadd.f32 %v1865, %v1953
      %1955 = vmatmul.bf16.gmra.mxu0 %v957
      %v1956 = vpop.f32.mrf.mxu0
      %v1957 = vadd.f32 %v1868, %v1956
      %v1958 = vpop.f32.mrf.mxu0
      %v1959 = vadd.f32 %v1870, %v1958
      %1960 = vmatmul.bf16.gmra.mxu0 %v960
      %v1961 = vpop.f32.mrf.mxu0
      %v1962 = vadd.f32 %v1873, %v1961
      %v1963 = vpop.f32.mrf.mxu0
      %v1964 = vadd.f32 %v1875, %v1963
      %1965 = vmatmul.bf16.gmra.mxu0 %v963
      %v1966 = vpop.f32.mrf.mxu0
      %v1967 = vadd.f32 %v1878, %v1966
      %v1968 = vpop.f32.mrf.mxu0
      %v1969 = vadd.f32 %v1880, %v1968
      %1970 = vmatmul.bf16.gmra.mxu0 %v966
      %v1971 = vpop.f32.mrf.mxu0
      %v1972 = vadd.f32 %v1883, %v1971
      %v1973 = vpop.f32.mrf.mxu0
      %v1974 = vadd.f32 %v1885, %v1973
      %1975 = vmatmul.bf16.gmra.mxu0 %v969
      %v1976 = vpop.f32.mrf.mxu0
      %v1977 = vadd.f32 %v1888, %v1976
      %v1978 = vpop.f32.mrf.mxu0
      %v1979 = vadd.f32 %v1890, %v1978
      %1980 = vmatmul.bf16.gmra.mxu0 %v972
      %v1981 = vpop.f32.mrf.mxu0
      %v1982 = vadd.f32 %v1893, %v1981
      %v1983 = vpop.f32.mrf.mxu0
      %v1984 = vadd.f32 %v1895, %v1983
      %1985 = vmatmul.bf16.gmra.mxu0 %v975
      %v1986 = vpop.f32.mrf.mxu0
      %v1987 = vadd.f32 %v1898, %v1986
      %v1988 = vpop.f32.mrf.mxu0
      %v1989 = vadd.f32 %v1900, %v1988
      %1990 = vmatmul.bf16.gmra.mxu0 %v978
      %v1991 = vpop.f32.mrf.mxu0
      %v1992 = vadd.f32 %v1903, %v1991
      %v1993 = vpop.f32.mrf.mxu0
      %v1994 = vadd.f32 %v1905, %v1993
      %1995 = vmatmul.bf16.gmra.mxu0 %v981
      %v1996 = vpop.f32.mrf.mxu0
      %v1997 = vadd.f32 %v1908, %v1996
      %v1998 = vpop.f32.mrf.mxu0
      %v1999 = vadd.f32 %v1910, %v1998
      %2000 = vmatmul.bf16.gmra.mxu0 %v984
      %v2001 = vpop.f32.mrf.mxu0
      %v2002 = vadd.f32 %v1913, %v2001
      %v2003 = vpop.f32.mrf.mxu0
      %v2004 = vadd.f32 %v1915, %v2003
      %2005 = vmatmul.bf16.gmra.mxu0 %v987
      %v2006 = vpop.f32.mrf.mxu0
      %v2007 = vadd.f32 %v1918, %v2006
      %v2008 = vpop.f32.mrf.mxu0
      %v2009 = vadd.f32 %v1920, %v2008
      %2010 = vmatmul.bf16.gmra.mxu0 %v990
      %v2011 = vpop.f32.mrf.mxu0
      %v2012 = vadd.f32 %v1923, %v2011
      %v2013 = vpop.f32.mrf.mxu0
      %v2014 = vadd.f32 %v1925, %v2013
      %2015 = vmatmul.bf16.gmra.mxu0 %v993
      %v2016 = vpop.f32.mrf.mxu0
      %v2017 = vadd.f32 %v1928, %v2016
      %v2018 = vpop.f32.mrf.mxu0
      %v2019 = vadd.f32 %v1930, %v2018
      %2020 = vmatmul.bf16.gmra.mxu0 %v996
      %v2021 = vpop.f32.mrf.mxu0
      %v2022 = vadd.f32 %v1933, %v2021
      %v2023 = vpop.f32.mrf.mxu0
      %v2024 = vadd.f32 %v1935, %v2023
      %2025 = vdwg.mxu0
      %2026 = vmatpush.bf16.msra.mxu0 %v1484
      %2027 = vmatpush.bf16.msra.mxu0 %v1483
      %2028 = vmatpush.bf16.msra.mxu0 %v1482
      %2029 = vmatpush.bf16.msra.mxu0 %v1481
      %2030 = vmatpush.bf16.msra.mxu0 %v1480
      %2031 = vmatpush.bf16.msra.mxu0 %v1479
      %2032 = vmatpush.bf16.msra.mxu0 %v1478
      %2033 = vmatpush.bf16.msra.mxu0 %v1477
      %2034 = vmatmul.bf16.gmra.mxu0 %v952
      %v2035 = vpop.f32.mrf.mxu0
      %v2036 = vadd.f32 %v1947, %v2035
      %v2037 = vpop.f32.mrf.mxu0
      %v2038 = vadd.f32 %v1949, %v2037
      %2039 = vmatmul.bf16.gmra.mxu0 %v955
      %v2040 = vpop.f32.mrf.mxu0
      %v2041 = vadd.f32 %v1952, %v2040
      %v2042 = vpop.f32.mrf.mxu0
      %v2043 = vadd.f32 %v1954, %v2042
      %2044 = vmatmul.bf16.gmra.mxu0 %v958
      %v2045 = vpop.f32.mrf.mxu0
      %v2046 = vadd.f32 %v1957, %v2045
      %v2047 = vpop.f32.mrf.mxu0
      %v2048 = vadd.f32 %v1959, %v2047
      %2049 = vmatmul.bf16.gmra.mxu0 %v961
      %v2050 = vpop.f32.mrf.mxu0
      %v2051 = vadd.f32 %v1962, %v2050
      %v2052 = vpop.f32.mrf.mxu0
      %v2053 = vadd.f32 %v1964, %v2052
      %2054 = vmatmul.bf16.gmra.mxu0 %v964
      %v2055 = vpop.f32.mrf.mxu0
      %v2056 = vadd.f32 %v1967, %v2055
      %v2057 = vpop.f32.mrf.mxu0
      %v2058 = vadd.f32 %v1969, %v2057
      %2059 = vmatmul.bf16.gmra.mxu0 %v967
      %v2060 = vpop.f32.mrf.mxu0
      %v2061 = vadd.f32 %v1972, %v2060
      %v2062 = vpop.f32.mrf.mxu0
      %v2063 = vadd.f32 %v1974, %v2062
      %2064 = vmatmul.bf16.gmra.mxu0 %v970
      %v2065 = vpop.f32.mrf.mxu0
      %v2066 = vadd.f32 %v1977, %v2065
      %v2067 = vpop.f32.mrf.mxu0
      %v2068 = vadd.f32 %v1979, %v2067
      %2069 = vmatmul.bf16.gmra.mxu0 %v973
      %v2070 = vpop.f32.mrf.mxu0
      %v2071 = vadd.f32 %v1982, %v2070
      %v2072 = vpop.f32.mrf.mxu0
      %v2073 = vadd.f32 %v1984, %v2072
      %2074 = vmatmul.bf16.gmra.mxu0 %v976
      %v2075 = vpop.f32.mrf.mxu0
      %v2076 = vadd.f32 %v1987, %v2075
      %v2077 = vpop.f32.mrf.mxu0
      %v2078 = vadd.f32 %v1989, %v2077
      %2079 = vmatmul.bf16.gmra.mxu0 %v979
      %v2080 = vpop.f32.mrf.mxu0
      %v2081 = vadd.f32 %v1992, %v2080
      %v2082 = vpop.f32.mrf.mxu0
      %v2083 = vadd.f32 %v1994, %v2082
      %2084 = vmatmul.bf16.gmra.mxu0 %v982
      %v2085 = vpop.f32.mrf.mxu0
      %v2086 = vadd.f32 %v1997, %v2085
      %v2087 = vpop.f32.mrf.mxu0
      %v2088 = vadd.f32 %v1999, %v2087
      %2089 = vmatmul.bf16.gmra.mxu0 %v985
      %v2090 = vpop.f32.mrf.mxu0
      %v2091 = vadd.f32 %v2002, %v2090
      %v2092 = vpop.f32.mrf.mxu0
      %v2093 = vadd.f32 %v2004, %v2092
      %2094 = vmatmul.bf16.gmra.mxu0 %v988
      %v2095 = vpop.f32.mrf.mxu0
      %v2096 = vadd.f32 %v2007, %v2095
      %v2097 = vpop.f32.mrf.mxu0
      %v2098 = vadd.f32 %v2009, %v2097
      %2099 = vmatmul.bf16.gmra.mxu0 %v991
      %v2100 = vpop.f32.mrf.mxu0
      %v2101 = vadd.f32 %v2012, %v2100
      %v2102 = vpop.f32.mrf.mxu0
      %v2103 = vadd.f32 %v2014, %v2102
      %2104 = vmatmul.bf16.gmra.mxu0 %v994
      %v2105 = vpop.f32.mrf.mxu0
      %v2106 = vadd.f32 %v2017, %v2105
      %v2107 = vpop.f32.mrf.mxu0
      %v2108 = vadd.f32 %v2019, %v2107
      %2109 = vmatmul.bf16.gmra.mxu0 %v997
      %v2110 = vpop.f32.mrf.mxu0
      %v2111 = vadd.f32 %v2022, %v2110
      %v2112 = vpop.f32.mrf.mxu0
      %v2113 = vadd.f32 %v2024, %v2112
      %2114 = vdwg.mxu0
      %2115 = vmatpush.bf16.msra.mxu0 %v1492
      %2116 = vmatpush.bf16.msra.mxu0 %v1491
      %2117 = vmatpush.bf16.msra.mxu0 %v1490
      %2118 = vmatpush.bf16.msra.mxu0 %v1489
      %2119 = vmatpush.bf16.msra.mxu0 %v1488
      %2120 = vmatpush.bf16.msra.mxu0 %v1487
      %2121 = vmatpush.bf16.msra.mxu0 %v1486
      %2122 = vmatpush.bf16.msra.mxu0 %v1485
      %2123 = vmatmul.bf16.gmra.mxu0 %v953
      %v2124 = vpop.f32.mrf.mxu0
      %v2125 = vadd.f32 %v2036, %v2124
      %v2126 = vpop.f32.mrf.mxu0
      %v2127 = vadd.f32 %v2038, %v2126
      %2128 = vmatmul.bf16.gmra.mxu0 %v956
      %v2129 = vpop.f32.mrf.mxu0
      %v2130 = vadd.f32 %v2041, %v2129
      %v2131 = vpop.f32.mrf.mxu0
      %v2132 = vadd.f32 %v2043, %v2131
      %2133 = vmatmul.bf16.gmra.mxu0 %v959
      %v2134 = vpop.f32.mrf.mxu0
      %v2135 = vadd.f32 %v2046, %v2134
      %v2136 = vpop.f32.mrf.mxu0
      %v2137 = vadd.f32 %v2048, %v2136
      %2138 = vmatmul.bf16.gmra.mxu0 %v962
      %v2139 = vpop.f32.mrf.mxu0
      %v2140 = vadd.f32 %v2051, %v2139
      %v2141 = vpop.f32.mrf.mxu0
      %v2142 = vadd.f32 %v2053, %v2141
      %2143 = vmatmul.bf16.gmra.mxu0 %v965
      %v2144 = vpop.f32.mrf.mxu0
      %v2145 = vadd.f32 %v2056, %v2144
      %v2146 = vpop.f32.mrf.mxu0
      %v2147 = vadd.f32 %v2058, %v2146
      %2148 = vmatmul.bf16.gmra.mxu0 %v968
      %v2149 = vpop.f32.mrf.mxu0
      %v2150 = vadd.f32 %v2061, %v2149
      %v2151 = vpop.f32.mrf.mxu0
      %v2152 = vadd.f32 %v2063, %v2151
      %2153 = vmatmul.bf16.gmra.mxu0 %v971
      %v2154 = vpop.f32.mrf.mxu0
      %v2155 = vadd.f32 %v2066, %v2154
      %v2156 = vpop.f32.mrf.mxu0
      %v2157 = vadd.f32 %v2068, %v2156
      %2158 = vmatmul.bf16.gmra.mxu0 %v974
      %v2159 = vpop.f32.mrf.mxu0
      %v2160 = vadd.f32 %v2071, %v2159
      %v2161 = vpop.f32.mrf.mxu0
      %v2162 = vadd.f32 %v2073, %v2161
      %2163 = vmatmul.bf16.gmra.mxu0 %v977
      %v2164 = vpop.f32.mrf.mxu0
      %v2165 = vadd.f32 %v2076, %v2164
      %v2166 = vpop.f32.mrf.mxu0
      %v2167 = vadd.f32 %v2078, %v2166
      %2168 = vmatmul.bf16.gmra.mxu0 %v980
      %v2169 = vpop.f32.mrf.mxu0
      %v2170 = vadd.f32 %v2081, %v2169
      %v2171 = vpop.f32.mrf.mxu0
      %v2172 = vadd.f32 %v2083, %v2171
      %2173 = vmatmul.bf16.gmra.mxu0 %v983
      %v2174 = vpop.f32.mrf.mxu0
      %v2175 = vadd.f32 %v2086, %v2174
      %v2176 = vpop.f32.mrf.mxu0
      %v2177 = vadd.f32 %v2088, %v2176
      %2178 = vmatmul.bf16.gmra.mxu0 %v986
      %v2179 = vpop.f32.mrf.mxu0
      %v2180 = vadd.f32 %v2091, %v2179
      %v2181 = vpop.f32.mrf.mxu0
      %v2182 = vadd.f32 %v2093, %v2181
      %2183 = vmatmul.bf16.gmra.mxu0 %v989
      %v2184 = vpop.f32.mrf.mxu0
      %v2185 = vadd.f32 %v2096, %v2184
      %v2186 = vpop.f32.mrf.mxu0
      %v2187 = vadd.f32 %v2098, %v2186
      %2188 = vmatmul.bf16.gmra.mxu0 %v992
      %v2189 = vpop.f32.mrf.mxu0
      %v2190 = vadd.f32 %v2101, %v2189
      %v2191 = vpop.f32.mrf.mxu0
      %v2192 = vadd.f32 %v2103, %v2191
      %2193 = vmatmul.bf16.gmra.mxu0 %v995
      %v2194 = vpop.f32.mrf.mxu0
      %v2195 = vadd.f32 %v2106, %v2194
      %v2196 = vpop.f32.mrf.mxu0
      %v2197 = vadd.f32 %v2108, %v2196
      %2198 = vmatmul.bf16.gmra.mxu0 %v998
      %v2199 = vpop.f32.mrf.mxu0
      %v2200 = vadd.f32 %v2111, %v2199
      %v2201 = vpop.f32.mrf.mxu0
      %v2202 = vadd.f32 %v2113, %v2201
      %2203 = vdwg.mxu0
      %2204 = vmatpush.bf16.msra.mxu0 %v1500
      %2205 = vmatpush.bf16.msra.mxu0 %v1499
      %2206 = vmatpush.bf16.msra.mxu0 %v1498
      %2207 = vmatpush.bf16.msra.mxu0 %v1497
      %2208 = vmatpush.bf16.msra.mxu0 %v1496
      %2209 = vmatpush.bf16.msra.mxu0 %v1495
      %2210 = vmatpush.bf16.msra.mxu0 %v1494
      %2211 = vmatpush.bf16.msra.mxu0 %v1493
      %2212 = vmatmul.bf16.gmra.mxu0 %v954
      %v2213 = vpop.f32.mrf.mxu0
      %v2214 = vadd.f32 %v2125, %v2213
      %v2215 = vpop.f32.mrf.mxu0
      %v2216 = vadd.f32 %v2127, %v2215
      %2217 = vmatmul.bf16.gmra.mxu0 %v957
      %v2218 = vpop.f32.mrf.mxu0
      %v2219 = vadd.f32 %v2130, %v2218
      %v2220 = vpop.f32.mrf.mxu0
      %v2221 = vadd.f32 %v2132, %v2220
      %2222 = vmatmul.bf16.gmra.mxu0 %v960
      %v2223 = vpop.f32.mrf.mxu0
      %v2224 = vadd.f32 %v2135, %v2223
      %v2225 = vpop.f32.mrf.mxu0
      %v2226 = vadd.f32 %v2137, %v2225
      %2227 = vmatmul.bf16.gmra.mxu0 %v963
      %v2228 = vpop.f32.mrf.mxu0
      %v2229 = vadd.f32 %v2140, %v2228
      %v2230 = vpop.f32.mrf.mxu0
      %v2231 = vadd.f32 %v2142, %v2230
      %2232 = vmatmul.bf16.gmra.mxu0 %v966
      %v2233 = vpop.f32.mrf.mxu0
      %v2234 = vadd.f32 %v2145, %v2233
      %v2235 = vpop.f32.mrf.mxu0
      %v2236 = vadd.f32 %v2147, %v2235
      %2237 = vmatmul.bf16.gmra.mxu0 %v969
      %v2238 = vpop.f32.mrf.mxu0
      %v2239 = vadd.f32 %v2150, %v2238
      %v2240 = vpop.f32.mrf.mxu0
      %v2241 = vadd.f32 %v2152, %v2240
      %2242 = vmatmul.bf16.gmra.mxu0 %v972
      %v2243 = vpop.f32.mrf.mxu0
      %v2244 = vadd.f32 %v2155, %v2243
      %v2245 = vpop.f32.mrf.mxu0
      %v2246 = vadd.f32 %v2157, %v2245
      %2247 = vmatmul.bf16.gmra.mxu0 %v975
      %v2248 = vpop.f32.mrf.mxu0
      %v2249 = vadd.f32 %v2160, %v2248
      %v2250 = vpop.f32.mrf.mxu0
      %v2251 = vadd.f32 %v2162, %v2250
      %2252 = vmatmul.bf16.gmra.mxu0 %v978
      %v2253 = vpop.f32.mrf.mxu0
      %v2254 = vadd.f32 %v2165, %v2253
      %v2255 = vpop.f32.mrf.mxu0
      %v2256 = vadd.f32 %v2167, %v2255
      %2257 = vmatmul.bf16.gmra.mxu0 %v981
      %v2258 = vpop.f32.mrf.mxu0
      %v2259 = vadd.f32 %v2170, %v2258
      %v2260 = vpop.f32.mrf.mxu0
      %v2261 = vadd.f32 %v2172, %v2260
      %2262 = vmatmul.bf16.gmra.mxu0 %v984
      %v2263 = vpop.f32.mrf.mxu0
      %v2264 = vadd.f32 %v2175, %v2263
      %v2265 = vpop.f32.mrf.mxu0
      %v2266 = vadd.f32 %v2177, %v2265
      %2267 = vmatmul.bf16.gmra.mxu0 %v987
      %v2268 = vpop.f32.mrf.mxu0
      %v2269 = vadd.f32 %v2180, %v2268
      %v2270 = vpop.f32.mrf.mxu0
      %v2271 = vadd.f32 %v2182, %v2270
      %2272 = vmatmul.bf16.gmra.mxu0 %v990
      %v2273 = vpop.f32.mrf.mxu0
      %v2274 = vadd.f32 %v2185, %v2273
      %v2275 = vpop.f32.mrf.mxu0
      %v2276 = vadd.f32 %v2187, %v2275
      %2277 = vmatmul.bf16.gmra.mxu0 %v993
      %v2278 = vpop.f32.mrf.mxu0
      %v2279 = vadd.f32 %v2190, %v2278
      %v2280 = vpop.f32.mrf.mxu0
      %v2281 = vadd.f32 %v2192, %v2280
      %2282 = vmatmul.bf16.gmra.mxu0 %v996
      %v2283 = vpop.f32.mrf.mxu0
      %v2284 = vadd.f32 %v2195, %v2283
      %v2285 = vpop.f32.mrf.mxu0
      %v2286 = vadd.f32 %v2197, %v2285
      %2287 = vmatmul.bf16.gmra.mxu0 %v999
      %v2288 = vpop.f32.mrf.mxu0
      %v2289 = vadd.f32 %v2200, %v2288
      %v2290 = vpop.f32.mrf.mxu0
      %v2291 = vadd.f32 %v2202, %v2290
      %2292 = vdwg.mxu0
      %2293 = vmatpush.bf16.msra.mxu0 %v1508
      %2294 = vmatpush.bf16.msra.mxu0 %v1507
      %2295 = vmatpush.bf16.msra.mxu0 %v1506
      %2296 = vmatpush.bf16.msra.mxu0 %v1505
      %2297 = vmatpush.bf16.msra.mxu0 %v1504
      %2298 = vmatpush.bf16.msra.mxu0 %v1503
      %2299 = vmatpush.bf16.msra.mxu0 %v1502
      %2300 = vmatpush.bf16.msra.mxu0 %v1501
      %2301 = vmatmul.bf16.gmra.mxu0 %v955
      %v2302 = vpop.f32.mrf.mxu0
      %v2303 = vadd.f32 %v2214, %v2302
      %v2304 = vpop.f32.mrf.mxu0
      %v2305 = vadd.f32 %v2216, %v2304
      %2306 = vmatmul.bf16.gmra.mxu0 %v958
      %v2307 = vpop.f32.mrf.mxu0
      %v2308 = vadd.f32 %v2219, %v2307
      %v2309 = vpop.f32.mrf.mxu0
      %v2310 = vadd.f32 %v2221, %v2309
      %2311 = vmatmul.bf16.gmra.mxu0 %v961
      %v2312 = vpop.f32.mrf.mxu0
      %v2313 = vadd.f32 %v2224, %v2312
      %v2314 = vpop.f32.mrf.mxu0
      %v2315 = vadd.f32 %v2226, %v2314
      %2316 = vmatmul.bf16.gmra.mxu0 %v964
      %v2317 = vpop.f32.mrf.mxu0
      %v2318 = vadd.f32 %v2229, %v2317
      %v2319 = vpop.f32.mrf.mxu0
      %v2320 = vadd.f32 %v2231, %v2319
      %2321 = vmatmul.bf16.gmra.mxu0 %v967
      %v2322 = vpop.f32.mrf.mxu0
      %v2323 = vadd.f32 %v2234, %v2322
      %v2324 = vpop.f32.mrf.mxu0
      %v2325 = vadd.f32 %v2236, %v2324
      %2326 = vmatmul.bf16.gmra.mxu0 %v970
      %v2327 = vpop.f32.mrf.mxu0
      %v2328 = vadd.f32 %v2239, %v2327
      %v2329 = vpop.f32.mrf.mxu0
      %v2330 = vadd.f32 %v2241, %v2329
      %2331 = vmatmul.bf16.gmra.mxu0 %v973
      %v2332 = vpop.f32.mrf.mxu0
      %v2333 = vadd.f32 %v2244, %v2332
      %v2334 = vpop.f32.mrf.mxu0
      %v2335 = vadd.f32 %v2246, %v2334
      %2336 = vmatmul.bf16.gmra.mxu0 %v976
      %v2337 = vpop.f32.mrf.mxu0
      %v2338 = vadd.f32 %v2249, %v2337
      %v2339 = vpop.f32.mrf.mxu0
      %v2340 = vadd.f32 %v2251, %v2339
      %2341 = vmatmul.bf16.gmra.mxu0 %v979
      %v2342 = vpop.f32.mrf.mxu0
      %v2343 = vadd.f32 %v2254, %v2342
      %v2344 = vpop.f32.mrf.mxu0
      %v2345 = vadd.f32 %v2256, %v2344
      %2346 = vmatmul.bf16.gmra.mxu0 %v982
      %v2347 = vpop.f32.mrf.mxu0
      %v2348 = vadd.f32 %v2259, %v2347
      %v2349 = vpop.f32.mrf.mxu0
      %v2350 = vadd.f32 %v2261, %v2349
      %2351 = vmatmul.bf16.gmra.mxu0 %v985
      %v2352 = vpop.f32.mrf.mxu0
      %v2353 = vadd.f32 %v2264, %v2352
      %v2354 = vpop.f32.mrf.mxu0
      %v2355 = vadd.f32 %v2266, %v2354
      %2356 = vmatmul.bf16.gmra.mxu0 %v988
      %v2357 = vpop.f32.mrf.mxu0
      %v2358 = vadd.f32 %v2269, %v2357
      %v2359 = vpop.f32.mrf.mxu0
      %v2360 = vadd.f32 %v2271, %v2359
      %2361 = vmatmul.bf16.gmra.mxu0 %v991
      %v2362 = vpop.f32.mrf.mxu0
      %v2363 = vadd.f32 %v2274, %v2362
      %v2364 = vpop.f32.mrf.mxu0
      %v2365 = vadd.f32 %v2276, %v2364
      %2366 = vmatmul.bf16.gmra.mxu0 %v994
      %v2367 = vpop.f32.mrf.mxu0
      %v2368 = vadd.f32 %v2279, %v2367
      %v2369 = vpop.f32.mrf.mxu0
      %v2370 = vadd.f32 %v2281, %v2369
      %2371 = vmatmul.bf16.gmra.mxu0 %v997
      %v2372 = vpop.f32.mrf.mxu0
      %v2373 = vadd.f32 %v2284, %v2372
      %v2374 = vpop.f32.mrf.mxu0
      %v2375 = vadd.f32 %v2286, %v2374
      %2376 = vmatmul.bf16.gmra.mxu0 %v1000
      %v2377 = vpop.f32.mrf.mxu0
      %v2378 = vadd.f32 %v2289, %v2377
      %v2379 = vpop.f32.mrf.mxu0
      %v2380 = vadd.f32 %v2291, %v2379
      %2381 = vdwg.mxu0
      %v2382 = vmax.f32 %v2303, 0.0
      %v2383 = vmax.f32 %v2305, 0.0
      %v2384 = vmax.f32 %v2308, 0.0
      %v2385 = vmax.f32 %v2310, 0.0
      %v2386 = vmax.f32 %v2313, 0.0
      %v2387 = vmax.f32 %v2315, 0.0
      %v2388 = vmax.f32 %v2318, 0.0
      %v2389 = vmax.f32 %v2320, 0.0
      %v2390 = vmax.f32 %v2323, 0.0
      %v2391 = vmax.f32 %v2325, 0.0
      %v2392 = vmax.f32 %v2328, 0.0
      %v2393 = vmax.f32 %v2330, 0.0
      %v2394 = vmax.f32 %v2333, 0.0
      %v2395 = vmax.f32 %v2335, 0.0
      %v2396 = vmax.f32 %v2338, 0.0
      %v2397 = vmax.f32 %v2340, 0.0
      %v2398 = vmax.f32 %v2343, 0.0
      %v2399 = vmax.f32 %v2345, 0.0
      %v2400 = vmax.f32 %v2348, 0.0
      %v2401 = vmax.f32 %v2350, 0.0
      %v2402 = vmax.f32 %v2353, 0.0
      %v2403 = vmax.f32 %v2355, 0.0
      %v2404 = vmax.f32 %v2358, 0.0
      %v2405 = vmax.f32 %v2360, 0.0
      %v2406 = vmax.f32 %v2363, 0.0
      %v2407 = vmax.f32 %v2365, 0.0
      %v2408 = vmax.f32 %v2368, 0.0
      %v2409 = vmax.f32 %v2370, 0.0
      %v2410 = vmax.f32 %v2373, 0.0
      %v2411 = vmax.f32 %v2375, 0.0
      %v2412 = vmax.f32 %v2378, 0.0
      %v2413 = vmax.f32 %v2380, 0.0
      %2414 = vst [vmem:[#allocation3] sm:$0xff] 0.0
      %2415 = vst [vmem:[#allocation3 + $0x8] sm:$0xff] 0.0
      %2416 = vst [vmem:[#allocation3 + $0x10] sm:$0x3] 0.0
      %2417 = vst [vmem:[#allocation3 + $0x18] sm:$0xff] 0.0
      %2418 = vst [vmem:[#allocation3 + $0x20] sm:$0xff] 0.0
      %2419 = vst [vmem:[#allocation3 + $0x28] sm:$0x3] 0.0
      %2420 = vst [vmem:[#allocation3 + $0x30] sm:$0xff] 0.0
      %2421 = vst [vmem:[#allocation3 + $0x38] sm:$0xff] 0.0
      %2422 = vst [vmem:[#allocation3 + $0x40] sm:$0x3] 0.0
      %2423 = vst [vmem:[#allocation3 + $0x48] sm:$0xff] 0.0
      %2424 = vst [vmem:[#allocation3 + $0x50] sm:$0xff] 0.0
      %2425 = vst [vmem:[#allocation3 + $0x58] sm:$0x3] 0.0
      %2426 = vst [vmem:[#allocation3 + $0x60] sm:$0xff] 0.0
      %2427 = vst [vmem:[#allocation3 + $0x68] sm:$0xff] 0.0
      %2428 = vst [vmem:[#allocation3 + $0x70] sm:$0x3] 0.0
      %2429 = vst [vmem:[#allocation3 + $0x78] sm:$0xff] 0.0
      %2430 = vst [vmem:[#allocation3 + $0x80] sm:$0xff] 0.0
      %2431 = vst [vmem:[#allocation3 + $0x88] sm:$0x3] 0.0
      %2432 = vst [vmem:[#allocation3 + $0x90] sm:$0xff] 0.0
      %2433 = vst [vmem:[#allocation3 + $0x98] sm:$0xff] 0.0
      %2434 = vst [vmem:[#allocation3 + $0xa0] sm:$0x3] 0.0
      %2435 = vst [vmem:[#allocation3 + $0xa8] sm:$0xff] 0.0
      %2436 = vst [vmem:[#allocation3 + $0xb0] sm:$0xff] 0.0
      %2437 = vst [vmem:[#allocation3 + $0xb8] sm:$0x3] 0.0
      %2438 = vst [vmem:[#allocation3 + $0xc0] sm:$0xff] 0.0
      %2439 = vst [vmem:[#allocation3 + $0xc8] sm:$0xff] 0.0
      %2440 = vst [vmem:[#allocation3 + $0xd0] sm:$0x3] 0.0
      %2441 = vst [vmem:[#allocation3 + $0xd8] sm:$0xff] 0.0
      %2442 = vst [vmem:[#allocation3 + $0xe0] sm:$0xff] 0.0
      %2443 = vst [vmem:[#allocation3 + $0xe8] sm:$0x3] 0.0
      %2444 = vst [vmem:[#allocation3 + $0xf0] sm:$0xff] 0.0
      %2445 = vst [vmem:[#allocation3 + $0xf8] sm:$0xff] 0.0
      %2446 = vst [vmem:[#allocation3 + $0x100] sm:$0x3] 0.0
      %2447 = vst [vmem:[#allocation3 + $0x108] sm:$0xff] 0.0
      %2448 = vst [vmem:[#allocation3 + $0x110] sm:$0xff] 0.0
      %2449 = vst [vmem:[#allocation3 + $0x118] sm:$0x3] 0.0
      %2450 = vst [vmem:[#allocation3 + $0x120] sm:$0xff] 0.0
      %2451 = vst [vmem:[#allocation3 + $0x128] sm:$0xff] 0.0
      %2452 = vst [vmem:[#allocation3 + $0x130] sm:$0x3] 0.0
      %2453 = vst [vmem:[#allocation3 + $0x138] sm:$0xff] 0.0
      %2454 = vst [vmem:[#allocation3 + $0x140] sm:$0xff] 0.0
      %2455 = vst [vmem:[#allocation3 + $0x148] sm:$0x3] 0.0
      %2456 = vst [vmem:[#allocation3 + $0x150] sm:$0xff] 0.0
      %2457 = vst [vmem:[#allocation3 + $0x158] sm:$0xff] 0.0
      %2458 = vst [vmem:[#allocation3 + $0x160] sm:$0x3] 0.0
      %2459 = vst [vmem:[#allocation3 + $0x168] sm:$0xff] 0.0
      %2460 = vst [vmem:[#allocation3 + $0x170] sm:$0xff] 0.0
      %2461 = vst [vmem:[#allocation3 + $0x178] sm:$0x3] 0.0
      %2462 = vst [vmem:[#allocation3 + $0x180] sm:$0xff] 0.0
      %2463 = vst [vmem:[#allocation3 + $0x188] sm:$0xff] 0.0
      %2464 = vst [vmem:[#allocation3 + $0x190] sm:$0x3] 0.0
      %2465 = vst [vmem:[#allocation3 + $0x198] sm:$0xff] 0.0
      %2466 = vst [vmem:[#allocation3 + $0x1a0] sm:$0xff] 0.0
      %2467 = vst [vmem:[#allocation3 + $0x1a8] sm:$0x3] 0.0
      %s2468 = scalar_lea.vmem [#allocation3], 24
      %2469 = vst [vmem:[%s2468 + $0x1] sm:$0xff] %v2382
      %2470 = vst [vmem:[%s2468 + $0x9] sm:$0xff] %v2383
      %2471 = vst [vmem:[%s2468 + $0x19] sm:$0xff] %v2384
      %2472 = vst [vmem:[%s2468 + $0x21] sm:$0xff] %v2385
      %2473 = vst [vmem:[%s2468 + $0x31] sm:$0xff] %v2386
      %2474 = vst [vmem:[%s2468 + $0x39] sm:$0xff] %v2387
      %2475 = vst [vmem:[%s2468 + $0x49] sm:$0xff] %v2388
      %2476 = vst [vmem:[%s2468 + $0x51] sm:$0xff] %v2389
      %2477 = vst [vmem:[%s2468 + $0x61] sm:$0xff] %v2390
      %2478 = vst [vmem:[%s2468 + $0x69] sm:$0xff] %v2391
      %2479 = vst [vmem:[%s2468 + $0x79] sm:$0xff] %v2392
      %2480 = vst [vmem:[%s2468 + $0x81] sm:$0xff] %v2393
      %2481 = vst [vmem:[%s2468 + $0x91] sm:$0xff] %v2394
      %2482 = vst [vmem:[%s2468 + $0x99] sm:$0xff] %v2395
      %2483 = vst [vmem:[%s2468 + $0xa9] sm:$0xff] %v2396
      %2484 = vst [vmem:[%s2468 + $0xb1] sm:$0xff] %v2397
      %2485 = vst [vmem:[%s2468 + $0xc1] sm:$0xff] %v2398
      %2486 = vst [vmem:[%s2468 + $0xc9] sm:$0xff] %v2399
      %2487 = vst [vmem:[%s2468 + $0xd9] sm:$0xff] %v2400
      %2488 = vst [vmem:[%s2468 + $0xe1] sm:$0xff] %v2401
      %2489 = vst [vmem:[%s2468 + $0xf1] sm:$0xff] %v2402
      %2490 = vst [vmem:[%s2468 + $0xf9] sm:$0xff] %v2403
      %2491 = vst [vmem:[%s2468 + $0x109] sm:$0xff] %v2404
      %2492 = vst [vmem:[%s2468 + $0x111] sm:$0xff] %v2405
      %2493 = vst [vmem:[%s2468 + $0x121] sm:$0xff] %v2406
      %2494 = vst [vmem:[%s2468 + $0x129] sm:$0xff] %v2407
      %2495 = vst [vmem:[%s2468 + $0x139] sm:$0xff] %v2408
      %2496 = vst [vmem:[%s2468 + $0x141] sm:$0xff] %v2409
      %2497 = vst [vmem:[%s2468 + $0x151] sm:$0xff] %v2410
      %2498 = vst [vmem:[%s2468 + $0x159] sm:$0xff] %v2411
      %2499 = vst [vmem:[%s2468 + $0x169] sm:$0xff] %v2412
      %2500 = vst [vmem:[%s2468 + $0x171] sm:$0xff] %v2413
      %v2501 = vld [vmem:[#allocation3] sm:$0xff]
      %v2502 = vld [vmem:[#allocation3 + $0x8] sm:$0xff]
      %v2503 = vld [vmem:[#allocation3 + $0x10] sm:$0x3]
      %v2504 = vld [vmem:[#allocation3 + $0x18] sm:$0xff]
      %v2505 = vld [vmem:[#allocation3 + $0x20] sm:$0xff]
      %v2506 = vld [vmem:[#allocation3 + $0x28] sm:$0x3]
      %v2507 = vld [vmem:[#allocation3 + $0x30] sm:$0xff]
      %v2508 = vld [vmem:[#allocation3 + $0x38] sm:$0xff]
      %v2509 = vld [vmem:[#allocation3 + $0x40] sm:$0x3]
      %v2510 = vld [vmem:[#allocation3 + $0x48] sm:$0xff]
      %v2511 = vld [vmem:[#allocation3 + $0x50] sm:$0xff]
      %v2512 = vld [vmem:[#allocation3 + $0x58] sm:$0x3]
      %v2513 = vld [vmem:[#allocation3 + $0x60] sm:$0xff]
      %v2514 = vld [vmem:[#allocation3 + $0x68] sm:$0xff]
      %v2515 = vld [vmem:[#allocation3 + $0x70] sm:$0x3]
      %v2516 = vld [vmem:[#allocation3 + $0x78] sm:$0xff]
      %v2517 = vld [vmem:[#allocation3 + $0x80] sm:$0xff]
      %v2518 = vld [vmem:[#allocation3 + $0x88] sm:$0x3]
      %v2519 = vld [vmem:[#allocation3 + $0x90] sm:$0xff]
      %v2520 = vld [vmem:[#allocation3 + $0x98] sm:$0xff]
      %v2521 = vld [vmem:[#allocation3 + $0xa0] sm:$0x3]
      %v2522 = vld [vmem:[#allocation3 + $0xa8] sm:$0xff]
      %v2523 = vld [vmem:[#allocation3 + $0xb0] sm:$0xff]
      %v2524 = vld [vmem:[#allocation3 + $0xb8] sm:$0x3]
      %v2525 = vld [vmem:[#allocation3 + $0xc0] sm:$0xff]
      %v2526 = vld [vmem:[#allocation3 + $0xc8] sm:$0xff]
      %v2527 = vld [vmem:[#allocation3 + $0xd0] sm:$0x3]
      %v2528 = vld [vmem:[#allocation3 + $0xd8] sm:$0xff]
      %v2529 = vld [vmem:[#allocation3 + $0xe0] sm:$0xff]
      %v2530 = vld [vmem:[#allocation3 + $0xe8] sm:$0x3]
      %v2531 = vld [vmem:[#allocation3 + $0xf0] sm:$0xff]
      %v2532 = vld [vmem:[#allocation3 + $0xf8] sm:$0xff]
      %v2533 = vld [vmem:[#allocation3 + $0x100] sm:$0x3]
      %v2534 = vld [vmem:[#allocation3 + $0x108] sm:$0xff]
      %v2535 = vld [vmem:[#allocation3 + $0x110] sm:$0xff]
      %v2536 = vld [vmem:[#allocation3 + $0x118] sm:$0x3]
      %v2537 = vld [vmem:[#allocation3 + $0x120] sm:$0xff]
      %v2538 = vld [vmem:[#allocation3 + $0x128] sm:$0xff]
      %v2539 = vld [vmem:[#allocation3 + $0x130] sm:$0x3]
      %v2540 = vld [vmem:[#allocation3 + $0x138] sm:$0xff]
      %v2541 = vld [vmem:[#allocation3 + $0x140] sm:$0xff]
      %v2542 = vld [vmem:[#allocation3 + $0x148] sm:$0x3]
      %v2543 = vld [vmem:[#allocation3 + $0x150] sm:$0xff]
      %v2544 = vld [vmem:[#allocation3 + $0x158] sm:$0xff]
      %v2545 = vld [vmem:[#allocation3 + $0x160] sm:$0x3]
      %v2546 = vld [vmem:[#allocation3 + $0x168] sm:$0xff]
      %v2547 = vld [vmem:[#allocation3 + $0x170] sm:$0xff]
      %v2548 = vld [vmem:[#allocation3 + $0x178] sm:$0x3]
      %v2549 = vld [vmem:[#allocation3 + $0x180] sm:$0xff]
      %v2550 = vld [vmem:[#allocation3 + $0x188] sm:$0xff]
      %v2551 = vld [vmem:[#allocation3 + $0x190] sm:$0x3]
      %v2552 = vld [vmem:[#allocation3 + $0x198] sm:$0xff]
      %v2553 = vld [vmem:[#allocation3 + $0x1a0] sm:$0xff]
      %v2554 = vld [vmem:[#allocation3 + $0x1a8] sm:$0x3]
      %v2603 = vrot.slane %v2501, 1
      %v2604 = vrot.slane %v2502, 1
      %v2605 = vsel %vm687, %v2603, %v2604
      %v2606 = vrot.slane %v2503, 1
      %v2607 = vsel %vm687, %v2604, %v2606
      %v2608 = vrot.slane %v2504, 1
      %v2609 = vrot.slane %v2505, 1
      %v2610 = vsel %vm687, %v2608, %v2609
      %v2611 = vrot.slane %v2506, 1
      %v2612 = vsel %vm687, %v2609, %v2611
      %v2613 = vrot.slane %v2507, 1
      %v2614 = vrot.slane %v2508, 1
      %v2615 = vsel %vm687, %v2613, %v2614
      %v2616 = vrot.slane %v2509, 1
      %v2617 = vsel %vm687, %v2614, %v2616
      %v2618 = vrot.slane %v2510, 1
      %v2619 = vrot.slane %v2511, 1
      %v2620 = vsel %vm687, %v2618, %v2619
      %v2621 = vrot.slane %v2512, 1
      %v2622 = vsel %vm687, %v2619, %v2621
      %v2623 = vrot.slane %v2513, 1
      %v2624 = vrot.slane %v2514, 1
      %v2625 = vsel %vm687, %v2623, %v2624
      %v2626 = vrot.slane %v2515, 1
      %v2627 = vsel %vm687, %v2624, %v2626
      %v2628 = vrot.slane %v2516, 1
      %v2629 = vrot.slane %v2517, 1
      %v2630 = vsel %vm687, %v2628, %v2629
      %v2631 = vrot.slane %v2518, 1
      %v2632 = vsel %vm687, %v2629, %v2631
      %v2633 = vrot.slane %v2519, 1
      %v2634 = vrot.slane %v2520, 1
      %v2635 = vsel %vm687, %v2633, %v2634
      %v2636 = vrot.slane %v2521, 1
      %v2637 = vsel %vm687, %v2634, %v2636
      %v2638 = vrot.slane %v2522, 1
      %v2639 = vrot.slane %v2523, 1
      %v2640 = vsel %vm687, %v2638, %v2639
      %v2641 = vrot.slane %v2524, 1
      %v2642 = vsel %vm687, %v2639, %v2641
      %v2643 = vrot.slane %v2525, 1
      %v2644 = vrot.slane %v2526, 1
      %v2645 = vsel %vm687, %v2643, %v2644
      %v2646 = vrot.slane %v2527, 1
      %v2647 = vsel %vm687, %v2644, %v2646
      %v2648 = vrot.slane %v2528, 1
      %v2649 = vrot.slane %v2529, 1
      %v2650 = vsel %vm687, %v2648, %v2649
      %v2651 = vrot.slane %v2530, 1
      %v2652 = vsel %vm687, %v2649, %v2651
      %v2653 = vrot.slane %v2531, 1
      %v2654 = vrot.slane %v2532, 1
      %v2655 = vsel %vm687, %v2653, %v2654
      %v2656 = vrot.slane %v2533, 1
      %v2657 = vsel %vm687, %v2654, %v2656
      %v2658 = vrot.slane %v2534, 1
      %v2659 = vrot.slane %v2535, 1
      %v2660 = vsel %vm687, %v2658, %v2659
      %v2661 = vrot.slane %v2536, 1
      %v2662 = vsel %vm687, %v2659, %v2661
      %v2663 = vrot.slane %v2537, 1
      %v2664 = vrot.slane %v2538, 1
      %v2665 = vsel %vm687, %v2663, %v2664
      %v2666 = vrot.slane %v2539, 1
      %v2667 = vsel %vm687, %v2664, %v2666
      %v2668 = vrot.slane %v2540, 1
      %v2669 = vrot.slane %v2541, 1
      %v2670 = vsel %vm687, %v2668, %v2669
      %v2671 = vrot.slane %v2542, 1
      %v2672 = vsel %vm687, %v2669, %v2671
      %v2673 = vrot.slane %v2543, 1
      %v2674 = vrot.slane %v2544, 1
      %v2675 = vsel %vm687, %v2673, %v2674
      %v2676 = vrot.slane %v2545, 1
      %v2677 = vsel %vm687, %v2674, %v2676
      %v2678 = vrot.slane %v2546, 1
      %v2679 = vrot.slane %v2547, 1
      %v2680 = vsel %vm687, %v2678, %v2679
      %v2681 = vrot.slane %v2548, 1
      %v2682 = vsel %vm687, %v2679, %v2681
      %v2715 = vrot.slane %v2501, 2
      %v2716 = vrot.slane %v2502, 2
      %v2717 = vsel %vm800, %v2715, %v2716
      %v2718 = vrot.slane %v2503, 2
      %v2719 = vsel %vm800, %v2716, %v2718
      %v2720 = vrot.slane %v2504, 2
      %v2721 = vrot.slane %v2505, 2
      %v2722 = vsel %vm800, %v2720, %v2721
      %v2723 = vrot.slane %v2506, 2
      %v2724 = vsel %vm800, %v2721, %v2723
      %v2725 = vrot.slane %v2507, 2
      %v2726 = vrot.slane %v2508, 2
      %v2727 = vsel %vm800, %v2725, %v2726
      %v2728 = vrot.slane %v2509, 2
      %v2729 = vsel %vm800, %v2726, %v2728
      %v2730 = vrot.slane %v2510, 2
      %v2731 = vrot.slane %v2511, 2
      %v2732 = vsel %vm800, %v2730, %v2731
      %v2733 = vrot.slane %v2512, 2
      %v2734 = vsel %vm800, %v2731, %v2733
      %v2735 = vrot.slane %v2513, 2
      %v2736 = vrot.slane %v2514, 2
      %v2737 = vsel %vm800, %v2735, %v2736
      %v2738 = vrot.slane %v2515, 2
      %v2739 = vsel %vm800, %v2736, %v2738
      %v2740 = vrot.slane %v2516, 2
      %v2741 = vrot.slane %v2517, 2
      %v2742 = vsel %vm800, %v2740, %v2741
      %v2743 = vrot.slane %v2518, 2
      %v2744 = vsel %vm800, %v2741, %v2743
      %v2745 = vrot.slane %v2519, 2
      %v2746 = vrot.slane %v2520, 2
      %v2747 = vsel %vm800, %v2745, %v2746
      %v2748 = vrot.slane %v2521, 2
      %v2749 = vsel %vm800, %v2746, %v2748
      %v2750 = vrot.slane %v2522, 2
      %v2751 = vrot.slane %v2523, 2
      %v2752 = vsel %vm800, %v2750, %v2751
      %v2753 = vrot.slane %v2524, 2
      %v2754 = vsel %vm800, %v2751, %v2753
      %v2755 = vrot.slane %v2525, 2
      %v2756 = vrot.slane %v2526, 2
      %v2757 = vsel %vm800, %v2755, %v2756
      %v2758 = vrot.slane %v2527, 2
      %v2759 = vsel %vm800, %v2756, %v2758
      %v2760 = vrot.slane %v2528, 2
      %v2761 = vrot.slane %v2529, 2
      %v2762 = vsel %vm800, %v2760, %v2761
      %v2763 = vrot.slane %v2530, 2
      %v2764 = vsel %vm800, %v2761, %v2763
      %v2765 = vrot.slane %v2531, 2
      %v2766 = vrot.slane %v2532, 2
      %v2767 = vsel %vm800, %v2765, %v2766
      %v2768 = vrot.slane %v2533, 2
      %v2769 = vsel %vm800, %v2766, %v2768
      %v2770 = vrot.slane %v2534, 2
      %v2771 = vrot.slane %v2535, 2
      %v2772 = vsel %vm800, %v2770, %v2771
      %v2773 = vrot.slane %v2536, 2
      %v2774 = vsel %vm800, %v2771, %v2773
      %v2775 = vrot.slane %v2537, 2
      %v2776 = vrot.slane %v2538, 2
      %v2777 = vsel %vm800, %v2775, %v2776
      %v2778 = vrot.slane %v2539, 2
      %v2779 = vsel %vm800, %v2776, %v2778
      %v2780 = vrot.slane %v2540, 2
      %v2781 = vrot.slane %v2541, 2
      %v2782 = vsel %vm800, %v2780, %v2781
      %v2783 = vrot.slane %v2542, 2
      %v2784 = vsel %vm800, %v2781, %v2783
      %v2785 = vrot.slane %v2543, 2
      %v2786 = vrot.slane %v2544, 2
      %v2787 = vsel %vm800, %v2785, %v2786
      %v2788 = vrot.slane %v2545, 2
      %v2789 = vsel %vm800, %v2786, %v2788
      %v2790 = vrot.slane %v2546, 2
      %v2791 = vrot.slane %v2547, 2
      %v2792 = vsel %vm800, %v2790, %v2791
      %v2793 = vrot.slane %v2548, 2
      %v2794 = vsel %vm800, %v2791, %v2793
      %v2830 = vrot.slane %v2549, 1
      %v2831 = vrot.slane %v2550, 1
      %v2832 = vsel %vm687, %v2830, %v2831
      %v2833 = vrot.slane %v2551, 1
      %v2834 = vsel %vm687, %v2831, %v2833
      %v2837 = vrot.slane %v2549, 2
      %v2838 = vrot.slane %v2550, 2
      %v2839 = vsel %vm800, %v2837, %v2838
      %v2840 = vrot.slane %v2551, 2
      %v2841 = vsel %vm800, %v2838, %v2840
      %v2847 = vrot.slane %v2552, 1
      %v2848 = vrot.slane %v2553, 1
      %v2849 = vsel %vm687, %v2847, %v2848
      %v2850 = vrot.slane %v2554, 1
      %v2851 = vsel %vm687, %v2848, %v2850
      %v2854 = vrot.slane %v2552, 2
      %v2855 = vrot.slane %v2553, 2
      %v2856 = vsel %vm800, %v2854, %v2855
      %v2857 = vrot.slane %v2554, 2
      %v2858 = vsel %vm800, %v2855, %v2857
      %v2861 = vpack.c.bf16 %v2502, %v2501
      %v2862 = vpack.c.bf16 %v2607, %v2605
      %v2863 = vpack.c.bf16 %v2719, %v2717
      %v2864 = vpack.c.bf16 %v2505, %v2504
      %v2865 = vpack.c.bf16 %v2612, %v2610
      %v2866 = vpack.c.bf16 %v2724, %v2722
      %v2867 = vpack.c.bf16 %v2508, %v2507
      %v2868 = vpack.c.bf16 %v2617, %v2615
      %v2869 = vpack.c.bf16 %v2729, %v2727
      %v2870 = vpack.c.bf16 %v2511, %v2510
      %v2871 = vpack.c.bf16 %v2622, %v2620
      %v2872 = vpack.c.bf16 %v2734, %v2732
      %v2873 = vpack.c.bf16 %v2514, %v2513
      %v2874 = vpack.c.bf16 %v2627, %v2625
      %v2875 = vpack.c.bf16 %v2739, %v2737
      %v2876 = vpack.c.bf16 %v2517, %v2516
      %v2877 = vpack.c.bf16 %v2632, %v2630
      %v2878 = vpack.c.bf16 %v2744, %v2742
      %v2879 = vpack.c.bf16 %v2520, %v2519
      %v2880 = vpack.c.bf16 %v2637, %v2635
      %v2881 = vpack.c.bf16 %v2749, %v2747
      %v2882 = vpack.c.bf16 %v2523, %v2522
      %v2883 = vpack.c.bf16 %v2642, %v2640
      %v2884 = vpack.c.bf16 %v2754, %v2752
      %v2885 = vpack.c.bf16 %v2526, %v2525
      %v2886 = vpack.c.bf16 %v2647, %v2645
      %v2887 = vpack.c.bf16 %v2759, %v2757
      %v2888 = vpack.c.bf16 %v2529, %v2528
      %v2889 = vpack.c.bf16 %v2652, %v2650
      %v2890 = vpack.c.bf16 %v2764, %v2762
      %v2891 = vpack.c.bf16 %v2532, %v2531
      %v2892 = vpack.c.bf16 %v2657, %v2655
      %v2893 = vpack.c.bf16 %v2769, %v2767
      %v2894 = vpack.c.bf16 %v2535, %v2534
      %v2895 = vpack.c.bf16 %v2662, %v2660
      %v2896 = vpack.c.bf16 %v2774, %v2772
      %v2897 = vpack.c.bf16 %v2538, %v2537
      %v2898 = vpack.c.bf16 %v2667, %v2665
      %v2899 = vpack.c.bf16 %v2779, %v2777
      %v2900 = vpack.c.bf16 %v2541, %v2540
      %v2901 = vpack.c.bf16 %v2672, %v2670
      %v2902 = vpack.c.bf16 %v2784, %v2782
      %v2903 = vpack.c.bf16 %v2544, %v2543
      %v2904 = vpack.c.bf16 %v2677, %v2675
      %v2905 = vpack.c.bf16 %v2789, %v2787
      %v2906 = vpack.c.bf16 %v2547, %v2546
      %v2907 = vpack.c.bf16 %v2682, %v2680
      %v2908 = vpack.c.bf16 %v2794, %v2792
      %v2909 = vpack.c.bf16 %v2550, %v2549
      %v2910 = vpack.c.bf16 %v2834, %v2832
      %v2911 = vpack.c.bf16 %v2841, %v2839
      %v2912 = vpack.c.bf16 %v2553, %v2552
      %v2913 = vpack.c.bf16 %v2851, %v2849
      %v2914 = vpack.c.bf16 %v2858, %v2856
      %v2915 = vld [vmem:[%s4] sm:$0xf]
      %v2916 = vld [vmem:[%s4 + $0x4] sm:$0xf]
      %v2917 = vld [vmem:[%s4 + $0x8] sm:$0xf]
      %v2918 = vld [vmem:[%s4 + $0xc] sm:$0xf]
      %v2919 = vld [vmem:[%s4 + $0x10] sm:$0xf]
      %v2920 = vld [vmem:[%s4 + $0x14] sm:$0xf]
      %v2921 = vld [vmem:[%s4 + $0x18] sm:$0xf]
      %v2922 = vld [vmem:[%s4 + $0x1c] sm:$0xf]
      %v2923 = vld [vmem:[%s4 + $0x20] sm:$0xf]
      %v2924 = vld [vmem:[%s4 + $0x24] sm:$0xf]
      %v2925 = vld [vmem:[%s4 + $0x28] sm:$0xf]
      %v2926 = vld [vmem:[%s4 + $0x2c] sm:$0xf]
      %v2927 = vld [vmem:[%s4 + $0x30] sm:$0xf]
      %v2928 = vld [vmem:[%s4 + $0x34] sm:$0xf]
      %v2929 = vld [vmem:[%s4 + $0x38] sm:$0xf]
      %v2930 = vld [vmem:[%s4 + $0x3c] sm:$0xf]
      %v2931 = vld [vmem:[%s4 + $0x40] sm:$0xf]
      %v2932 = vld [vmem:[%s4 + $0x44] sm:$0xf]
      %v2933 = vld [vmem:[%s4 + $0x48] sm:$0xf]
      %v2934 = vld [vmem:[%s4 + $0x4c] sm:$0xf]
      %v2935 = vld [vmem:[%s4 + $0x50] sm:$0xf]
      %v2936 = vld [vmem:[%s4 + $0x54] sm:$0xf]
      %v2937 = vld [vmem:[%s4 + $0x58] sm:$0xf]
      %v2938 = vld [vmem:[%s4 + $0x5c] sm:$0xf]
      %v2939 = vld [vmem:[%s4 + $0x60] sm:$0xf]
      %v2940 = vld [vmem:[%s4 + $0x64] sm:$0xf]
      %v2941 = vld [vmem:[%s4 + $0x68] sm:$0xf]
      %v2942 = vld [vmem:[%s4 + $0x6c] sm:$0xf]
      %v2943 = vld [vmem:[%s4 + $0x70] sm:$0xf]
      %v2944 = vld [vmem:[%s4 + $0x74] sm:$0xf]
      %v2945 = vld [vmem:[%s4 + $0x78] sm:$0xf]
      %v2946 = vld [vmem:[%s4 + $0x7c] sm:$0xf]
      %v2947 = vld [vmem:[%s4 + $0x80] sm:$0xf]
      %v2948 = vld [vmem:[%s4 + $0x84] sm:$0xf]
      %v2949 = vld [vmem:[%s4 + $0x88] sm:$0xf]
      %v2950 = vld [vmem:[%s4 + $0x8c] sm:$0xf]
      %v2951 = vld [vmem:[%s4 + $0x90] sm:$0xf]
      %v2952 = vld [vmem:[%s4 + $0x94] sm:$0xf]
      %v2953 = vld [vmem:[%s4 + $0x98] sm:$0xf]
      %v2954 = vld [vmem:[%s4 + $0x9c] sm:$0xf]
      %v2955 = vld [vmem:[%s4 + $0xa0] sm:$0xf]
      %v2956 = vld [vmem:[%s4 + $0xa4] sm:$0xf]
      %v2957 = vld [vmem:[%s4 + $0xa8] sm:$0xf]
      %v2958 = vld [vmem:[%s4 + $0xac] sm:$0xf]
      %v2959 = vld [vmem:[%s4 + $0xb0] sm:$0xf]
      %v2960 = vld [vmem:[%s4 + $0xb4] sm:$0xf]
      %v2961 = vld [vmem:[%s4 + $0xb8] sm:$0xf]
      %v2962 = vld [vmem:[%s4 + $0xbc] sm:$0xf]
      %v2963 = vld [vmem:[%s4 + $0xc0] sm:$0xf]
      %v2964 = vld [vmem:[%s4 + $0xc4] sm:$0xf]
      %v2965 = vld [vmem:[%s4 + $0xc8] sm:$0xf]
      %v2966 = vld [vmem:[%s4 + $0xcc] sm:$0xf]
      %v2967 = vld [vmem:[%s4 + $0xd0] sm:$0xf]
      %v2968 = vld [vmem:[%s4 + $0xd4] sm:$0xf]
      %v2969 = vld [vmem:[%s4 + $0xd8] sm:$0xf]
      %v2970 = vld [vmem:[%s4 + $0xdc] sm:$0xf]
      %v2971 = vld [vmem:[%s4 + $0xe0] sm:$0xf]
      %v2972 = vld [vmem:[%s4 + $0xe4] sm:$0xf]
      %v2973 = vld [vmem:[%s4 + $0xe8] sm:$0xf]
      %v2974 = vld [vmem:[%s4 + $0xec] sm:$0xf]
      %v2975 = vld [vmem:[%s4 + $0xf0] sm:$0xf]
      %v2976 = vld [vmem:[%s4 + $0xf4] sm:$0xf]
      %v2977 = vld [vmem:[%s4 + $0xf8] sm:$0xf]
      %v2978 = vld [vmem:[%s4 + $0xfc] sm:$0xf]
      %v2979 = vld [vmem:[%s4 + $0x100] sm:$0xf]
      %v2980 = vld [vmem:[%s4 + $0x104] sm:$0xf]
      %v2981 = vld [vmem:[%s4 + $0x108] sm:$0xf]
      %v2982 = vld [vmem:[%s4 + $0x10c] sm:$0xf]
      %v2983 = vld [vmem:[%s4 + $0x110] sm:$0xf]
      %v2984 = vld [vmem:[%s4 + $0x114] sm:$0xf]
      %v2985 = vld [vmem:[%s4 + $0x118] sm:$0xf]
      %v2986 = vld [vmem:[%s4 + $0x11c] sm:$0xf]
      %v2987 = vld [vmem:[%s4 + $0x120] sm:$0xf]
      %v2988 = vld [vmem:[%s4 + $0x124] sm:$0xf]
      %v2989 = vld [vmem:[%s4 + $0x128] sm:$0xf]
      %v2990 = vld [vmem:[%s4 + $0x12c] sm:$0xf]
      %v2991 = vld [vmem:[%s4 + $0x130] sm:$0xf]
      %v2992 = vld [vmem:[%s4 + $0x134] sm:$0xf]
      %v2993 = vld [vmem:[%s4 + $0x138] sm:$0xf]
      %v2994 = vld [vmem:[%s4 + $0x13c] sm:$0xf]
      %v2995 = vld [vmem:[%s4 + $0x140] sm:$0xf]
      %v2996 = vld [vmem:[%s4 + $0x144] sm:$0xf]
      %v2997 = vld [vmem:[%s4 + $0x148] sm:$0xf]
      %v2998 = vld [vmem:[%s4 + $0x14c] sm:$0xf]
      %v2999 = vld [vmem:[%s4 + $0x150] sm:$0xf]
      %v3000 = vld [vmem:[%s4 + $0x154] sm:$0xf]
      %v3001 = vld [vmem:[%s4 + $0x158] sm:$0xf]
      %v3002 = vld [vmem:[%s4 + $0x15c] sm:$0xf]
      %v3003 = vld [vmem:[%s4 + $0x160] sm:$0xf]
      %v3004 = vld [vmem:[%s4 + $0x164] sm:$0xf]
      %v3005 = vld [vmem:[%s4 + $0x168] sm:$0xf]
      %v3006 = vld [vmem:[%s4 + $0x16c] sm:$0xf]
      %v3007 = vld [vmem:[%s4 + $0x170] sm:$0xf]
      %v3008 = vld [vmem:[%s4 + $0x174] sm:$0xf]
      %v3009 = vld [vmem:[%s4 + $0x178] sm:$0xf]
      %v3010 = vld [vmem:[%s4 + $0x17c] sm:$0xf]
      %v3011 = vld [vmem:[%s4 + $0x180] sm:$0xf]
      %v3012 = vld [vmem:[%s4 + $0x184] sm:$0xf]
      %v3013 = vld [vmem:[%s4 + $0x188] sm:$0xf]
      %v3014 = vld [vmem:[%s4 + $0x18c] sm:$0xf]
      %v3015 = vld [vmem:[%s4 + $0x190] sm:$0xf]
      %v3016 = vld [vmem:[%s4 + $0x194] sm:$0xf]
      %v3017 = vld [vmem:[%s4 + $0x198] sm:$0xf]
      %v3018 = vld [vmem:[%s4 + $0x19c] sm:$0xf]
      %v3019 = vld [vmem:[%s4 + $0x1a0] sm:$0xf]
      %v3020 = vld [vmem:[%s4 + $0x1a4] sm:$0xf]
      %v3021 = vld [vmem:[%s4 + $0x1a8] sm:$0xf]
      %v3022 = vld [vmem:[%s4 + $0x1ac] sm:$0xf]
      %v3023 = vld [vmem:[%s4 + $0x1b0] sm:$0xf]
      %v3024 = vld [vmem:[%s4 + $0x1b4] sm:$0xf]
      %v3025 = vld [vmem:[%s4 + $0x1b8] sm:$0xf]
      %v3026 = vld [vmem:[%s4 + $0x1bc] sm:$0xf]
      %v3027 = vld [vmem:[%s4 + $0x1c0] sm:$0xf]
      %v3028 = vld [vmem:[%s4 + $0x1c4] sm:$0xf]
      %v3029 = vld [vmem:[%s4 + $0x1c8] sm:$0xf]
      %v3030 = vld [vmem:[%s4 + $0x1cc] sm:$0xf]
      %v3031 = vld [vmem:[%s4 + $0x1d0] sm:$0xf]
      %v3032 = vld [vmem:[%s4 + $0x1d4] sm:$0xf]
      %v3033 = vld [vmem:[%s4 + $0x1d8] sm:$0xf]
      %v3034 = vld [vmem:[%s4 + $0x1dc] sm:$0xf]
      %v3035 = vld [vmem:[%s4 + $0x1e0] sm:$0xf]
      %v3036 = vld [vmem:[%s4 + $0x1e4] sm:$0xf]
      %v3037 = vld [vmem:[%s4 + $0x1e8] sm:$0xf]
      %v3038 = vld [vmem:[%s4 + $0x1ec] sm:$0xf]
      %v3039 = vld [vmem:[%s4 + $0x1f0] sm:$0xf]
      %v3040 = vld [vmem:[%s4 + $0x1f4] sm:$0xf]
      %v3041 = vld [vmem:[%s4 + $0x1f8] sm:$0xf]
      %v3042 = vld [vmem:[%s4 + $0x1fc] sm:$0xf]
      %v3043 = vld [vmem:[%s4 + $0x200] sm:$0xf]
      %v3044 = vld [vmem:[%s4 + $0x204] sm:$0xf]
      %v3045 = vld [vmem:[%s4 + $0x208] sm:$0xf]
      %v3046 = vld [vmem:[%s4 + $0x20c] sm:$0xf]
      %v3047 = vld [vmem:[%s4 + $0x210] sm:$0xf]
      %v3048 = vld [vmem:[%s4 + $0x214] sm:$0xf]
      %v3049 = vld [vmem:[%s4 + $0x218] sm:$0xf]
      %v3050 = vld [vmem:[%s4 + $0x21c] sm:$0xf]
      %v3051 = vld [vmem:[%s4 + $0x220] sm:$0xf]
      %v3052 = vld [vmem:[%s4 + $0x224] sm:$0xf]
      %v3053 = vld [vmem:[%s4 + $0x228] sm:$0xf]
      %v3054 = vld [vmem:[%s4 + $0x22c] sm:$0xf]
      %v3055 = vld [vmem:[%s4 + $0x230] sm:$0xf]
      %v3056 = vld [vmem:[%s4 + $0x234] sm:$0xf]
      %v3057 = vld [vmem:[%s4 + $0x238] sm:$0xf]
      %v3058 = vld [vmem:[%s4 + $0x23c] sm:$0xf]
      %v3059 = vld [vmem:[%s5] sm:$0x1]
      %v3061 = vperm.slane %v3059, 0
      %v3207 = vunpack.c.l.b16 %v2915
      %v3208 = vunpack.c.l.b16 %v2916
      %v3209 = vunpack.c.l.b16 %v2917
      %v3210 = vunpack.c.l.b16 %v2918
      %v3211 = vunpack.c.l.b16 %v2919
      %v3212 = vunpack.c.l.b16 %v2920
      %v3213 = vunpack.c.l.b16 %v2921
      %v3214 = vunpack.c.l.b16 %v2922
      %v3215 = vunpack.c.l.b16 %v2923
      %v3216 = vunpack.c.l.b16 %v2924
      %v3217 = vunpack.c.l.b16 %v2925
      %v3218 = vunpack.c.l.b16 %v2926
      %v3219 = vunpack.c.l.b16 %v2927
      %v3220 = vunpack.c.l.b16 %v2928
      %v3221 = vunpack.c.l.b16 %v2929
      %v3222 = vunpack.c.l.b16 %v2930
      %v3223 = vunpack.c.l.b16 %v2931
      %v3224 = vunpack.c.l.b16 %v2932
      %v3225 = vunpack.c.l.b16 %v2933
      %v3226 = vunpack.c.l.b16 %v2934
      %v3227 = vunpack.c.l.b16 %v2935
      %v3228 = vunpack.c.l.b16 %v2936
      %v3229 = vunpack.c.l.b16 %v2937
      %v3230 = vunpack.c.l.b16 %v2938
      %v3231 = vunpack.c.l.b16 %v2939
      %v3232 = vunpack.c.l.b16 %v2940
      %v3233 = vunpack.c.l.b16 %v2941
      %v3234 = vunpack.c.l.b16 %v2942
      %v3235 = vunpack.c.l.b16 %v2943
      %v3236 = vunpack.c.l.b16 %v2944
      %v3237 = vunpack.c.l.b16 %v2945
      %v3238 = vunpack.c.l.b16 %v2946
      %v3239 = vunpack.c.l.b16 %v2947
      %v3240 = vunpack.c.l.b16 %v2948
      %v3241 = vunpack.c.l.b16 %v2949
      %v3242 = vunpack.c.l.b16 %v2950
      %v3243 = vunpack.c.l.b16 %v2951
      %v3244 = vunpack.c.l.b16 %v2952
      %v3245 = vunpack.c.l.b16 %v2953
      %v3246 = vunpack.c.l.b16 %v2954
      %v3247 = vunpack.c.l.b16 %v2955
      %v3248 = vunpack.c.l.b16 %v2956
      %v3249 = vunpack.c.l.b16 %v2957
      %v3250 = vunpack.c.l.b16 %v2958
      %v3251 = vunpack.c.l.b16 %v2959
      %v3252 = vunpack.c.l.b16 %v2960
      %v3253 = vunpack.c.l.b16 %v2961
      %v3254 = vunpack.c.l.b16 %v2962
      %v3255 = vunpack.c.l.b16 %v2963
      %v3256 = vunpack.c.l.b16 %v2964
      %v3257 = vunpack.c.l.b16 %v2965
      %v3258 = vunpack.c.l.b16 %v2966
      %v3259 = vunpack.c.l.b16 %v2967
      %v3260 = vunpack.c.l.b16 %v2968
      %v3261 = vunpack.c.l.b16 %v2969
      %v3262 = vunpack.c.l.b16 %v2970
      %v3263 = vunpack.c.l.b16 %v2971
      %v3264 = vunpack.c.l.b16 %v2972
      %v3265 = vunpack.c.l.b16 %v2973
      %v3266 = vunpack.c.l.b16 %v2974
      %v3267 = vunpack.c.l.b16 %v2975
      %v3268 = vunpack.c.l.b16 %v2976
      %v3269 = vunpack.c.l.b16 %v2977
      %v3270 = vunpack.c.l.b16 %v2978
      %v3271 = vunpack.c.l.b16 %v2979
      %v3272 = vunpack.c.l.b16 %v2980
      %v3273 = vunpack.c.l.b16 %v2981
      %v3274 = vunpack.c.l.b16 %v2982
      %v3275 = vunpack.c.l.b16 %v2983
      %v3276 = vunpack.c.l.b16 %v2984
      %v3277 = vunpack.c.l.b16 %v2985
      %v3278 = vunpack.c.l.b16 %v2986
      %v3279 = vunpack.c.l.b16 %v2987
      %v3280 = vunpack.c.l.b16 %v2988
      %v3281 = vunpack.c.l.b16 %v2989
      %v3282 = vunpack.c.l.b16 %v2990
      %v3283 = vunpack.c.l.b16 %v2991
      %v3284 = vunpack.c.l.b16 %v2992
      %v3285 = vunpack.c.l.b16 %v2993
      %v3286 = vunpack.c.l.b16 %v2994
      %v3287 = vunpack.c.l.b16 %v2995
      %v3288 = vunpack.c.l.b16 %v2996
      %v3289 = vunpack.c.l.b16 %v2997
      %v3290 = vunpack.c.l.b16 %v2998
      %v3291 = vunpack.c.l.b16 %v2999
      %v3292 = vunpack.c.l.b16 %v3000
      %v3293 = vunpack.c.l.b16 %v3001
      %v3294 = vunpack.c.l.b16 %v3002
      %v3295 = vunpack.c.l.b16 %v3003
      %v3296 = vunpack.c.l.b16 %v3004
      %v3297 = vunpack.c.l.b16 %v3005
      %v3298 = vunpack.c.l.b16 %v3006
      %v3299 = vunpack.c.l.b16 %v3007
      %v3300 = vunpack.c.l.b16 %v3008
      %v3301 = vunpack.c.l.b16 %v3009
      %v3302 = vunpack.c.l.b16 %v3010
      %v3303 = vunpack.c.l.b16 %v3011
      %v3304 = vunpack.c.l.b16 %v3012
      %v3305 = vunpack.c.l.b16 %v3013
      %v3306 = vunpack.c.l.b16 %v3014
      %v3307 = vunpack.c.l.b16 %v3015
      %v3308 = vunpack.c.l.b16 %v3016
      %v3309 = vunpack.c.l.b16 %v3017
      %v3310 = vunpack.c.l.b16 %v3018
      %v3311 = vunpack.c.l.b16 %v3019
      %v3312 = vunpack.c.l.b16 %v3020
      %v3313 = vunpack.c.l.b16 %v3021
      %v3314 = vunpack.c.l.b16 %v3022
      %v3315 = vunpack.c.l.b16 %v3023
      %v3316 = vunpack.c.l.b16 %v3024
      %v3317 = vunpack.c.l.b16 %v3025
      %v3318 = vunpack.c.l.b16 %v3026
      %v3319 = vunpack.c.l.b16 %v3027
      %v3320 = vunpack.c.l.b16 %v3028
      %v3321 = vunpack.c.l.b16 %v3029
      %v3322 = vunpack.c.l.b16 %v3030
      %v3323 = vunpack.c.l.b16 %v3031
      %v3324 = vunpack.c.l.b16 %v3032
      %v3325 = vunpack.c.l.b16 %v3033
      %v3326 = vunpack.c.l.b16 %v3034
      %v3327 = vunpack.c.l.b16 %v3035
      %v3328 = vunpack.c.l.b16 %v3036
      %v3329 = vunpack.c.l.b16 %v3037
      %v3330 = vunpack.c.l.b16 %v3038
      %v3331 = vunpack.c.l.b16 %v3039
      %v3332 = vunpack.c.l.b16 %v3040
      %v3333 = vunpack.c.l.b16 %v3041
      %v3334 = vunpack.c.l.b16 %v3042
      %v3335 = vunpack.c.l.b16 %v3043
      %v3336 = vunpack.c.l.b16 %v3044
      %v3337 = vunpack.c.l.b16 %v3045
      %v3338 = vunpack.c.l.b16 %v3046
      %v3339 = vunpack.c.l.b16 %v3047
      %v3340 = vunpack.c.l.b16 %v3048
      %v3341 = vunpack.c.l.b16 %v3049
      %v3342 = vunpack.c.l.b16 %v3050
      %v3343 = vunpack.c.l.b16 %v3051
      %v3344 = vunpack.c.l.b16 %v3052
      %v3345 = vunpack.c.l.b16 %v3053
      %v3346 = vunpack.c.l.b16 %v3054
      %v3347 = vunpack.c.l.b16 %v3055
      %v3348 = vunpack.c.l.b16 %v3056
      %v3349 = vunpack.c.l.b16 %v3057
      %v3350 = vunpack.c.l.b16 %v3058
      %v3351 = vpack.c.b16 %v3208, %v3207
      %v3352 = vpack.c.b16 %v3210, %v3209
      %v3353 = vpack.c.b16 %v3212, %v3211
      %v3354 = vpack.c.b16 %v3214, %v3213
      %v3355 = vpack.c.b16 %v3216, %v3215
      %v3356 = vpack.c.b16 %v3218, %v3217
      %v3357 = vpack.c.b16 %v3220, %v3219
      %v3358 = vpack.c.b16 %v3222, %v3221
      %v3359 = vpack.c.b16 %v3224, %v3223
      %v3360 = vpack.c.b16 %v3226, %v3225
      %v3361 = vpack.c.b16 %v3228, %v3227
      %v3362 = vpack.c.b16 %v3230, %v3229
      %v3363 = vpack.c.b16 %v3232, %v3231
      %v3364 = vpack.c.b16 %v3234, %v3233
      %v3365 = vpack.c.b16 %v3236, %v3235
      %v3366 = vpack.c.b16 %v3238, %v3237
      %v3367 = vpack.c.b16 %v3240, %v3239
      %v3368 = vpack.c.b16 %v3242, %v3241
      %v3369 = vpack.c.b16 %v3244, %v3243
      %v3370 = vpack.c.b16 %v3246, %v3245
      %v3371 = vpack.c.b16 %v3248, %v3247
      %v3372 = vpack.c.b16 %v3250, %v3249
      %v3373 = vpack.c.b16 %v3252, %v3251
      %v3374 = vpack.c.b16 %v3254, %v3253
      %v3375 = vpack.c.b16 %v3256, %v3255
      %v3376 = vpack.c.b16 %v3258, %v3257
      %v3377 = vpack.c.b16 %v3260, %v3259
      %v3378 = vpack.c.b16 %v3262, %v3261
      %v3379 = vpack.c.b16 %v3264, %v3263
      %v3380 = vpack.c.b16 %v3266, %v3265
      %v3381 = vpack.c.b16 %v3268, %v3267
      %v3382 = vpack.c.b16 %v3270, %v3269
      %v3383 = vpack.c.b16 %v3272, %v3271
      %v3384 = vpack.c.b16 %v3274, %v3273
      %v3385 = vpack.c.b16 %v3276, %v3275
      %v3386 = vpack.c.b16 %v3278, %v3277
      %v3387 = vpack.c.b16 %v3280, %v3279
      %v3388 = vpack.c.b16 %v3282, %v3281
      %v3389 = vpack.c.b16 %v3284, %v3283
      %v3390 = vpack.c.b16 %v3286, %v3285
      %v3391 = vpack.c.b16 %v3288, %v3287
      %v3392 = vpack.c.b16 %v3290, %v3289
      %v3393 = vpack.c.b16 %v3292, %v3291
      %v3394 = vpack.c.b16 %v3294, %v3293
      %v3395 = vpack.c.b16 %v3296, %v3295
      %v3396 = vpack.c.b16 %v3298, %v3297
      %v3397 = vpack.c.b16 %v3300, %v3299
      %v3398 = vpack.c.b16 %v3302, %v3301
      %v3399 = vpack.c.b16 %v3304, %v3303
      %v3400 = vpack.c.b16 %v3306, %v3305
      %v3401 = vpack.c.b16 %v3308, %v3307
      %v3402 = vpack.c.b16 %v3310, %v3309
      %v3403 = vpack.c.b16 %v3312, %v3311
      %v3404 = vpack.c.b16 %v3314, %v3313
      %v3405 = vpack.c.b16 %v3316, %v3315
      %v3406 = vpack.c.b16 %v3318, %v3317
      %v3407 = vpack.c.b16 %v3320, %v3319
      %v3408 = vpack.c.b16 %v3322, %v3321
      %v3409 = vpack.c.b16 %v3324, %v3323
      %v3410 = vpack.c.b16 %v3326, %v3325
      %v3411 = vpack.c.b16 %v3328, %v3327
      %v3412 = vpack.c.b16 %v3330, %v3329
      %v3413 = vpack.c.b16 %v3332, %v3331
      %v3414 = vpack.c.b16 %v3334, %v3333
      %v3415 = vpack.c.b16 %v3336, %v3335
      %v3416 = vpack.c.b16 %v3338, %v3337
      %v3417 = vpack.c.b16 %v3340, %v3339
      %v3418 = vpack.c.b16 %v3342, %v3341
      %v3419 = vpack.c.b16 %v3344, %v3343
      %v3420 = vpack.c.b16 %v3346, %v3345
      %v3421 = vpack.c.b16 %v3348, %v3347
      %v3422 = vpack.c.b16 %v3350, %v3349
      %3495 = vmatpush.bf16.msra.mxu0 %v3358
      %3496 = vmatpush.bf16.msra.mxu0 %v3357
      %3497 = vmatpush.bf16.msra.mxu0 %v3356
      %3498 = vmatpush.bf16.msra.mxu0 %v3355
      %3499 = vmatpush.bf16.msra.mxu0 %v3354
      %3500 = vmatpush.bf16.msra.mxu0 %v3353
      %3501 = vmatpush.bf16.msra.mxu0 %v3352
      %3502 = vmatpush.bf16.msra.mxu0 %v3351
      %3503 = vmatmul.bf16.gmra.mxu0 %v2861
      %v3504 = vpop.f32.mrf.mxu0
      %v3505 = vadd.f32 %v3061, %v3504
      %v3506 = vpop.f32.mrf.mxu0
      %v3507 = vadd.f32 %v3061, %v3506
      %3508 = vmatmul.bf16.gmra.mxu0 %v2864
      %v3509 = vpop.f32.mrf.mxu0
      %v3510 = vadd.f32 %v3061, %v3509
      %v3511 = vpop.f32.mrf.mxu0
      %v3512 = vadd.f32 %v3061, %v3511
      %3513 = vmatmul.bf16.gmra.mxu0 %v2867
      %v3514 = vpop.f32.mrf.mxu0
      %v3515 = vadd.f32 %v3061, %v3514
      %v3516 = vpop.f32.mrf.mxu0
      %v3517 = vadd.f32 %v3061, %v3516
      %3518 = vmatmul.bf16.gmra.mxu0 %v2870
      %v3519 = vpop.f32.mrf.mxu0
      %v3520 = vadd.f32 %v3061, %v3519
      %v3521 = vpop.f32.mrf.mxu0
      %v3522 = vadd.f32 %v3061, %v3521
      %3523 = vmatmul.bf16.gmra.mxu0 %v2873
      %v3524 = vpop.f32.mrf.mxu0
      %v3525 = vadd.f32 %v3061, %v3524
      %v3526 = vpop.f32.mrf.mxu0
      %v3527 = vadd.f32 %v3061, %v3526
      %3528 = vmatmul.bf16.gmra.mxu0 %v2876
      %v3529 = vpop.f32.mrf.mxu0
      %v3530 = vadd.f32 %v3061, %v3529
      %v3531 = vpop.f32.mrf.mxu0
      %v3532 = vadd.f32 %v3061, %v3531
      %3533 = vmatmul.bf16.gmra.mxu0 %v2879
      %v3534 = vpop.f32.mrf.mxu0
      %v3535 = vadd.f32 %v3061, %v3534
      %v3536 = vpop.f32.mrf.mxu0
      %v3537 = vadd.f32 %v3061, %v3536
      %3538 = vmatmul.bf16.gmra.mxu0 %v2882
      %v3539 = vpop.f32.mrf.mxu0
      %v3540 = vadd.f32 %v3061, %v3539
      %v3541 = vpop.f32.mrf.mxu0
      %v3542 = vadd.f32 %v3061, %v3541
      %3543 = vmatmul.bf16.gmra.mxu0 %v2885
      %v3544 = vpop.f32.mrf.mxu0
      %v3545 = vadd.f32 %v3061, %v3544
      %v3546 = vpop.f32.mrf.mxu0
      %v3547 = vadd.f32 %v3061, %v3546
      %3548 = vmatmul.bf16.gmra.mxu0 %v2888
      %v3549 = vpop.f32.mrf.mxu0
      %v3550 = vadd.f32 %v3061, %v3549
      %v3551 = vpop.f32.mrf.mxu0
      %v3552 = vadd.f32 %v3061, %v3551
      %3553 = vmatmul.bf16.gmra.mxu0 %v2891
      %v3554 = vpop.f32.mrf.mxu0
      %v3555 = vadd.f32 %v3061, %v3554
      %v3556 = vpop.f32.mrf.mxu0
      %v3557 = vadd.f32 %v3061, %v3556
      %3558 = vmatmul.bf16.gmra.mxu0 %v2894
      %v3559 = vpop.f32.mrf.mxu0
      %v3560 = vadd.f32 %v3061, %v3559
      %v3561 = vpop.f32.mrf.mxu0
      %v3562 = vadd.f32 %v3061, %v3561
      %3563 = vmatmul.bf16.gmra.mxu0 %v2897
      %v3564 = vpop.f32.mrf.mxu0
      %v3565 = vadd.f32 %v3061, %v3564
      %v3566 = vpop.f32.mrf.mxu0
      %v3567 = vadd.f32 %v3061, %v3566
      %3568 = vmatmul.bf16.gmra.mxu0 %v2900
      %v3569 = vpop.f32.mrf.mxu0
      %v3570 = vadd.f32 %v3061, %v3569
      %v3571 = vpop.f32.mrf.mxu0
      %v3572 = vadd.f32 %v3061, %v3571
      %3573 = vmatmul.bf16.gmra.mxu0 %v2903
      %v3574 = vpop.f32.mrf.mxu0
      %v3575 = vadd.f32 %v3061, %v3574
      %v3576 = vpop.f32.mrf.mxu0
      %v3577 = vadd.f32 %v3061, %v3576
      %3578 = vmatmul.bf16.gmra.mxu0 %v2906
      %v3579 = vpop.f32.mrf.mxu0
      %v3580 = vadd.f32 %v3061, %v3579
      %v3581 = vpop.f32.mrf.mxu0
      %v3582 = vadd.f32 %v3061, %v3581
      %3583 = vdwg.mxu0
      %3584 = vmatpush.bf16.msra.mxu0 %v3366
      %3585 = vmatpush.bf16.msra.mxu0 %v3365
      %3586 = vmatpush.bf16.msra.mxu0 %v3364
      %3587 = vmatpush.bf16.msra.mxu0 %v3363
      %3588 = vmatpush.bf16.msra.mxu0 %v3362
      %3589 = vmatpush.bf16.msra.mxu0 %v3361
      %3590 = vmatpush.bf16.msra.mxu0 %v3360
      %3591 = vmatpush.bf16.msra.mxu0 %v3359
      %3592 = vmatmul.bf16.gmra.mxu0 %v2862
      %v3593 = vpop.f32.mrf.mxu0
      %v3594 = vadd.f32 %v3505, %v3593
      %v3595 = vpop.f32.mrf.mxu0
      %v3596 = vadd.f32 %v3507, %v3595
      %3597 = vmatmul.bf16.gmra.mxu0 %v2865
      %v3598 = vpop.f32.mrf.mxu0
      %v3599 = vadd.f32 %v3510, %v3598
      %v3600 = vpop.f32.mrf.mxu0
      %v3601 = vadd.f32 %v3512, %v3600
      %3602 = vmatmul.bf16.gmra.mxu0 %v2868
      %v3603 = vpop.f32.mrf.mxu0
      %v3604 = vadd.f32 %v3515, %v3603
      %v3605 = vpop.f32.mrf.mxu0
      %v3606 = vadd.f32 %v3517, %v3605
      %3607 = vmatmul.bf16.gmra.mxu0 %v2871
      %v3608 = vpop.f32.mrf.mxu0
      %v3609 = vadd.f32 %v3520, %v3608
      %v3610 = vpop.f32.mrf.mxu0
      %v3611 = vadd.f32 %v3522, %v3610
      %3612 = vmatmul.bf16.gmra.mxu0 %v2874
      %v3613 = vpop.f32.mrf.mxu0
      %v3614 = vadd.f32 %v3525, %v3613
      %v3615 = vpop.f32.mrf.mxu0
      %v3616 = vadd.f32 %v3527, %v3615
      %3617 = vmatmul.bf16.gmra.mxu0 %v2877
      %v3618 = vpop.f32.mrf.mxu0
      %v3619 = vadd.f32 %v3530, %v3618
      %v3620 = vpop.f32.mrf.mxu0
      %v3621 = vadd.f32 %v3532, %v3620
      %3622 = vmatmul.bf16.gmra.mxu0 %v2880
      %v3623 = vpop.f32.mrf.mxu0
      %v3624 = vadd.f32 %v3535, %v3623
      %v3625 = vpop.f32.mrf.mxu0
      %v3626 = vadd.f32 %v3537, %v3625
      %3627 = vmatmul.bf16.gmra.mxu0 %v2883
      %v3628 = vpop.f32.mrf.mxu0
      %v3629 = vadd.f32 %v3540, %v3628
      %v3630 = vpop.f32.mrf.mxu0
      %v3631 = vadd.f32 %v3542, %v3630
      %3632 = vmatmul.bf16.gmra.mxu0 %v2886
      %v3633 = vpop.f32.mrf.mxu0
      %v3634 = vadd.f32 %v3545, %v3633
      %v3635 = vpop.f32.mrf.mxu0
      %v3636 = vadd.f32 %v3547, %v3635
      %3637 = vmatmul.bf16.gmra.mxu0 %v2889
      %v3638 = vpop.f32.mrf.mxu0
      %v3639 = vadd.f32 %v3550, %v3638
      %v3640 = vpop.f32.mrf.mxu0
      %v3641 = vadd.f32 %v3552, %v3640
      %3642 = vmatmul.bf16.gmra.mxu0 %v2892
      %v3643 = vpop.f32.mrf.mxu0
      %v3644 = vadd.f32 %v3555, %v3643
      %v3645 = vpop.f32.mrf.mxu0
      %v3646 = vadd.f32 %v3557, %v3645
      %3647 = vmatmul.bf16.gmra.mxu0 %v2895
      %v3648 = vpop.f32.mrf.mxu0
      %v3649 = vadd.f32 %v3560, %v3648
      %v3650 = vpop.f32.mrf.mxu0
      %v3651 = vadd.f32 %v3562, %v3650
      %3652 = vmatmul.bf16.gmra.mxu0 %v2898
      %v3653 = vpop.f32.mrf.mxu0
      %v3654 = vadd.f32 %v3565, %v3653
      %v3655 = vpop.f32.mrf.mxu0
      %v3656 = vadd.f32 %v3567, %v3655
      %3657 = vmatmul.bf16.gmra.mxu0 %v2901
      %v3658 = vpop.f32.mrf.mxu0
      %v3659 = vadd.f32 %v3570, %v3658
      %v3660 = vpop.f32.mrf.mxu0
      %v3661 = vadd.f32 %v3572, %v3660
      %3662 = vmatmul.bf16.gmra.mxu0 %v2904
      %v3663 = vpop.f32.mrf.mxu0
      %v3664 = vadd.f32 %v3575, %v3663
      %v3665 = vpop.f32.mrf.mxu0
      %v3666 = vadd.f32 %v3577, %v3665
      %3667 = vmatmul.bf16.gmra.mxu0 %v2907
      %v3668 = vpop.f32.mrf.mxu0
      %v3669 = vadd.f32 %v3580, %v3668
      %v3670 = vpop.f32.mrf.mxu0
      %v3671 = vadd.f32 %v3582, %v3670
      %3672 = vdwg.mxu0
      %3673 = vmatpush.bf16.msra.mxu0 %v3374
      %3674 = vmatpush.bf16.msra.mxu0 %v3373
      %3675 = vmatpush.bf16.msra.mxu0 %v3372
      %3676 = vmatpush.bf16.msra.mxu0 %v3371
      %3677 = vmatpush.bf16.msra.mxu0 %v3370
      %3678 = vmatpush.bf16.msra.mxu0 %v3369
      %3679 = vmatpush.bf16.msra.mxu0 %v3368
      %3680 = vmatpush.bf16.msra.mxu0 %v3367
      %3681 = vmatmul.bf16.gmra.mxu0 %v2863
      %v3682 = vpop.f32.mrf.mxu0
      %v3683 = vadd.f32 %v3594, %v3682
      %v3684 = vpop.f32.mrf.mxu0
      %v3685 = vadd.f32 %v3596, %v3684
      %3686 = vmatmul.bf16.gmra.mxu0 %v2866
      %v3687 = vpop.f32.mrf.mxu0
      %v3688 = vadd.f32 %v3599, %v3687
      %v3689 = vpop.f32.mrf.mxu0
      %v3690 = vadd.f32 %v3601, %v3689
      %3691 = vmatmul.bf16.gmra.mxu0 %v2869
      %v3692 = vpop.f32.mrf.mxu0
      %v3693 = vadd.f32 %v3604, %v3692
      %v3694 = vpop.f32.mrf.mxu0
      %v3695 = vadd.f32 %v3606, %v3694
      %3696 = vmatmul.bf16.gmra.mxu0 %v2872
      %v3697 = vpop.f32.mrf.mxu0
      %v3698 = vadd.f32 %v3609, %v3697
      %v3699 = vpop.f32.mrf.mxu0
      %v3700 = vadd.f32 %v3611, %v3699
      %3701 = vmatmul.bf16.gmra.mxu0 %v2875
      %v3702 = vpop.f32.mrf.mxu0
      %v3703 = vadd.f32 %v3614, %v3702
      %v3704 = vpop.f32.mrf.mxu0
      %v3705 = vadd.f32 %v3616, %v3704
      %3706 = vmatmul.bf16.gmra.mxu0 %v2878
      %v3707 = vpop.f32.mrf.mxu0
      %v3708 = vadd.f32 %v3619, %v3707
      %v3709 = vpop.f32.mrf.mxu0
      %v3710 = vadd.f32 %v3621, %v3709
      %3711 = vmatmul.bf16.gmra.mxu0 %v2881
      %v3712 = vpop.f32.mrf.mxu0
      %v3713 = vadd.f32 %v3624, %v3712
      %v3714 = vpop.f32.mrf.mxu0
      %v3715 = vadd.f32 %v3626, %v3714
      %3716 = vmatmul.bf16.gmra.mxu0 %v2884
      %v3717 = vpop.f32.mrf.mxu0
      %v3718 = vadd.f32 %v3629, %v3717
      %v3719 = vpop.f32.mrf.mxu0
      %v3720 = vadd.f32 %v3631, %v3719
      %3721 = vmatmul.bf16.gmra.mxu0 %v2887
      %v3722 = vpop.f32.mrf.mxu0
      %v3723 = vadd.f32 %v3634, %v3722
      %v3724 = vpop.f32.mrf.mxu0
      %v3725 = vadd.f32 %v3636, %v3724
      %3726 = vmatmul.bf16.gmra.mxu0 %v2890
      %v3727 = vpop.f32.mrf.mxu0
      %v3728 = vadd.f32 %v3639, %v3727
      %v3729 = vpop.f32.mrf.mxu0
      %v3730 = vadd.f32 %v3641, %v3729
      %3731 = vmatmul.bf16.gmra.mxu0 %v2893
      %v3732 = vpop.f32.mrf.mxu0
      %v3733 = vadd.f32 %v3644, %v3732
      %v3734 = vpop.f32.mrf.mxu0
      %v3735 = vadd.f32 %v3646, %v3734
      %3736 = vmatmul.bf16.gmra.mxu0 %v2896
      %v3737 = vpop.f32.mrf.mxu0
      %v3738 = vadd.f32 %v3649, %v3737
      %v3739 = vpop.f32.mrf.mxu0
      %v3740 = vadd.f32 %v3651, %v3739
      %3741 = vmatmul.bf16.gmra.mxu0 %v2899
      %v3742 = vpop.f32.mrf.mxu0
      %v3743 = vadd.f32 %v3654, %v3742
      %v3744 = vpop.f32.mrf.mxu0
      %v3745 = vadd.f32 %v3656, %v3744
      %3746 = vmatmul.bf16.gmra.mxu0 %v2902
      %v3747 = vpop.f32.mrf.mxu0
      %v3748 = vadd.f32 %v3659, %v3747
      %v3749 = vpop.f32.mrf.mxu0
      %v3750 = vadd.f32 %v3661, %v3749
      %3751 = vmatmul.bf16.gmra.mxu0 %v2905
      %v3752 = vpop.f32.mrf.mxu0
      %v3753 = vadd.f32 %v3664, %v3752
      %v3754 = vpop.f32.mrf.mxu0
      %v3755 = vadd.f32 %v3666, %v3754
      %3756 = vmatmul.bf16.gmra.mxu0 %v2908
      %v3757 = vpop.f32.mrf.mxu0
      %v3758 = vadd.f32 %v3669, %v3757
      %v3759 = vpop.f32.mrf.mxu0
      %v3760 = vadd.f32 %v3671, %v3759
      %3761 = vdwg.mxu0
      %3762 = vmatpush.bf16.msra.mxu0 %v3382
      %3763 = vmatpush.bf16.msra.mxu0 %v3381
      %3764 = vmatpush.bf16.msra.mxu0 %v3380
      %3765 = vmatpush.bf16.msra.mxu0 %v3379
      %3766 = vmatpush.bf16.msra.mxu0 %v3378
      %3767 = vmatpush.bf16.msra.mxu0 %v3377
      %3768 = vmatpush.bf16.msra.mxu0 %v3376
      %3769 = vmatpush.bf16.msra.mxu0 %v3375
      %3770 = vmatmul.bf16.gmra.mxu0 %v2864
      %v3771 = vpop.f32.mrf.mxu0
      %v3772 = vadd.f32 %v3683, %v3771
      %v3773 = vpop.f32.mrf.mxu0
      %v3774 = vadd.f32 %v3685, %v3773
      %3775 = vmatmul.bf16.gmra.mxu0 %v2867
      %v3776 = vpop.f32.mrf.mxu0
      %v3777 = vadd.f32 %v3688, %v3776
      %v3778 = vpop.f32.mrf.mxu0
      %v3779 = vadd.f32 %v3690, %v3778
      %3780 = vmatmul.bf16.gmra.mxu0 %v2870
      %v3781 = vpop.f32.mrf.mxu0
      %v3782 = vadd.f32 %v3693, %v3781
      %v3783 = vpop.f32.mrf.mxu0
      %v3784 = vadd.f32 %v3695, %v3783
      %3785 = vmatmul.bf16.gmra.mxu0 %v2873
      %v3786 = vpop.f32.mrf.mxu0
      %v3787 = vadd.f32 %v3698, %v3786
      %v3788 = vpop.f32.mrf.mxu0
      %v3789 = vadd.f32 %v3700, %v3788
      %3790 = vmatmul.bf16.gmra.mxu0 %v2876
      %v3791 = vpop.f32.mrf.mxu0
      %v3792 = vadd.f32 %v3703, %v3791
      %v3793 = vpop.f32.mrf.mxu0
      %v3794 = vadd.f32 %v3705, %v3793
      %3795 = vmatmul.bf16.gmra.mxu0 %v2879
      %v3796 = vpop.f32.mrf.mxu0
      %v3797 = vadd.f32 %v3708, %v3796
      %v3798 = vpop.f32.mrf.mxu0
      %v3799 = vadd.f32 %v3710, %v3798
      %3800 = vmatmul.bf16.gmra.mxu0 %v2882
      %v3801 = vpop.f32.mrf.mxu0
      %v3802 = vadd.f32 %v3713, %v3801
      %v3803 = vpop.f32.mrf.mxu0
      %v3804 = vadd.f32 %v3715, %v3803
      %3805 = vmatmul.bf16.gmra.mxu0 %v2885
      %v3806 = vpop.f32.mrf.mxu0
      %v3807 = vadd.f32 %v3718, %v3806
      %v3808 = vpop.f32.mrf.mxu0
      %v3809 = vadd.f32 %v3720, %v3808
      %3810 = vmatmul.bf16.gmra.mxu0 %v2888
      %v3811 = vpop.f32.mrf.mxu0
      %v3812 = vadd.f32 %v3723, %v3811
      %v3813 = vpop.f32.mrf.mxu0
      %v3814 = vadd.f32 %v3725, %v3813
      %3815 = vmatmul.bf16.gmra.mxu0 %v2891
      %v3816 = vpop.f32.mrf.mxu0
      %v3817 = vadd.f32 %v3728, %v3816
      %v3818 = vpop.f32.mrf.mxu0
      %v3819 = vadd.f32 %v3730, %v3818
      %3820 = vmatmul.bf16.gmra.mxu0 %v2894
      %v3821 = vpop.f32.mrf.mxu0
      %v3822 = vadd.f32 %v3733, %v3821
      %v3823 = vpop.f32.mrf.mxu0
      %v3824 = vadd.f32 %v3735, %v3823
      %3825 = vmatmul.bf16.gmra.mxu0 %v2897
      %v3826 = vpop.f32.mrf.mxu0
      %v3827 = vadd.f32 %v3738, %v3826
      %v3828 = vpop.f32.mrf.mxu0
      %v3829 = vadd.f32 %v3740, %v3828
      %3830 = vmatmul.bf16.gmra.mxu0 %v2900
      %v3831 = vpop.f32.mrf.mxu0
      %v3832 = vadd.f32 %v3743, %v3831
      %v3833 = vpop.f32.mrf.mxu0
      %v3834 = vadd.f32 %v3745, %v3833
      %3835 = vmatmul.bf16.gmra.mxu0 %v2903
      %v3836 = vpop.f32.mrf.mxu0
      %v3837 = vadd.f32 %v3748, %v3836
      %v3838 = vpop.f32.mrf.mxu0
      %v3839 = vadd.f32 %v3750, %v3838
      %3840 = vmatmul.bf16.gmra.mxu0 %v2906
      %v3841 = vpop.f32.mrf.mxu0
      %v3842 = vadd.f32 %v3753, %v3841
      %v3843 = vpop.f32.mrf.mxu0
      %v3844 = vadd.f32 %v3755, %v3843
      %3845 = vmatmul.bf16.gmra.mxu0 %v2909
      %v3846 = vpop.f32.mrf.mxu0
      %v3847 = vadd.f32 %v3758, %v3846
      %v3848 = vpop.f32.mrf.mxu0
      %v3849 = vadd.f32 %v3760, %v3848
      %3850 = vdwg.mxu0
      %3851 = vmatpush.bf16.msra.mxu0 %v3390
      %3852 = vmatpush.bf16.msra.mxu0 %v3389
      %3853 = vmatpush.bf16.msra.mxu0 %v3388
      %3854 = vmatpush.bf16.msra.mxu0 %v3387
      %3855 = vmatpush.bf16.msra.mxu0 %v3386
      %3856 = vmatpush.bf16.msra.mxu0 %v3385
      %3857 = vmatpush.bf16.msra.mxu0 %v3384
      %3858 = vmatpush.bf16.msra.mxu0 %v3383
      %3859 = vmatmul.bf16.gmra.mxu0 %v2865
      %v3860 = vpop.f32.mrf.mxu0
      %v3861 = vadd.f32 %v3772, %v3860
      %v3862 = vpop.f32.mrf.mxu0
      %v3863 = vadd.f32 %v3774, %v3862
      %3864 = vmatmul.bf16.gmra.mxu0 %v2868
      %v3865 = vpop.f32.mrf.mxu0
      %v3866 = vadd.f32 %v3777, %v3865
      %v3867 = vpop.f32.mrf.mxu0
      %v3868 = vadd.f32 %v3779, %v3867
      %3869 = vmatmul.bf16.gmra.mxu0 %v2871
      %v3870 = vpop.f32.mrf.mxu0
      %v3871 = vadd.f32 %v3782, %v3870
      %v3872 = vpop.f32.mrf.mxu0
      %v3873 = vadd.f32 %v3784, %v3872
      %3874 = vmatmul.bf16.gmra.mxu0 %v2874
      %v3875 = vpop.f32.mrf.mxu0
      %v3876 = vadd.f32 %v3787, %v3875
      %v3877 = vpop.f32.mrf.mxu0
      %v3878 = vadd.f32 %v3789, %v3877
      %3879 = vmatmul.bf16.gmra.mxu0 %v2877
      %v3880 = vpop.f32.mrf.mxu0
      %v3881 = vadd.f32 %v3792, %v3880
      %v3882 = vpop.f32.mrf.mxu0
      %v3883 = vadd.f32 %v3794, %v3882
      %3884 = vmatmul.bf16.gmra.mxu0 %v2880
      %v3885 = vpop.f32.mrf.mxu0
      %v3886 = vadd.f32 %v3797, %v3885
      %v3887 = vpop.f32.mrf.mxu0
      %v3888 = vadd.f32 %v3799, %v3887
      %3889 = vmatmul.bf16.gmra.mxu0 %v2883
      %v3890 = vpop.f32.mrf.mxu0
      %v3891 = vadd.f32 %v3802, %v3890
      %v3892 = vpop.f32.mrf.mxu0
      %v3893 = vadd.f32 %v3804, %v3892
      %3894 = vmatmul.bf16.gmra.mxu0 %v2886
      %v3895 = vpop.f32.mrf.mxu0
      %v3896 = vadd.f32 %v3807, %v3895
      %v3897 = vpop.f32.mrf.mxu0
      %v3898 = vadd.f32 %v3809, %v3897
      %3899 = vmatmul.bf16.gmra.mxu0 %v2889
      %v3900 = vpop.f32.mrf.mxu0
      %v3901 = vadd.f32 %v3812, %v3900
      %v3902 = vpop.f32.mrf.mxu0
      %v3903 = vadd.f32 %v3814, %v3902
      %3904 = vmatmul.bf16.gmra.mxu0 %v2892
      %v3905 = vpop.f32.mrf.mxu0
      %v3906 = vadd.f32 %v3817, %v3905
      %v3907 = vpop.f32.mrf.mxu0
      %v3908 = vadd.f32 %v3819, %v3907
      %3909 = vmatmul.bf16.gmra.mxu0 %v2895
      %v3910 = vpop.f32.mrf.mxu0
      %v3911 = vadd.f32 %v3822, %v3910
      %v3912 = vpop.f32.mrf.mxu0
      %v3913 = vadd.f32 %v3824, %v3912
      %3914 = vmatmul.bf16.gmra.mxu0 %v2898
      %v3915 = vpop.f32.mrf.mxu0
      %v3916 = vadd.f32 %v3827, %v3915
      %v3917 = vpop.f32.mrf.mxu0
      %v3918 = vadd.f32 %v3829, %v3917
      %3919 = vmatmul.bf16.gmra.mxu0 %v2901
      %v3920 = vpop.f32.mrf.mxu0
      %v3921 = vadd.f32 %v3832, %v3920
      %v3922 = vpop.f32.mrf.mxu0
      %v3923 = vadd.f32 %v3834, %v3922
      %3924 = vmatmul.bf16.gmra.mxu0 %v2904
      %v3925 = vpop.f32.mrf.mxu0
      %v3926 = vadd.f32 %v3837, %v3925
      %v3927 = vpop.f32.mrf.mxu0
      %v3928 = vadd.f32 %v3839, %v3927
      %3929 = vmatmul.bf16.gmra.mxu0 %v2907
      %v3930 = vpop.f32.mrf.mxu0
      %v3931 = vadd.f32 %v3842, %v3930
      %v3932 = vpop.f32.mrf.mxu0
      %v3933 = vadd.f32 %v3844, %v3932
      %3934 = vmatmul.bf16.gmra.mxu0 %v2910
      %v3935 = vpop.f32.mrf.mxu0
      %v3936 = vadd.f32 %v3847, %v3935
      %v3937 = vpop.f32.mrf.mxu0
      %v3938 = vadd.f32 %v3849, %v3937
      %3939 = vdwg.mxu0
      %3940 = vmatpush.bf16.msra.mxu0 %v3398
      %3941 = vmatpush.bf16.msra.mxu0 %v3397
      %3942 = vmatpush.bf16.msra.mxu0 %v3396
      %3943 = vmatpush.bf16.msra.mxu0 %v3395
      %3944 = vmatpush.bf16.msra.mxu0 %v3394
      %3945 = vmatpush.bf16.msra.mxu0 %v3393
      %3946 = vmatpush.bf16.msra.mxu0 %v3392
      %3947 = vmatpush.bf16.msra.mxu0 %v3391
      %3948 = vmatmul.bf16.gmra.mxu0 %v2866
      %v3949 = vpop.f32.mrf.mxu0
      %v3950 = vadd.f32 %v3861, %v3949
      %v3951 = vpop.f32.mrf.mxu0
      %v3952 = vadd.f32 %v3863, %v3951
      %3953 = vmatmul.bf16.gmra.mxu0 %v2869
      %v3954 = vpop.f32.mrf.mxu0
      %v3955 = vadd.f32 %v3866, %v3954
      %v3956 = vpop.f32.mrf.mxu0
      %v3957 = vadd.f32 %v3868, %v3956
      %3958 = vmatmul.bf16.gmra.mxu0 %v2872
      %v3959 = vpop.f32.mrf.mxu0
      %v3960 = vadd.f32 %v3871, %v3959
      %v3961 = vpop.f32.mrf.mxu0
      %v3962 = vadd.f32 %v3873, %v3961
      %3963 = vmatmul.bf16.gmra.mxu0 %v2875
      %v3964 = vpop.f32.mrf.mxu0
      %v3965 = vadd.f32 %v3876, %v3964
      %v3966 = vpop.f32.mrf.mxu0
      %v3967 = vadd.f32 %v3878, %v3966
      %3968 = vmatmul.bf16.gmra.mxu0 %v2878
      %v3969 = vpop.f32.mrf.mxu0
      %v3970 = vadd.f32 %v3881, %v3969
      %v3971 = vpop.f32.mrf.mxu0
      %v3972 = vadd.f32 %v3883, %v3971
      %3973 = vmatmul.bf16.gmra.mxu0 %v2881
      %v3974 = vpop.f32.mrf.mxu0
      %v3975 = vadd.f32 %v3886, %v3974
      %v3976 = vpop.f32.mrf.mxu0
      %v3977 = vadd.f32 %v3888, %v3976
      %3978 = vmatmul.bf16.gmra.mxu0 %v2884
      %v3979 = vpop.f32.mrf.mxu0
      %v3980 = vadd.f32 %v3891, %v3979
      %v3981 = vpop.f32.mrf.mxu0
      %v3982 = vadd.f32 %v3893, %v3981
      %3983 = vmatmul.bf16.gmra.mxu0 %v2887
      %v3984 = vpop.f32.mrf.mxu0
      %v3985 = vadd.f32 %v3896, %v3984
      %v3986 = vpop.f32.mrf.mxu0
      %v3987 = vadd.f32 %v3898, %v3986
      %3988 = vmatmul.bf16.gmra.mxu0 %v2890
      %v3989 = vpop.f32.mrf.mxu0
      %v3990 = vadd.f32 %v3901, %v3989
      %v3991 = vpop.f32.mrf.mxu0
      %v3992 = vadd.f32 %v3903, %v3991
      %3993 = vmatmul.bf16.gmra.mxu0 %v2893
      %v3994 = vpop.f32.mrf.mxu0
      %v3995 = vadd.f32 %v3906, %v3994
      %v3996 = vpop.f32.mrf.mxu0
      %v3997 = vadd.f32 %v3908, %v3996
      %3998 = vmatmul.bf16.gmra.mxu0 %v2896
      %v3999 = vpop.f32.mrf.mxu0
      %v4000 = vadd.f32 %v3911, %v3999
      %v4001 = vpop.f32.mrf.mxu0
      %v4002 = vadd.f32 %v3913, %v4001
      %4003 = vmatmul.bf16.gmra.mxu0 %v2899
      %v4004 = vpop.f32.mrf.mxu0
      %v4005 = vadd.f32 %v3916, %v4004
      %v4006 = vpop.f32.mrf.mxu0
      %v4007 = vadd.f32 %v3918, %v4006
      %4008 = vmatmul.bf16.gmra.mxu0 %v2902
      %v4009 = vpop.f32.mrf.mxu0
      %v4010 = vadd.f32 %v3921, %v4009
      %v4011 = vpop.f32.mrf.mxu0
      %v4012 = vadd.f32 %v3923, %v4011
      %4013 = vmatmul.bf16.gmra.mxu0 %v2905
      %v4014 = vpop.f32.mrf.mxu0
      %v4015 = vadd.f32 %v3926, %v4014
      %v4016 = vpop.f32.mrf.mxu0
      %v4017 = vadd.f32 %v3928, %v4016
      %4018 = vmatmul.bf16.gmra.mxu0 %v2908
      %v4019 = vpop.f32.mrf.mxu0
      %v4020 = vadd.f32 %v3931, %v4019
      %v4021 = vpop.f32.mrf.mxu0
      %v4022 = vadd.f32 %v3933, %v4021
      %4023 = vmatmul.bf16.gmra.mxu0 %v2911
      %v4024 = vpop.f32.mrf.mxu0
      %v4025 = vadd.f32 %v3936, %v4024
      %v4026 = vpop.f32.mrf.mxu0
      %v4027 = vadd.f32 %v3938, %v4026
      %4028 = vdwg.mxu0
      %4029 = vmatpush.bf16.msra.mxu0 %v3406
      %4030 = vmatpush.bf16.msra.mxu0 %v3405
      %4031 = vmatpush.bf16.msra.mxu0 %v3404
      %4032 = vmatpush.bf16.msra.mxu0 %v3403
      %4033 = vmatpush.bf16.msra.mxu0 %v3402
      %4034 = vmatpush.bf16.msra.mxu0 %v3401
      %4035 = vmatpush.bf16.msra.mxu0 %v3400
      %4036 = vmatpush.bf16.msra.mxu0 %v3399
      %4037 = vmatmul.bf16.gmra.mxu0 %v2867
      %v4038 = vpop.f32.mrf.mxu0
      %v4039 = vadd.f32 %v3950, %v4038
      %v4040 = vpop.f32.mrf.mxu0
      %v4041 = vadd.f32 %v3952, %v4040
      %4042 = vmatmul.bf16.gmra.mxu0 %v2870
      %v4043 = vpop.f32.mrf.mxu0
      %v4044 = vadd.f32 %v3955, %v4043
      %v4045 = vpop.f32.mrf.mxu0
      %v4046 = vadd.f32 %v3957, %v4045
      %4047 = vmatmul.bf16.gmra.mxu0 %v2873
      %v4048 = vpop.f32.mrf.mxu0
      %v4049 = vadd.f32 %v3960, %v4048
      %v4050 = vpop.f32.mrf.mxu0
      %v4051 = vadd.f32 %v3962, %v4050
      %4052 = vmatmul.bf16.gmra.mxu0 %v2876
      %v4053 = vpop.f32.mrf.mxu0
      %v4054 = vadd.f32 %v3965, %v4053
      %v4055 = vpop.f32.mrf.mxu0
      %v4056 = vadd.f32 %v3967, %v4055
      %4057 = vmatmul.bf16.gmra.mxu0 %v2879
      %v4058 = vpop.f32.mrf.mxu0
      %v4059 = vadd.f32 %v3970, %v4058
      %v4060 = vpop.f32.mrf.mxu0
      %v4061 = vadd.f32 %v3972, %v4060
      %4062 = vmatmul.bf16.gmra.mxu0 %v2882
      %v4063 = vpop.f32.mrf.mxu0
      %v4064 = vadd.f32 %v3975, %v4063
      %v4065 = vpop.f32.mrf.mxu0
      %v4066 = vadd.f32 %v3977, %v4065
      %4067 = vmatmul.bf16.gmra.mxu0 %v2885
      %v4068 = vpop.f32.mrf.mxu0
      %v4069 = vadd.f32 %v3980, %v4068
      %v4070 = vpop.f32.mrf.mxu0
      %v4071 = vadd.f32 %v3982, %v4070
      %4072 = vmatmul.bf16.gmra.mxu0 %v2888
      %v4073 = vpop.f32.mrf.mxu0
      %v4074 = vadd.f32 %v3985, %v4073
      %v4075 = vpop.f32.mrf.mxu0
      %v4076 = vadd.f32 %v3987, %v4075
      %4077 = vmatmul.bf16.gmra.mxu0 %v2891
      %v4078 = vpop.f32.mrf.mxu0
      %v4079 = vadd.f32 %v3990, %v4078
      %v4080 = vpop.f32.mrf.mxu0
      %v4081 = vadd.f32 %v3992, %v4080
      %4082 = vmatmul.bf16.gmra.mxu0 %v2894
      %v4083 = vpop.f32.mrf.mxu0
      %v4084 = vadd.f32 %v3995, %v4083
      %v4085 = vpop.f32.mrf.mxu0
      %v4086 = vadd.f32 %v3997, %v4085
      %4087 = vmatmul.bf16.gmra.mxu0 %v2897
      %v4088 = vpop.f32.mrf.mxu0
      %v4089 = vadd.f32 %v4000, %v4088
      %v4090 = vpop.f32.mrf.mxu0
      %v4091 = vadd.f32 %v4002, %v4090
      %4092 = vmatmul.bf16.gmra.mxu0 %v2900
      %v4093 = vpop.f32.mrf.mxu0
      %v4094 = vadd.f32 %v4005, %v4093
      %v4095 = vpop.f32.mrf.mxu0
      %v4096 = vadd.f32 %v4007, %v4095
      %4097 = vmatmul.bf16.gmra.mxu0 %v2903
      %v4098 = vpop.f32.mrf.mxu0
      %v4099 = vadd.f32 %v4010, %v4098
      %v4100 = vpop.f32.mrf.mxu0
      %v4101 = vadd.f32 %v4012, %v4100
      %4102 = vmatmul.bf16.gmra.mxu0 %v2906
      %v4103 = vpop.f32.mrf.mxu0
      %v4104 = vadd.f32 %v4015, %v4103
      %v4105 = vpop.f32.mrf.mxu0
      %v4106 = vadd.f32 %v4017, %v4105
      %4107 = vmatmul.bf16.gmra.mxu0 %v2909
      %v4108 = vpop.f32.mrf.mxu0
      %v4109 = vadd.f32 %v4020, %v4108
      %v4110 = vpop.f32.mrf.mxu0
      %v4111 = vadd.f32 %v4022, %v4110
      %4112 = vmatmul.bf16.gmra.mxu0 %v2912
      %v4113 = vpop.f32.mrf.mxu0
      %v4114 = vadd.f32 %v4025, %v4113
      %v4115 = vpop.f32.mrf.mxu0
      %v4116 = vadd.f32 %v4027, %v4115
      %4117 = vdwg.mxu0
      %4118 = vmatpush.bf16.msra.mxu0 %v3414
      %4119 = vmatpush.bf16.msra.mxu0 %v3413
      %4120 = vmatpush.bf16.msra.mxu0 %v3412
      %4121 = vmatpush.bf16.msra.mxu0 %v3411
      %4122 = vmatpush.bf16.msra.mxu0 %v3410
      %4123 = vmatpush.bf16.msra.mxu0 %v3409
      %4124 = vmatpush.bf16.msra.mxu0 %v3408
      %4125 = vmatpush.bf16.msra.mxu0 %v3407
      %4126 = vmatmul.bf16.gmra.mxu0 %v2868
      %v4127 = vpop.f32.mrf.mxu0
      %v4128 = vadd.f32 %v4039, %v4127
      %v4129 = vpop.f32.mrf.mxu0
      %v4130 = vadd.f32 %v4041, %v4129
      %4131 = vmatmul.bf16.gmra.mxu0 %v2871
      %v4132 = vpop.f32.mrf.mxu0
      %v4133 = vadd.f32 %v4044, %v4132
      %v4134 = vpop.f32.mrf.mxu0
      %v4135 = vadd.f32 %v4046, %v4134
      %4136 = vmatmul.bf16.gmra.mxu0 %v2874
      %v4137 = vpop.f32.mrf.mxu0
      %v4138 = vadd.f32 %v4049, %v4137
      %v4139 = vpop.f32.mrf.mxu0
      %v4140 = vadd.f32 %v4051, %v4139
      %4141 = vmatmul.bf16.gmra.mxu0 %v2877
      %v4142 = vpop.f32.mrf.mxu0
      %v4143 = vadd.f32 %v4054, %v4142
      %v4144 = vpop.f32.mrf.mxu0
      %v4145 = vadd.f32 %v4056, %v4144
      %4146 = vmatmul.bf16.gmra.mxu0 %v2880
      %v4147 = vpop.f32.mrf.mxu0
      %v4148 = vadd.f32 %v4059, %v4147
      %v4149 = vpop.f32.mrf.mxu0
      %v4150 = vadd.f32 %v4061, %v4149
      %4151 = vmatmul.bf16.gmra.mxu0 %v2883
      %v4152 = vpop.f32.mrf.mxu0
      %v4153 = vadd.f32 %v4064, %v4152
      %v4154 = vpop.f32.mrf.mxu0
      %v4155 = vadd.f32 %v4066, %v4154
      %4156 = vmatmul.bf16.gmra.mxu0 %v2886
      %v4157 = vpop.f32.mrf.mxu0
      %v4158 = vadd.f32 %v4069, %v4157
      %v4159 = vpop.f32.mrf.mxu0
      %v4160 = vadd.f32 %v4071, %v4159
      %4161 = vmatmul.bf16.gmra.mxu0 %v2889
      %v4162 = vpop.f32.mrf.mxu0
      %v4163 = vadd.f32 %v4074, %v4162
      %v4164 = vpop.f32.mrf.mxu0
      %v4165 = vadd.f32 %v4076, %v4164
      %4166 = vmatmul.bf16.gmra.mxu0 %v2892
      %v4167 = vpop.f32.mrf.mxu0
      %v4168 = vadd.f32 %v4079, %v4167
      %v4169 = vpop.f32.mrf.mxu0
      %v4170 = vadd.f32 %v4081, %v4169
      %4171 = vmatmul.bf16.gmra.mxu0 %v2895
      %v4172 = vpop.f32.mrf.mxu0
      %v4173 = vadd.f32 %v4084, %v4172
      %v4174 = vpop.f32.mrf.mxu0
      %v4175 = vadd.f32 %v4086, %v4174
      %4176 = vmatmul.bf16.gmra.mxu0 %v2898
      %v4177 = vpop.f32.mrf.mxu0
      %v4178 = vadd.f32 %v4089, %v4177
      %v4179 = vpop.f32.mrf.mxu0
      %v4180 = vadd.f32 %v4091, %v4179
      %4181 = vmatmul.bf16.gmra.mxu0 %v2901
      %v4182 = vpop.f32.mrf.mxu0
      %v4183 = vadd.f32 %v4094, %v4182
      %v4184 = vpop.f32.mrf.mxu0
      %v4185 = vadd.f32 %v4096, %v4184
      %4186 = vmatmul.bf16.gmra.mxu0 %v2904
      %v4187 = vpop.f32.mrf.mxu0
      %v4188 = vadd.f32 %v4099, %v4187
      %v4189 = vpop.f32.mrf.mxu0
      %v4190 = vadd.f32 %v4101, %v4189
      %4191 = vmatmul.bf16.gmra.mxu0 %v2907
      %v4192 = vpop.f32.mrf.mxu0
      %v4193 = vadd.f32 %v4104, %v4192
      %v4194 = vpop.f32.mrf.mxu0
      %v4195 = vadd.f32 %v4106, %v4194
      %4196 = vmatmul.bf16.gmra.mxu0 %v2910
      %v4197 = vpop.f32.mrf.mxu0
      %v4198 = vadd.f32 %v4109, %v4197
      %v4199 = vpop.f32.mrf.mxu0
      %v4200 = vadd.f32 %v4111, %v4199
      %4201 = vmatmul.bf16.gmra.mxu0 %v2913
      %v4202 = vpop.f32.mrf.mxu0
      %v4203 = vadd.f32 %v4114, %v4202
      %v4204 = vpop.f32.mrf.mxu0
      %v4205 = vadd.f32 %v4116, %v4204
      %4206 = vdwg.mxu0
      %4207 = vmatpush.bf16.msra.mxu0 %v3422
      %4208 = vmatpush.bf16.msra.mxu0 %v3421
      %4209 = vmatpush.bf16.msra.mxu0 %v3420
      %4210 = vmatpush.bf16.msra.mxu0 %v3419
      %4211 = vmatpush.bf16.msra.mxu0 %v3418
      %4212 = vmatpush.bf16.msra.mxu0 %v3417
      %4213 = vmatpush.bf16.msra.mxu0 %v3416
      %4214 = vmatpush.bf16.msra.mxu0 %v3415
      %4215 = vmatmul.bf16.gmra.mxu0 %v2869
      %v4216 = vpop.f32.mrf.mxu0
      %v4217 = vadd.f32 %v4128, %v4216
      %v4218 = vpop.f32.mrf.mxu0
      %v4219 = vadd.f32 %v4130, %v4218
      %4220 = vmatmul.bf16.gmra.mxu0 %v2872
      %v4221 = vpop.f32.mrf.mxu0
      %v4222 = vadd.f32 %v4133, %v4221
      %v4223 = vpop.f32.mrf.mxu0
      %v4224 = vadd.f32 %v4135, %v4223
      %4225 = vmatmul.bf16.gmra.mxu0 %v2875
      %v4226 = vpop.f32.mrf.mxu0
      %v4227 = vadd.f32 %v4138, %v4226
      %v4228 = vpop.f32.mrf.mxu0
      %v4229 = vadd.f32 %v4140, %v4228
      %4230 = vmatmul.bf16.gmra.mxu0 %v2878
      %v4231 = vpop.f32.mrf.mxu0
      %v4232 = vadd.f32 %v4143, %v4231
      %v4233 = vpop.f32.mrf.mxu0
      %v4234 = vadd.f32 %v4145, %v4233
      %4235 = vmatmul.bf16.gmra.mxu0 %v2881
      %v4236 = vpop.f32.mrf.mxu0
      %v4237 = vadd.f32 %v4148, %v4236
      %v4238 = vpop.f32.mrf.mxu0
      %v4239 = vadd.f32 %v4150, %v4238
      %4240 = vmatmul.bf16.gmra.mxu0 %v2884
      %v4241 = vpop.f32.mrf.mxu0
      %v4242 = vadd.f32 %v4153, %v4241
      %v4243 = vpop.f32.mrf.mxu0
      %v4244 = vadd.f32 %v4155, %v4243
      %4245 = vmatmul.bf16.gmra.mxu0 %v2887
      %v4246 = vpop.f32.mrf.mxu0
      %v4247 = vadd.f32 %v4158, %v4246
      %v4248 = vpop.f32.mrf.mxu0
      %v4249 = vadd.f32 %v4160, %v4248
      %4250 = vmatmul.bf16.gmra.mxu0 %v2890
      %v4251 = vpop.f32.mrf.mxu0
      %v4252 = vadd.f32 %v4163, %v4251
      %v4253 = vpop.f32.mrf.mxu0
      %v4254 = vadd.f32 %v4165, %v4253
      %4255 = vmatmul.bf16.gmra.mxu0 %v2893
      %v4256 = vpop.f32.mrf.mxu0
      %v4257 = vadd.f32 %v4168, %v4256
      %v4258 = vpop.f32.mrf.mxu0
      %v4259 = vadd.f32 %v4170, %v4258
      %4260 = vmatmul.bf16.gmra.mxu0 %v2896
      %v4261 = vpop.f32.mrf.mxu0
      %v4262 = vadd.f32 %v4173, %v4261
      %v4263 = vpop.f32.mrf.mxu0
      %v4264 = vadd.f32 %v4175, %v4263
      %4265 = vmatmul.bf16.gmra.mxu0 %v2899
      %v4266 = vpop.f32.mrf.mxu0
      %v4267 = vadd.f32 %v4178, %v4266
      %v4268 = vpop.f32.mrf.mxu0
      %v4269 = vadd.f32 %v4180, %v4268
      %4270 = vmatmul.bf16.gmra.mxu0 %v2902
      %v4271 = vpop.f32.mrf.mxu0
      %v4272 = vadd.f32 %v4183, %v4271
      %v4273 = vpop.f32.mrf.mxu0
      %v4274 = vadd.f32 %v4185, %v4273
      %4275 = vmatmul.bf16.gmra.mxu0 %v2905
      %v4276 = vpop.f32.mrf.mxu0
      %v4277 = vadd.f32 %v4188, %v4276
      %v4278 = vpop.f32.mrf.mxu0
      %v4279 = vadd.f32 %v4190, %v4278
      %4280 = vmatmul.bf16.gmra.mxu0 %v2908
      %v4281 = vpop.f32.mrf.mxu0
      %v4282 = vadd.f32 %v4193, %v4281
      %v4283 = vpop.f32.mrf.mxu0
      %v4284 = vadd.f32 %v4195, %v4283
      %4285 = vmatmul.bf16.gmra.mxu0 %v2911
      %v4286 = vpop.f32.mrf.mxu0
      %v4287 = vadd.f32 %v4198, %v4286
      %v4288 = vpop.f32.mrf.mxu0
      %v4289 = vadd.f32 %v4200, %v4288
      %4290 = vmatmul.bf16.gmra.mxu0 %v2914
      %v4291 = vpop.f32.mrf.mxu0
      %v4292 = vadd.f32 %v4203, %v4291
      %v4293 = vpop.f32.mrf.mxu0
      %v4294 = vadd.f32 %v4205, %v4293
      %4295 = vdwg.mxu0
      %v4296 = vmax.f32 %v4217, 0.0
      %v4297 = vmax.f32 %v4219, 0.0
      %v4298 = vmax.f32 %v4222, 0.0
      %v4299 = vmax.f32 %v4224, 0.0
      %v4300 = vmax.f32 %v4227, 0.0
      %v4301 = vmax.f32 %v4229, 0.0
      %v4302 = vmax.f32 %v4232, 0.0
      %v4303 = vmax.f32 %v4234, 0.0
      %v4304 = vmax.f32 %v4237, 0.0
      %v4305 = vmax.f32 %v4239, 0.0
      %v4306 = vmax.f32 %v4242, 0.0
      %v4307 = vmax.f32 %v4244, 0.0
      %v4308 = vmax.f32 %v4247, 0.0
      %v4309 = vmax.f32 %v4249, 0.0
      %v4310 = vmax.f32 %v4252, 0.0
      %v4311 = vmax.f32 %v4254, 0.0
      %v4312 = vmax.f32 %v4257, 0.0
      %v4313 = vmax.f32 %v4259, 0.0
      %v4314 = vmax.f32 %v4262, 0.0
      %v4315 = vmax.f32 %v4264, 0.0
      %v4316 = vmax.f32 %v4267, 0.0
      %v4317 = vmax.f32 %v4269, 0.0
      %v4318 = vmax.f32 %v4272, 0.0
      %v4319 = vmax.f32 %v4274, 0.0
      %v4320 = vmax.f32 %v4277, 0.0
      %v4321 = vmax.f32 %v4279, 0.0
      %v4322 = vmax.f32 %v4282, 0.0
      %v4323 = vmax.f32 %v4284, 0.0
      %v4324 = vmax.f32 %v4287, 0.0
      %v4325 = vmax.f32 %v4289, 0.0
      %v4326 = vmax.f32 %v4292, 0.0
      %v4327 = vmax.f32 %v4294, 0.0
      %4328 = vst [vmem:[%s271] sm:$0xff] %v4296
      %4329 = vst [vmem:[%s271 + $0x8] sm:$0xff] %v4297
      %4330 = vst [vmem:[%s271 + $0x10] sm:$0xff] %v4298
      %4331 = vst [vmem:[%s271 + $0x18] sm:$0xff] %v4299
      %4332 = vst [vmem:[%s271 + $0x20] sm:$0xff] %v4300
      %4333 = vst [vmem:[%s271 + $0x28] sm:$0xff] %v4301
      %4334 = vst [vmem:[%s271 + $0x30] sm:$0xff] %v4302
      %4335 = vst [vmem:[%s271 + $0x38] sm:$0xff] %v4303
      %4336 = vst [vmem:[%s271 + $0x40] sm:$0xff] %v4304
      %4337 = vst [vmem:[%s271 + $0x48] sm:$0xff] %v4305
      %4338 = vst [vmem:[%s271 + $0x50] sm:$0xff] %v4306
      %4339 = vst [vmem:[%s271 + $0x58] sm:$0xff] %v4307
      %4340 = vst [vmem:[%s271 + $0x60] sm:$0xff] %v4308
      %4341 = vst [vmem:[%s271 + $0x68] sm:$0xff] %v4309
      %4342 = vst [vmem:[%s271 + $0x70] sm:$0xff] %v4310
      %4343 = vst [vmem:[%s271 + $0x78] sm:$0xff] %v4311
      %4344 = vst [vmem:[%s271 + $0x80] sm:$0xff] %v4312
      %4345 = vst [vmem:[%s271 + $0x88] sm:$0xff] %v4313
      %4346 = vst [vmem:[%s271 + $0x90] sm:$0xff] %v4314
      %4347 = vst [vmem:[%s271 + $0x98] sm:$0xff] %v4315
      %4348 = vst [vmem:[%s271 + $0xa0] sm:$0xff] %v4316
      %4349 = vst [vmem:[%s271 + $0xa8] sm:$0xff] %v4317
      %4350 = vst [vmem:[%s271 + $0xb0] sm:$0xff] %v4318
      %4351 = vst [vmem:[%s271 + $0xb8] sm:$0xff] %v4319
      %4352 = vst [vmem:[%s271 + $0xc0] sm:$0xff] %v4320
      %4353 = vst [vmem:[%s271 + $0xc8] sm:$0xff] %v4321
      %4354 = vst [vmem:[%s271 + $0xd0] sm:$0xff] %v4322
      %4355 = vst [vmem:[%s271 + $0xd8] sm:$0xff] %v4323
      %4356 = vst [vmem:[%s271 + $0xe0] sm:$0xff] %v4324
      %4357 = vst [vmem:[%s271 + $0xe8] sm:$0xff] %v4325
      %4358 = vst [vmem:[%s271 + $0xf0] sm:$0xff] %v4326
      %4359 = vst [vmem:[%s271 + $0xf8] sm:$0xff] %v4327
      %p4360 = scmp.lt.s32.totalorder %s17, 1
      %s4361 = scalar_select %p4360, %s17, 1
      %s4362 = smul.addr %s4361, 32
      %s4363 = smul.addr %s4362, 8
      %s4364 = scalar_lea.vmem %s6, %s4363
      // Predicated region
      $region45: #{up_forward.1} parent=43 // pred_check
        %p4365 = pneg %p171
      $region46: #{up_forward.1} parent=43 // pred_check_branch
        %4367 = sbr.rel (%p4365) target = $region48
      $region47: #{up_forward.1} parent=43 // pred_region
        _
      $region48: #{up_forward.1} parent=43 // pred_fallthru
        _
    $region44: #{up_forward.1} parent=5 // pred_fallthru
      _
    %p4368 = scmp.le.s32.totalorder 2, %s12
    // Predicated region
    $region49: #{up_forward.1} parent=5 // pred_check
      %p4369 = pneg %p4368
    $region50: #{up_forward.1} parent=5 // pred_check_branch
      %4371 = sbr.rel (%p4369) target = $region52
    $region51: #{up_forward.1} parent=5 // pred_region
      %s4372 = ssub.s32 %s12, 2
      // Predicated region
      $region53: #{up_forward.1} parent=51 // pred_check
        %p4373 = pneg %p177
      $region54: #{up_forward.1} parent=51 // pred_check_branch
        %4375 = sbr.rel (%p4373) target = $region56
      $region55: #{up_forward.1} parent=51 // pred_region
        %p4376 = scmp.lt.s32.totalorder %s18, 1
        %s4377 = scalar_select %p4376, %s18, 1
        %s4378 = smul.addr %s4377, 32
        %s4379 = smul.addr %s4378, 8
        %s4380 = scalar_lea.vmem %s6, %s4379
      $region56: #{up_forward.1} parent=51 // pred_fallthru
        _
    $region52: #{up_forward.1} parent=5 // pred_fallthru
      _
  $region6: #{up_forward.1} parent=0 // loop_footer
    %s16 = sadd.s32 1, %s12
  $region7: #{up_forward.1} parent=0 // loop_footer_branch
    %11 = sbr.rel target = $region3
  $region8: #{up_forward.1} parent=0 // loop_exit
    _

</llo_original>
